<compile_context>
chip_gen: v5e
topology: v5e:2x2
jax: 0.10.0
libtpu: 0.0.40
codegen_flags: <defaults>
</compile_context>

<pallas_src>
import functools

import jax
import jax.numpy as jnp
from jax import lax
from jax.experimental import pallas as pl
from jax.experimental.pallas import tpu as pltpu


def _head_kernel(h1_ref, h2_ref, w1a_ref, w1b_ref, b1_ref, w2_ref, b2_ref,
                 w3a_ref, w3b_ref, b3_ref, out_ref, *, seq_len):
    rows, hid = h1_ref.shape          # rows == TB * S_pad
    tb = out_ref.shape[0]
    sp = rows // tb                   # padded sequence length (multiple of 8)
    hdim = w1a_ref.shape[1]           # attention hidden width (512)

    h1 = h1_ref[...]                  # (rows, HID) bf16
    h2 = h2_ref[...]

    # Attention MLP layer 1 on the MXU, f32 accumulation.  The feature concat is
    # expressed as a sum of two half-matmuls, so it is never materialized.
    pre = (jnp.dot(h1, w1a_ref[...], preferred_element_type=jnp.float32)
           + jnp.dot(h2, w1b_ref[...], preferred_element_type=jnp.float32)
           + b1_ref[...])
    act = jnp.tanh(pre).reshape(tb, sp, hdim)      # (TB, S_pad, 512) f32

    # Score projection (512 -> 1): lane reduce (VPU/XLU) instead of an N=1 matmul.
    scores = jnp.sum(act * w2_ref[...], axis=-1, keepdims=True) + b2_ref[...]

    # Softmax over the sequence dimension, per batch row.
    m = jnp.max(scores, axis=1, keepdims=True)
    e = jnp.exp(scores - m)
    if sp != seq_len:                 # static mask for sequence padding
        pos = lax.broadcasted_iota(jnp.int32, (tb, sp, 1), 1)
        e = jnp.where(pos < seq_len, e, 0.0)
    denom = jnp.sum(e, axis=1, keepdims=True)
    weights = e * pl.reciprocal(denom, approx=True)   # (TB, S_pad, 1)

    # context_vector = sum_S weights * [hs1, hs2], kept as two HID-wide halves.
    h1f = h1.astype(jnp.float32).reshape(tb, sp, hid)
    h2f = h2.astype(jnp.float32).reshape(tb, sp, hid)
    ctx1 = jnp.sum(weights * h1f, axis=1)             # (TB, HID) f32
    ctx2 = jnp.sum(weights * h2f, axis=1)

    # Classifier, lane-padded to 128 output columns (zeros beyond n_classes).
    out = (jnp.dot(ctx1, w3a_ref[...], preferred_element_type=jnp.float32)
           + jnp.dot(ctx2, w3b_ref[...], preferred_element_type=jnp.float32)
           + b3_ref[...])
    out_ref[...] = out.astype(out_ref.dtype)


def sentence_positive_head(hs1, hs2, w1, b1, w2, b2, w3, b3, *, tb=32):
    """hs1/hs2: (B, S, HID) last-two encoder hidden states. Returns (B, n_classes)."""
    B, S, HID = hs1.shape
    D = 2 * HID
    assert w1.shape[0] == D and w3.shape[0] == D
    H = w1.shape[1]                    # 512
    NC = w3.shape[1]                   # n_classes
    NCP = max(128, pl.cdiv(NC, 128) * 128)   # lane-dense classifier width

    SP = pl.cdiv(S, 8) * 8             # sequence padded to a sublane multiple
    tb = max(8, min(tb, pl.cdiv(B, 8) * 8))  # batch tile, multiple of 8
    G = pl.cdiv(B, tb)
    Bp = G * tb
    rows = tb * SP

    # bf16 hidden states halve HBM traffic and hit the fast MXU path.
    # TODO(synk): in a real pipeline the encoder should emit bf16 directly.
    def prep(h):
        h = h.astype(jnp.bfloat16)
        h = jnp.pad(h, ((0, Bp - B), (0, SP - S), (0, 0)))
        return h.reshape(Bp * SP, HID)           # free HBM reshape

    h1 = prep(hs1)
    h2 = prep(hs2)

    # Split the concatenated-feature weights so the HBM concat never exists.
    w1a = w1[:HID].astype(jnp.bfloat16)
    w1b = w1[HID:].astype(jnp.bfloat16)
    b1r = b1.reshape(1, H).astype(jnp.float32)
    w2r = w2.reshape(1, H).astype(jnp.float32)        # (512,1) -> (1,512) row
    b2r = b2.reshape(1, 1).astype(jnp.float32)
    w3a = jnp.zeros((HID, NCP), jnp.float32).at[:, :NC].set(w3[:HID].astype(jnp.float32))
    w3b = jnp.zeros((HID, NCP), jnp.float32).at[:, :NC].set(w3[HID:].astype(jnp.float32))
    b3r = jnp.zeros((1, NCP), jnp.float32).at[:, :NC].set(
        b3.reshape(1, NC).astype(jnp.float32))

    kernel = functools.partial(_head_kernel, seq_len=S)
    full = lambda shape: pl.BlockSpec(shape, lambda g: tuple(0 for _ in shape))

    out = pl.pallas_call(
        kernel,
        out_shape=jax.ShapeDtypeStruct((Bp, NCP), jnp.float32),
        grid_spec=pltpu.PrefetchScalarGridSpec(
            num_scalar_prefetch=0,
            grid=(G,),
            in_specs=[
                pl.BlockSpec((rows, HID), lambda g: (g, 0)),   # hs1 tile
                pl.BlockSpec((rows, HID), lambda g: (g, 0)),   # hs2 tile
                full((HID, H)),      # w1a (bf16)
                full((HID, H)),      # w1b (bf16)
                full((1, H)),        # b1
                full((1, H)),        # w2 row
                full((1, 1)),        # b2
                full((HID, NCP)),    # w3a (lane-padded)
                full((HID, NCP)),    # w3b (lane-padded)
                full((1, NCP)),      # b3 (lane-padded)
            ],
            out_specs=pl.BlockSpec((tb, NCP), lambda g: (g, 0)),
        ),
        compiler_params=pltpu.CompilerParams(
            dimension_semantics=("parallel",),
        ),
    )(h1, h2, w1a, w1b, b1r, w2r, b2r, w3a, w3b, b3r)
    return out[:B, :NC]


def _xavier_uniform(key, fan_in, fan_out, dtype=jnp.float32):
    limit = (6.0 / (fan_in + fan_out)) ** 0.5
    return jax.random.uniform(key, (fan_in, fan_out), dtype, -limit, limit)


def _bias_uniform(key, fan_in, fan_out, dtype=jnp.float32):
    # nn.Linear default bias init: U(-1/sqrt(fan_in), 1/sqrt(fan_in))
    bound = 1.0 / (fan_in ** 0.5)
    return jax.random.uniform(key, (1, fan_out), dtype, -bound, bound)


if __name__ == "__main__":
    # Small but module-consistent shapes: roberta-base hidden = 768, dim = 2*768.
    B, S, HID = 2, 8, 768
    D = 2 * HID          # 1536
    ATT_H = 512
    N_CLASSES = 3

    key = jax.random.PRNGKey(0)
    k_h1, k_h2, k_w1, k_b1, k_w2, k_b2, k_w3, k_b3 = jax.random.split(key, 8)

    # Stand-ins for bert_output.hidden_states[-1] and [-2] (MaxPool1d(1) is identity).
    hs1 = jax.random.normal(k_h1, (B, S, HID), jnp.float32)
    hs2 = jax.random.normal(k_h2, (B, S, HID), jnp.float32)

    # Deterministic parameter init (xavier_uniform for weights, as in init_params).
    w1 = _xavier_uniform(k_w1, D, ATT_H)
    b1 = _bias_uniform(k_b1, D, ATT_H)
    w2 = _xavier_uniform(k_w2, ATT_H, 1)
    b2 = _bias_uniform(k_b2, ATT_H, 1)
    w3 = _xavier_uniform(k_w3, D, N_CLASSES)
    b3 = _bias_uniform(k_b3, D, N_CLASSES)

    out = sentence_positive_head(hs1, hs2, w1, b1, w2, b2, w3, b3)
    out = jax.block_until_ready(out)

    # Pure-JAX reference (same bf16-rounded hidden states / w1 as the kernel).
    h1r = hs1.astype(jnp.bfloat16).astype(jnp.float32)
    h2r = hs2.astype(jnp.bfloat16).astype(jnp.float32)
    h_cat = jnp.concatenate([h1r, h2r], axis=-1)
    w1r = w1.astype(jnp.bfloat16).astype(jnp.float32)
    a_ref = jnp.tanh(h_cat @ w1r + b1)
    s_ref = a_ref @ w2 + b2
    wt_ref = jax.nn.softmax(s_ref, axis=1)
    ctx_ref = jnp.sum(wt_ref * h_cat, axis=1)
    ref = ctx_ref @ w3 + b3

    assert out.shape == (B, N_CLASSES)
    assert jnp.allclose(out, ref, atol=1e-2, rtol=1e-2)
    print("KERNEL_OK")
</pallas_src>

<mosaic_0001>
module attributes {stable_mosaic.version = 11 : i64} {
  func.func @_head_kernel(%arg0: i32, %arg1: memref<64x768xbf16, #tpu.memory_space<vmem>>, %arg2: memref<64x768xbf16, #tpu.memory_space<vmem>>, %arg3: memref<768x512xbf16, #tpu.memory_space<vmem>>, %arg4: memref<768x512xbf16, #tpu.memory_space<vmem>>, %arg5: memref<1x512xf32, #tpu.memory_space<vmem>>, %arg6: memref<1x512xf32, #tpu.memory_space<vmem>>, %arg7: memref<1x1xf32, #tpu.memory_space<vmem>>, %arg8: memref<768x128xf32, #tpu.memory_space<vmem>>, %arg9: memref<768x128xf32, #tpu.memory_space<vmem>>, %arg10: memref<1x128xf32, #tpu.memory_space<vmem>>, %arg11: memref<8x128xf32, #tpu.memory_space<vmem>>) attributes {dimension_semantics = [#tpu.dimension_semantics<parallel>], iteration_bounds = array<i64: 1>, scalar_prefetch = 0 : i64, scratch_operands = 0 : i64, tpu.core_type = #tpu.core_type<tc>, window_params = [{transform_indices = @transform_0, window_bounds = array<i64: 64, 768>}, {transform_indices = @transform_1, window_bounds = array<i64: 64, 768>}, {pipeline_mode = #tpu.pipeline_mode<synchronous>, transform_indices = @transform_2, window_bounds = array<i64: 768, 512>}, {pipeline_mode = #tpu.pipeline_mode<synchronous>, transform_indices = @transform_3, window_bounds = array<i64: 768, 512>}, {pipeline_mode = #tpu.pipeline_mode<synchronous>, transform_indices = @transform_4, window_bounds = array<i64: 1, 512>}, {pipeline_mode = #tpu.pipeline_mode<synchronous>, transform_indices = @transform_5, window_bounds = array<i64: 1, 512>}, {pipeline_mode = #tpu.pipeline_mode<synchronous>, transform_indices = @transform_6, window_bounds = array<i64: 1, 1>}, {pipeline_mode = #tpu.pipeline_mode<synchronous>, transform_indices = @transform_7, window_bounds = array<i64: 768, 128>}, {pipeline_mode = #tpu.pipeline_mode<synchronous>, transform_indices = @transform_8, window_bounds = array<i64: 768, 128>}, {pipeline_mode = #tpu.pipeline_mode<synchronous>, transform_indices = @transform_9, window_bounds = array<i64: 1, 128>}, {transform_indices = @transform_10, window_bounds = array<i64: 8, 128>}]} {
    %c0 = arith.constant 0 : index
    %c0_0 = arith.constant 0 : index
    %0 = vector.load %arg1[%c0, %c0_0] : memref<64x768xbf16, #tpu.memory_space<vmem>>, vector<64x768xbf16>
    %c0_1 = arith.constant 0 : index
    %c0_2 = arith.constant 0 : index
    %1 = vector.load %arg2[%c0_1, %c0_2] : memref<64x768xbf16, #tpu.memory_space<vmem>>, vector<64x768xbf16>
    %c0_3 = arith.constant 0 : index
    %c0_4 = arith.constant 0 : index
    %2 = vector.load %arg3[%c0_3, %c0_4] : memref<768x512xbf16, #tpu.memory_space<vmem>>, vector<768x512xbf16>
    %cst = arith.constant dense<0.000000e+00> : vector<64x512xf32>
    %3 = tpu.matmul %0, %2, %cst {dimension_numbers = #tpu.dot_dimension_numbers<[1], [0], [0], [1], [0, 0, 1, 1], [], []>} : vector<64x768xbf16>, vector<768x512xbf16>, vector<64x512xf32> -> vector<64x512xf32>
    %c0_5 = arith.constant 0 : index
    %c0_6 = arith.constant 0 : index
    %4 = vector.load %arg4[%c0_5, %c0_6] : memref<768x512xbf16, #tpu.memory_space<vmem>>, vector<768x512xbf16>
    %cst_7 = arith.constant dense<0.000000e+00> : vector<64x512xf32>
    %5 = tpu.matmul %1, %4, %cst_7 {dimension_numbers = #tpu.dot_dimension_numbers<[1], [0], [0], [1], [0, 0, 1, 1], [], []>} : vector<64x768xbf16>, vector<768x512xbf16>, vector<64x512xf32> -> vector<64x512xf32>
    %6 = arith.addf %3, %5 : vector<64x512xf32>
    %c0_8 = arith.constant 0 : index
    %c0_9 = arith.constant 0 : index
    %7 = vector.load %arg5[%c0_8, %c0_9] : memref<1x512xf32, #tpu.memory_space<vmem>>, vector<1x512xf32>
    %8 = vector.broadcast %7 : vector<1x512xf32> to vector<64x512xf32>
    %9 = arith.addf %6, %8 : vector<64x512xf32>
    %10 = math.tanh %9 : vector<64x512xf32>
    %11 = vector.shape_cast %10 : vector<64x512xf32> to vector<8x8x512xf32>
    %c0_10 = arith.constant 0 : index
    %c0_11 = arith.constant 0 : index
    %12 = vector.load %arg6[%c0_10, %c0_11] : memref<1x512xf32, #tpu.memory_space<vmem>>, vector<1x512xf32>
    %13 = vector.shape_cast %12 : vector<1x512xf32> to vector<1x1x512xf32>
    %14 = vector.broadcast %13 : vector<1x1x512xf32> to vector<8x8x512xf32>
    %15 = arith.mulf %11, %14 : vector<8x8x512xf32>
    %cst_12 = arith.constant dense<0.000000e+00> : vector<8x8xf32>
    %16 = vector.multi_reduction <add>, %15, %cst_12 [2] : vector<8x8x512xf32> to vector<8x8xf32>
    %17 = vector.shape_cast %16 : vector<8x8xf32> to vector<8x8x1xf32>
    %c0_13 = arith.constant 0 : index
    %c0_14 = arith.constant 0 : index
    %18 = vector.load %arg7[%c0_13, %c0_14] : memref<1x1xf32, #tpu.memory_space<vmem>>, vector<1x1xf32>
    %19 = vector.shape_cast %18 : vector<1x1xf32> to vector<1x1x1xf32>
    %20 = vector.broadcast %19 : vector<1x1x1xf32> to vector<8x8x1xf32>
    %21 = arith.addf %17, %20 : vector<8x8x1xf32>
    %cst_15 = arith.constant dense<0xFF800000> : vector<8x1xf32>
    %22 = vector.multi_reduction <maximumf>, %21, %cst_15 [1] : vector<8x8x1xf32> to vector<8x1xf32>
    %23 = vector.shape_cast %22 : vector<8x1xf32> to vector<8x1x1xf32>
    %24 = vector.broadcast %23 : vector<8x1x1xf32> to vector<8x8x1xf32>
    %25 = arith.subf %21, %24 : vector<8x8x1xf32>
    %26 = math.exp %25 : vector<8x8x1xf32>
    %cst_16 = arith.constant dense<0.000000e+00> : vector<8x1xf32>
    %27 = vector.multi_reduction <add>, %26, %cst_16 [1] : vector<8x8x1xf32> to vector<8x1xf32>
    %28 = vector.shape_cast %27 : vector<8x1xf32> to vector<8x1x1xf32>
    %29 = tpu.reciprocal %28 {approx = true} : vector<8x1x1xf32> -> vector<8x1x1xf32>
    %30 = vector.broadcast %29 : vector<8x1x1xf32> to vector<8x8x1xf32>
    %31 = arith.mulf %26, %30 : vector<8x8x1xf32>
    %32 = arith.extf %0 : vector<64x768xbf16> to vector<64x768xf32>
    %33 = vector.shape_cast %32 : vector<64x768xf32> to vector<8x8x768xf32>
    %34 = arith.extf %1 : vector<64x768xbf16> to vector<64x768xf32>
    %35 = vector.shape_cast %34 : vector<64x768xf32> to vector<8x8x768xf32>
    %36 = vector.broadcast %31 : vector<8x8x1xf32> to vector<8x8x768xf32>
    %37 = arith.mulf %36, %33 : vector<8x8x768xf32>
    %cst_17 = arith.constant dense<0.000000e+00> : vector<8x768xf32>
    %38 = vector.multi_reduction <add>, %37, %cst_17 [1] : vector<8x8x768xf32> to vector<8x768xf32>
    %39 = vector.broadcast %31 : vector<8x8x1xf32> to vector<8x8x768xf32>
    %40 = arith.mulf %39, %35 : vector<8x8x768xf32>
    %cst_18 = arith.constant dense<0.000000e+00> : vector<8x768xf32>
    %41 = vector.multi_reduction <add>, %40, %cst_18 [1] : vector<8x8x768xf32> to vector<8x768xf32>
    %c0_19 = arith.constant 0 : index
    %c0_20 = arith.constant 0 : index
    %42 = vector.load %arg8[%c0_19, %c0_20] : memref<768x128xf32, #tpu.memory_space<vmem>>, vector<768x128xf32>
    %cst_21 = arith.constant dense<0.000000e+00> : vector<8x128xf32>
    %43 = tpu.matmul %38, %42, %cst_21 {dimension_numbers = #tpu.dot_dimension_numbers<[1], [0], [0], [1], [0, 0, 1, 1], [], []>} : vector<8x768xf32>, vector<768x128xf32>, vector<8x128xf32> -> vector<8x128xf32>
    %c0_22 = arith.constant 0 : index
    %c0_23 = arith.constant 0 : index
    %44 = vector.load %arg9[%c0_22, %c0_23] : memref<768x128xf32, #tpu.memory_space<vmem>>, vector<768x128xf32>
    %cst_24 = arith.constant dense<0.000000e+00> : vector<8x128xf32>
    %45 = tpu.matmul %41, %44, %cst_24 {dimension_numbers = #tpu.dot_dimension_numbers<[1], [0], [0], [1], [0, 0, 1, 1], [], []>} : vector<8x768xf32>, vector<768x128xf32>, vector<8x128xf32> -> vector<8x128xf32>
    %46 = arith.addf %43, %45 : vector<8x128xf32>
    %c0_25 = arith.constant 0 : index
    %c0_26 = arith.constant 0 : index
    %47 = vector.load %arg10[%c0_25, %c0_26] : memref<1x128xf32, #tpu.memory_space<vmem>>, vector<1x128xf32>
    %48 = vector.broadcast %47 : vector<1x128xf32> to vector<8x128xf32>
    %49 = arith.addf %46, %48 : vector<8x128xf32>
    %c0_27 = arith.constant 0 : index
    %c0_28 = arith.constant 0 : index
    %50 = vector.load %arg11[%c0_27, %c0_28] : memref<8x128xf32, #tpu.memory_space<vmem>>, vector<8x128xf32>
    tpu.vector_store %arg11[%c0_27, %c0_28], %49 {strides = array<i32>} : memref<8x128xf32, #tpu.memory_space<vmem>>, vector<8x128xf32>,
    return
  }
  func.func @transform_0(%arg0: i32) -> (i32, i32) {
    %c0_i32 = arith.constant 0 : i32
    %c0_i32_0 = arith.constant 0 : i32
    return %arg0, %c0_i32 : i32, i32
  }
  func.func @transform_1(%arg0: i32) -> (i32, i32) {
    %c0_i32 = arith.constant 0 : i32
    %c0_i32_0 = arith.constant 0 : i32
    return %arg0, %c0_i32 : i32, i32
  }
  func.func @transform_2(%arg0: i32) -> (i32, i32) {
    %c0_i32 = arith.constant 0 : i32
    %c0_i32_0 = arith.constant 0 : i32
    %c0_i32_1 = arith.constant 0 : i32
    return %c0_i32, %c0_i32_0 : i32, i32
  }
  func.func @transform_3(%arg0: i32) -> (i32, i32) {
    %c0_i32 = arith.constant 0 : i32
    %c0_i32_0 = arith.constant 0 : i32
    %c0_i32_1 = arith.constant 0 : i32
    return %c0_i32, %c0_i32_0 : i32, i32
  }
  func.func @transform_4(%arg0: i32) -> (i32, i32) {
    %c0_i32 = arith.constant 0 : i32
    %c0_i32_0 = arith.constant 0 : i32
    %c0_i32_1 = arith.constant 0 : i32
    return %c0_i32, %c0_i32_0 : i32, i32
  }
  func.func @transform_5(%arg0: i32) -> (i32, i32) {
    %c0_i32 = arith.constant 0 : i32
    %c0_i32_0 = arith.constant 0 : i32
    %c0_i32_1 = arith.constant 0 : i32
    return %c0_i32, %c0_i32_0 : i32, i32
  }
  func.func @transform_6(%arg0: i32) -> (i32, i32) {
    %c0_i32 = arith.constant 0 : i32
    %c0_i32_0 = arith.constant 0 : i32
    %c0_i32_1 = arith.constant 0 : i32
    return %c0_i32, %c0_i32_0 : i32, i32
  }
  func.func @transform_7(%arg0: i32) -> (i32, i32) {
    %c0_i32 = arith.constant 0 : i32
    %c0_i32_0 = arith.constant 0 : i32
    %c0_i32_1 = arith.constant 0 : i32
    return %c0_i32, %c0_i32_0 : i32, i32
  }
  func.func @transform_8(%arg0: i32) -> (i32, i32) {
    %c0_i32 = arith.constant 0 : i32
    %c0_i32_0 = arith.constant 0 : i32
    %c0_i32_1 = arith.constant 0 : i32
    return %c0_i32, %c0_i32_0 : i32, i32
  }
  func.func @transform_9(%arg0: i32) -> (i32, i32) {
    %c0_i32 = arith.constant 0 : i32
    %c0_i32_0 = arith.constant 0 : i32
    %c0_i32_1 = arith.constant 0 : i32
    return %c0_i32, %c0_i32_0 : i32, i32
  }
  func.func @transform_10(%arg0: i32) -> (i32, i32) {
    %c0_i32 = arith.constant 0 : i32
    %c0_i32_0 = arith.constant 0 : i32
    return %arg0, %c0_i32 : i32, i32
  }
}

</mosaic_0001>

<llo_original>
// kernel: tpu_custom_call.1
$region0: #{tpu_custom_call.1}
  #allocation0 [shape = 'u32[]', space=smem, size = 0x4, offset = 0x4, fixed_abs, tag = 'smem constant byte address 0x4 - core index']
  #allocation1 [shape = 'u32[72,128]{1,0:T(1,128)}', space=vmem, size = 0x9000, scoped, tag = 'internal scratch']
  #allocation2 [shape = 'f32[1,1]{1,0:T(1,128)S(1)}', space=vmem, size = 0x200, scoped, tag = 'scoped memory for tpu_custom_call.1']
  %s0 = inlined_call_operand.hbm [shape: bf16[64,768], index: 0, kind: input, shape index: {}]
  %s1 = inlined_call_operand.hbm [shape: bf16[64,768], index: 1, kind: input, shape index: {}]
  %s2 = inlined_call_operand.hbm [shape: bf16[768,512], index: 2, kind: input, shape index: {}]
  %s3 = inlined_call_operand.hbm [shape: bf16[768,512], index: 3, kind: input, shape index: {}]
  %s4 = inlined_call_operand.vmem [shape: f32[1,512], index: 4, kind: input, shape index: {}]
  %s5 = inlined_call_operand.hbm [shape: f32[1,512], index: 5, kind: input, shape index: {}]
  %s6 = inlined_call_operand.<no memory space> [shape: f32[1,1], index: 6, kind: input, shape index: {}]
  %s7 = inlined_call_operand.hbm [shape: f32[768,128], index: 7, kind: input, shape index: {}]
  %s8 = inlined_call_operand.hbm [shape: f32[768,128], index: 8, kind: input, shape index: {}]
  %s9 = inlined_call_operand.vmem [shape: f32[1,128], index: 9, kind: input, shape index: {}]
  %s10 = inlined_call_operand.hbm [shape: f32[8,128], index: 10, kind: output, shape index: {}]
  %s11 = sld [smem:[#allocation0]]
  $region78: #{tpu_custom_call.1} parent=0
    _
  %s13 = ssub.s32 1, %s11
  %s14 = scalar_select 0, %s13, %s11
  %v15 = vstv %s6
  %16 = vst [vmem:[#allocation2] sm:$0x1] %v15
  $region1: #{tpu_custom_call.1} parent=0
    #allocation3 [shape = 'u8[98304]{0}', space=vmem, size = 0x18000, scoped, tag = 'input window, operand 0, single buffered']
    #allocation4 [shape = 's32[1]{0}', space=sflag, size = 0x4, scoped, tag = 'scoped memory for tpu_custom_call.1']
    #allocation5 [shape = 's32[1]{0}', space=sflag, size = 0x4, scoped, tag = 'scoped memory for tpu_custom_call.1']
    #allocation6 [shape = 'u8[98304]{0}', space=vmem, size = 0x18000, scoped, tag = 'input window, operand 1, single buffered']
    #allocation7 [shape = 's32[1]{0}', space=sflag, size = 0x4, scoped, tag = 'scoped memory for tpu_custom_call.1']
    #allocation8 [shape = 'u8[786432]{0}', space=vmem, size = 0xc0000, scoped, tag = 'input window, operand 2, single buffered']
    #allocation9 [shape = 'u8[786432]{0}', space=vmem, size = 0xc0000, scoped, tag = 'input window, operand 3, single buffered']
    #allocation10 [shape = 's32[1]{0}', space=sflag, size = 0x4, scoped, tag = 'scoped memory for tpu_custom_call.1']
    #allocation11 [shape = 'u8[2048]{0}', space=vmem, size = 0x800, scoped, tag = 'input window, operand 5, single buffered']
    #allocation12 [shape = 'u8[393216]{0}', space=vmem, size = 0x60000, scoped, tag = 'input window, operand 7, single buffered']
    #allocation13 [shape = 's32[1]{0}', space=sflag, size = 0x4, scoped, tag = 'scoped memory for tpu_custom_call.1']
    #allocation14 [shape = 'u8[393216]{0}', space=vmem, size = 0x60000, scoped, tag = 'input window, operand 8, single buffered']
    #allocation15 [shape = 'u8[4096]{0}', space=vmem, size = 0x1000, scoped, tag = 'output window, operand 0, single buffered']
    %17 = vsyncpa [#allocation4], 0
    %18 = vsyncpa [#allocation7], 0
    %19 = vsyncpa [#allocation10], 0
    %20 = vsyncpa [#allocation13], 0
    %21 = vsyncpa [#allocation5], 0
    // Predicated region
    $region2: #{tpu_custom_call.1} parent=1 // pred_check
      _
    $region3: #{tpu_custom_call.1} parent=1 // pred_check_branch
      %23 = sbr.rel (0) target = $region5
    $region4: #{tpu_custom_call.1} parent=1 // pred_region
      %25 = vsyncadd [#allocation4], 0
      %s26 = sshll.u32 %s0, 4
      %s27 = int_to_ptr.hbm [resolvable:$true] %s26
      %s28 = sshll.u32 [#allocation3], 4
      %s29 = int_to_ptr.vmem [resolvable:$true] %s28
      %34 = dma.hbm_to_vmem [thread:$0]  %s27, 3072, %s29, [#allocation4], 384, 384, 24
    $region5: #{tpu_custom_call.1} parent=1 // pred_fallthru
      _
    // Predicated region
    $region6: #{tpu_custom_call.1} parent=1 // pred_check
      _
    $region7: #{tpu_custom_call.1} parent=1 // pred_check_branch
      %36 = sbr.rel (0) target = $region9
    $region8: #{tpu_custom_call.1} parent=1 // pred_region
      %38 = vsyncadd [#allocation7], 0
      %s39 = sshll.u32 %s1, 4
      %s40 = int_to_ptr.hbm [resolvable:$true] %s39
      %s41 = sshll.u32 [#allocation6], 4
      %s42 = int_to_ptr.vmem [resolvable:$true] %s41
      %47 = dma.hbm_to_vmem [thread:$0]  %s40, 3072, %s42, [#allocation7], 384, 384, 24
    $region9: #{tpu_custom_call.1} parent=1 // pred_fallthru
      _
    // Predicated region
    $region10: #{tpu_custom_call.1} parent=1 // pred_check
      _
    $region11: #{tpu_custom_call.1} parent=1 // pred_check_branch
      %49 = sbr.rel (0) target = $region13
    $region12: #{tpu_custom_call.1} parent=1 // pred_region
      %51 = vsyncadd [#allocation7], 0
      %s52 = sshll.u32 %s2, 4
      %s53 = int_to_ptr.hbm [resolvable:$true] %s52
      %s54 = sshll.u32 [#allocation8], 4
      %s55 = int_to_ptr.vmem [resolvable:$true] %s54
      %60 = dma.hbm_to_vmem [thread:$0]  %s53, 24576, %s55, [#allocation7], 256, 256, 16
    $region13: #{tpu_custom_call.1} parent=1 // pred_fallthru
      _
    // Predicated region
    $region14: #{tpu_custom_call.1} parent=1 // pred_check
      _
    $region15: #{tpu_custom_call.1} parent=1 // pred_check_branch
      %62 = sbr.rel (0) target = $region17
    $region16: #{tpu_custom_call.1} parent=1 // pred_region
      %64 = vsyncadd [#allocation10], 0
      %s65 = sshll.u32 %s3, 4
      %s66 = int_to_ptr.hbm [resolvable:$true] %s65
      %s67 = sshll.u32 [#allocation9], 4
      %s68 = int_to_ptr.vmem [resolvable:$true] %s67
      %73 = dma.hbm_to_vmem [thread:$0]  %s66, 24576, %s68, [#allocation10], 256, 256, 16
    $region17: #{tpu_custom_call.1} parent=1 // pred_fallthru
      _
    // Predicated region
    $region18: #{tpu_custom_call.1} parent=1 // pred_check
      _
    $region19: #{tpu_custom_call.1} parent=1 // pred_check_branch
      %75 = sbr.rel (0) target = $region21
    $region20: #{tpu_custom_call.1} parent=1 // pred_region
      _
    $region21: #{tpu_custom_call.1} parent=1 // pred_fallthru
      _
    // Predicated region
    $region22: #{tpu_custom_call.1} parent=1 // pred_check
      _
    $region23: #{tpu_custom_call.1} parent=1 // pred_check_branch
      %77 = sbr.rel (0) target = $region25
    $region24: #{tpu_custom_call.1} parent=1 // pred_region
      %79 = vsyncadd [#allocation10], 0
      %s81 = sshll.u32 %s5, 4
      %s82 = int_to_ptr.hbm [resolvable:$true] %s81
      %s83 = sshll.u32 [#allocation11], 4
      %s84 = int_to_ptr.vmem [resolvable:$true] %s83
      %86 = dma.hbm_to_vmem [thread:$0]  %s82, 64, %s84, [#allocation10]
    $region25: #{tpu_custom_call.1} parent=1 // pred_fallthru
      _
    // Predicated region
    $region26: #{tpu_custom_call.1} parent=1 // pred_check
      _
    $region27: #{tpu_custom_call.1} parent=1 // pred_check_branch
      %88 = sbr.rel (0) target = $region29
    $region28: #{tpu_custom_call.1} parent=1 // pred_region
      _
    $region29: #{tpu_custom_call.1} parent=1 // pred_fallthru
      _
    // Predicated region
    $region30: #{tpu_custom_call.1} parent=1 // pred_check
      _
    $region31: #{tpu_custom_call.1} parent=1 // pred_check_branch
      %90 = sbr.rel (0) target = $region33
    $region32: #{tpu_custom_call.1} parent=1 // pred_region
      %92 = vsyncadd [#allocation13], 0
      %s93 = sshll.u32 %s7, 4
      %s94 = int_to_ptr.hbm [resolvable:$true] %s93
      %s95 = sshll.u32 [#allocation12], 4
      %s96 = int_to_ptr.vmem [resolvable:$true] %s95
      %101 = dma.hbm_to_vmem [thread:$0]  %s94, 12288, %s96, [#allocation13], 128, 128, 8
    $region33: #{tpu_custom_call.1} parent=1 // pred_fallthru
      _
    // Predicated region
    $region34: #{tpu_custom_call.1} parent=1 // pred_check
      _
    $region35: #{tpu_custom_call.1} parent=1 // pred_check_branch
      %103 = sbr.rel (0) target = $region37
    $region36: #{tpu_custom_call.1} parent=1 // pred_region
      %105 = vsyncadd [#allocation13], 0
      %s106 = sshll.u32 %s8, 4
      %s107 = int_to_ptr.hbm [resolvable:$true] %s106
      %s108 = sshll.u32 [#allocation14], 4
      %s109 = int_to_ptr.vmem [resolvable:$true] %s108
      %114 = dma.hbm_to_vmem [thread:$0]  %s107, 12288, %s109, [#allocation13], 128, 128, 8
    $region37: #{tpu_custom_call.1} parent=1 // pred_fallthru
      _
    // Predicated region
    $region38: #{tpu_custom_call.1} parent=1 // pred_check
      _
    $region39: #{tpu_custom_call.1} parent=1 // pred_check_branch
      %116 = sbr.rel (0) target = $region41
    $region40: #{tpu_custom_call.1} parent=1 // pred_region
      _
    $region41: #{tpu_custom_call.1} parent=1 // pred_fallthru
      _
    // Predicated region
    $region42: #{tpu_custom_call.1} parent=1 // pred_check
      _
    $region43: #{tpu_custom_call.1} parent=1 // pred_check_branch
      %118 = sbr.rel (0) target = $region45
    $region44: #{tpu_custom_call.1} parent=1 // pred_region
      %120 = dma.done [#allocation4], 3072
    $region45: #{tpu_custom_call.1} parent=1 // pred_fallthru
      _
    // Predicated region
    $region46: #{tpu_custom_call.1} parent=1 // pred_check
      _
    $region47: #{tpu_custom_call.1} parent=1 // pred_check_branch
      %122 = sbr.rel (0) target = $region49
    $region48: #{tpu_custom_call.1} parent=1 // pred_region
      %124 = dma.done [#allocation7], 3072
    $region49: #{tpu_custom_call.1} parent=1 // pred_fallthru
      _
    // Predicated region
    $region50: #{tpu_custom_call.1} parent=1 // pred_check
      _
    $region51: #{tpu_custom_call.1} parent=1 // pred_check_branch
      %126 = sbr.rel (0) target = $region53
    $region52: #{tpu_custom_call.1} parent=1 // pred_region
      %128 = dma.done [#allocation7], 24576
    $region53: #{tpu_custom_call.1} parent=1 // pred_fallthru
      _
    // Predicated region
    $region54: #{tpu_custom_call.1} parent=1 // pred_check
      _
    $region55: #{tpu_custom_call.1} parent=1 // pred_check_branch
      %130 = sbr.rel (0) target = $region57
    $region56: #{tpu_custom_call.1} parent=1 // pred_region
      %132 = dma.done [#allocation10], 24576
    $region57: #{tpu_custom_call.1} parent=1 // pred_fallthru
      _
    // Predicated region
    $region58: #{tpu_custom_call.1} parent=1 // pred_check
      _
    $region59: #{tpu_custom_call.1} parent=1 // pred_check_branch
      %134 = sbr.rel (0) target = $region61
    $region60: #{tpu_custom_call.1} parent=1 // pred_region
      %136 = dma.done [#allocation10], 64
    $region61: #{tpu_custom_call.1} parent=1 // pred_fallthru
      _
    // Predicated region
    $region62: #{tpu_custom_call.1} parent=1 // pred_check
      _
    $region63: #{tpu_custom_call.1} parent=1 // pred_check_branch
      %138 = sbr.rel (0) target = $region65
    $region64: #{tpu_custom_call.1} parent=1 // pred_region
      %140 = dma.done [#allocation13], 12288
    $region65: #{tpu_custom_call.1} parent=1 // pred_fallthru
      _
    // Predicated region
    $region66: #{tpu_custom_call.1} parent=1 // pred_check
      _
    $region67: #{tpu_custom_call.1} parent=1 // pred_check_branch
      %142 = sbr.rel (0) target = $region69
    $region68: #{tpu_custom_call.1} parent=1 // pred_region
      %144 = dma.done [#allocation13], 12288
    $region69: #{tpu_custom_call.1} parent=1 // pred_fallthru
      _
    %v145 = vld [vmem:[#allocation3] sm:$0xff]
    %v146 = vld [vmem:[#allocation3 + $0x8] sm:$0xff]
    %v147 = vld [vmem:[#allocation3 + $0x10] sm:$0xff]
    %v148 = vld [vmem:[#allocation3 + $0x18] sm:$0xff]
    %v149 = vld [vmem:[#allocation3 + $0x20] sm:$0xff]
    %v150 = vld [vmem:[#allocation3 + $0x28] sm:$0xff]
    %v151 = vld [vmem:[#allocation3 + $0x30] sm:$0xff]
    %v152 = vld [vmem:[#allocation3 + $0x38] sm:$0xff]
    %v153 = vld [vmem:[#allocation3 + $0x40] sm:$0xff]
    %v154 = vld [vmem:[#allocation3 + $0x48] sm:$0xff]
    %v155 = vld [vmem:[#allocation3 + $0x50] sm:$0xff]
    %v156 = vld [vmem:[#allocation3 + $0x58] sm:$0xff]
    %v157 = vld [vmem:[#allocation3 + $0x60] sm:$0xff]
    %v158 = vld [vmem:[#allocation3 + $0x68] sm:$0xff]
    %v159 = vld [vmem:[#allocation3 + $0x70] sm:$0xff]
    %v160 = vld [vmem:[#allocation3 + $0x78] sm:$0xff]
    %v161 = vld [vmem:[#allocation3 + $0x80] sm:$0xff]
    %v162 = vld [vmem:[#allocation3 + $0x88] sm:$0xff]
    %v163 = vld [vmem:[#allocation3 + $0x90] sm:$0xff]
    %v164 = vld [vmem:[#allocation3 + $0x98] sm:$0xff]
    %v165 = vld [vmem:[#allocation3 + $0xa0] sm:$0xff]
    %v166 = vld [vmem:[#allocation3 + $0xa8] sm:$0xff]
    %v167 = vld [vmem:[#allocation3 + $0xb0] sm:$0xff]
    %v168 = vld [vmem:[#allocation3 + $0xb8] sm:$0xff]
    %v169 = vld [vmem:[#allocation6] sm:$0xff]
    %v170 = vld [vmem:[#allocation6 + $0x8] sm:$0xff]
    %v171 = vld [vmem:[#allocation6 + $0x10] sm:$0xff]
    %v172 = vld [vmem:[#allocation6 + $0x18] sm:$0xff]
    %v173 = vld [vmem:[#allocation6 + $0x20] sm:$0xff]
    %v174 = vld [vmem:[#allocation6 + $0x28] sm:$0xff]
    %v175 = vld [vmem:[#allocation6 + $0x30] sm:$0xff]
    %v176 = vld [vmem:[#allocation6 + $0x38] sm:$0xff]
    %v177 = vld [vmem:[#allocation6 + $0x40] sm:$0xff]
    %v178 = vld [vmem:[#allocation6 + $0x48] sm:$0xff]
    %v179 = vld [vmem:[#allocation6 + $0x50] sm:$0xff]
    %v180 = vld [vmem:[#allocation6 + $0x58] sm:$0xff]
    %v181 = vld [vmem:[#allocation6 + $0x60] sm:$0xff]
    %v182 = vld [vmem:[#allocation6 + $0x68] sm:$0xff]
    %v183 = vld [vmem:[#allocation6 + $0x70] sm:$0xff]
    %v184 = vld [vmem:[#allocation6 + $0x78] sm:$0xff]
    %v185 = vld [vmem:[#allocation6 + $0x80] sm:$0xff]
    %v186 = vld [vmem:[#allocation6 + $0x88] sm:$0xff]
    %v187 = vld [vmem:[#allocation6 + $0x90] sm:$0xff]
    %v188 = vld [vmem:[#allocation6 + $0x98] sm:$0xff]
    %v189 = vld [vmem:[#allocation6 + $0xa0] sm:$0xff]
    %v190 = vld [vmem:[#allocation6 + $0xa8] sm:$0xff]
    %v191 = vld [vmem:[#allocation6 + $0xb0] sm:$0xff]
    %v192 = vld [vmem:[#allocation6 + $0xb8] sm:$0xff]
    %v193 = vld [vmem:[#allocation8] sm:$0xff]
    %v194 = vld [vmem:[#allocation8 + $0x8] sm:$0xff]
    %v195 = vld [vmem:[#allocation8 + $0x10] sm:$0xff]
    %v196 = vld [vmem:[#allocation8 + $0x18] sm:$0xff]
    %v197 = vld [vmem:[#allocation8 + $0x20] sm:$0xff]
    %v198 = vld [vmem:[#allocation8 + $0x28] sm:$0xff]
    %v199 = vld [vmem:[#allocation8 + $0x30] sm:$0xff]
    %v200 = vld [vmem:[#allocation8 + $0x38] sm:$0xff]
    %v201 = vld [vmem:[#allocation8 + $0x40] sm:$0xff]
    %v202 = vld [vmem:[#allocation8 + $0x48] sm:$0xff]
    %v203 = vld [vmem:[#allocation8 + $0x50] sm:$0xff]
    %v204 = vld [vmem:[#allocation8 + $0x58] sm:$0xff]
    %v205 = vld [vmem:[#allocation8 + $0x60] sm:$0xff]
    %v206 = vld [vmem:[#allocation8 + $0x68] sm:$0xff]
    %v207 = vld [vmem:[#allocation8 + $0x70] sm:$0xff]
    %v208 = vld [vmem:[#allocation8 + $0x78] sm:$0xff]
    %v209 = vld [vmem:[#allocation8 + $0x80] sm:$0xff]
    %v210 = vld [vmem:[#allocation8 + $0x88] sm:$0xff]
    %v211 = vld [vmem:[#allocation8 + $0x90] sm:$0xff]
    %v212 = vld [vmem:[#allocation8 + $0x98] sm:$0xff]
    %v213 = vld [vmem:[#allocation8 + $0xa0] sm:$0xff]
    %v214 = vld [vmem:[#allocation8 + $0xa8] sm:$0xff]
    %v215 = vld [vmem:[#allocation8 + $0xb0] sm:$0xff]
    %v216 = vld [vmem:[#allocation8 + $0xb8] sm:$0xff]
    %v217 = vld [vmem:[#allocation8 + $0xc0] sm:$0xff]
    %v218 = vld [vmem:[#allocation8 + $0xc8] sm:$0xff]
    %v219 = vld [vmem:[#allocation8 + $0xd0] sm:$0xff]
    %v220 = vld [vmem:[#allocation8 + $0xd8] sm:$0xff]
    %v221 = vld [vmem:[#allocation8 + $0xe0] sm:$0xff]
    %v222 = vld [vmem:[#allocation8 + $0xe8] sm:$0xff]
    %v223 = vld [vmem:[#allocation8 + $0xf0] sm:$0xff]
    %v224 = vld [vmem:[#allocation8 + $0xf8] sm:$0xff]
    %v225 = vld [vmem:[#allocation8 + $0x100] sm:$0xff]
    %v226 = vld [vmem:[#allocation8 + $0x108] sm:$0xff]
    %v227 = vld [vmem:[#allocation8 + $0x110] sm:$0xff]
    %v228 = vld [vmem:[#allocation8 + $0x118] sm:$0xff]
    %v229 = vld [vmem:[#allocation8 + $0x120] sm:$0xff]
    %v230 = vld [vmem:[#allocation8 + $0x128] sm:$0xff]
    %v231 = vld [vmem:[#allocation8 + $0x130] sm:$0xff]
    %v232 = vld [vmem:[#allocation8 + $0x138] sm:$0xff]
    %v233 = vld [vmem:[#allocation8 + $0x140] sm:$0xff]
    %v234 = vld [vmem:[#allocation8 + $0x148] sm:$0xff]
    %v235 = vld [vmem:[#allocation8 + $0x150] sm:$0xff]
    %v236 = vld [vmem:[#allocation8 + $0x158] sm:$0xff]
    %v237 = vld [vmem:[#allocation8 + $0x160] sm:$0xff]
    %v238 = vld [vmem:[#allocation8 + $0x168] sm:$0xff]
    %v239 = vld [vmem:[#allocation8 + $0x170] sm:$0xff]
    %v240 = vld [vmem:[#allocation8 + $0x178] sm:$0xff]
    %v241 = vld [vmem:[#allocation8 + $0x180] sm:$0xff]
    %v242 = vld [vmem:[#allocation8 + $0x188] sm:$0xff]
    %v243 = vld [vmem:[#allocation8 + $0x190] sm:$0xff]
    %v244 = vld [vmem:[#allocation8 + $0x198] sm:$0xff]
    %v245 = vld [vmem:[#allocation8 + $0x1a0] sm:$0xff]
    %v246 = vld [vmem:[#allocation8 + $0x1a8] sm:$0xff]
    %v247 = vld [vmem:[#allocation8 + $0x1b0] sm:$0xff]
    %v248 = vld [vmem:[#allocation8 + $0x1b8] sm:$0xff]
    %v249 = vld [vmem:[#allocation8 + $0x1c0] sm:$0xff]
    %v250 = vld [vmem:[#allocation8 + $0x1c8] sm:$0xff]
    %v251 = vld [vmem:[#allocation8 + $0x1d0] sm:$0xff]
    %v252 = vld [vmem:[#allocation8 + $0x1d8] sm:$0xff]
    %v253 = vld [vmem:[#allocation8 + $0x1e0] sm:$0xff]
    %v254 = vld [vmem:[#allocation8 + $0x1e8] sm:$0xff]
    %v255 = vld [vmem:[#allocation8 + $0x1f0] sm:$0xff]
    %v256 = vld [vmem:[#allocation8 + $0x1f8] sm:$0xff]
    %v257 = vld [vmem:[#allocation8 + $0x200] sm:$0xff]
    %v258 = vld [vmem:[#allocation8 + $0x208] sm:$0xff]
    %v259 = vld [vmem:[#allocation8 + $0x210] sm:$0xff]
    %v260 = vld [vmem:[#allocation8 + $0x218] sm:$0xff]
    %v261 = vld [vmem:[#allocation8 + $0x220] sm:$0xff]
    %v262 = vld [vmem:[#allocation8 + $0x228] sm:$0xff]
    %v263 = vld [vmem:[#allocation8 + $0x230] sm:$0xff]
    %v264 = vld [vmem:[#allocation8 + $0x238] sm:$0xff]
    %v265 = vld [vmem:[#allocation8 + $0x240] sm:$0xff]
    %v266 = vld [vmem:[#allocation8 + $0x248] sm:$0xff]
    %v267 = vld [vmem:[#allocation8 + $0x250] sm:$0xff]
    %v268 = vld [vmem:[#allocation8 + $0x258] sm:$0xff]
    %v269 = vld [vmem:[#allocation8 + $0x260] sm:$0xff]
    %v270 = vld [vmem:[#allocation8 + $0x268] sm:$0xff]
    %v271 = vld [vmem:[#allocation8 + $0x270] sm:$0xff]
    %v272 = vld [vmem:[#allocation8 + $0x278] sm:$0xff]
    %v273 = vld [vmem:[#allocation8 + $0x280] sm:$0xff]
    %v274 = vld [vmem:[#allocation8 + $0x288] sm:$0xff]
    %v275 = vld [vmem:[#allocation8 + $0x290] sm:$0xff]
    %v276 = vld [vmem:[#allocation8 + $0x298] sm:$0xff]
    %v277 = vld [vmem:[#allocation8 + $0x2a0] sm:$0xff]
    %v278 = vld [vmem:[#allocation8 + $0x2a8] sm:$0xff]
    %v279 = vld [vmem:[#allocation8 + $0x2b0] sm:$0xff]
    %v280 = vld [vmem:[#allocation8 + $0x2b8] sm:$0xff]
    %v281 = vld [vmem:[#allocation8 + $0x2c0] sm:$0xff]
    %v282 = vld [vmem:[#allocation8 + $0x2c8] sm:$0xff]
    %v283 = vld [vmem:[#allocation8 + $0x2d0] sm:$0xff]
    %v284 = vld [vmem:[#allocation8 + $0x2d8] sm:$0xff]
    %v285 = vld [vmem:[#allocation8 + $0x2e0] sm:$0xff]
    %v286 = vld [vmem:[#allocation8 + $0x2e8] sm:$0xff]
    %v287 = vld [vmem:[#allocation8 + $0x2f0] sm:$0xff]
    %v288 = vld [vmem:[#allocation8 + $0x2f8] sm:$0xff]
    %v289 = vld [vmem:[#allocation8 + $0x300] sm:$0xff]
    %v290 = vld [vmem:[#allocation8 + $0x308] sm:$0xff]
    %v291 = vld [vmem:[#allocation8 + $0x310] sm:$0xff]
    %v292 = vld [vmem:[#allocation8 + $0x318] sm:$0xff]
    %v293 = vld [vmem:[#allocation8 + $0x320] sm:$0xff]
    %v294 = vld [vmem:[#allocation8 + $0x328] sm:$0xff]
    %v295 = vld [vmem:[#allocation8 + $0x330] sm:$0xff]
    %v296 = vld [vmem:[#allocation8 + $0x338] sm:$0xff]
    %v297 = vld [vmem:[#allocation8 + $0x340] sm:$0xff]
    %v298 = vld [vmem:[#allocation8 + $0x348] sm:$0xff]
    %v299 = vld [vmem:[#allocation8 + $0x350] sm:$0xff]
    %v300 = vld [vmem:[#allocation8 + $0x358] sm:$0xff]
    %v301 = vld [vmem:[#allocation8 + $0x360] sm:$0xff]
    %v302 = vld [vmem:[#allocation8 + $0x368] sm:$0xff]
    %v303 = vld [vmem:[#allocation8 + $0x370] sm:$0xff]
    %v304 = vld [vmem:[#allocation8 + $0x378] sm:$0xff]
    %v305 = vld [vmem:[#allocation8 + $0x380] sm:$0xff]
    %v306 = vld [vmem:[#allocation8 + $0x388] sm:$0xff]
    %v307 = vld [vmem:[#allocation8 + $0x390] sm:$0xff]
    %v308 = vld [vmem:[#allocation8 + $0x398] sm:$0xff]
    %v309 = vld [vmem:[#allocation8 + $0x3a0] sm:$0xff]
    %v310 = vld [vmem:[#allocation8 + $0x3a8] sm:$0xff]
    %v311 = vld [vmem:[#allocation8 + $0x3b0] sm:$0xff]
    %v312 = vld [vmem:[#allocation8 + $0x3b8] sm:$0xff]
    %v313 = vld [vmem:[#allocation8 + $0x3c0] sm:$0xff]
    %v314 = vld [vmem:[#allocation8 + $0x3c8] sm:$0xff]
    %v315 = vld [vmem:[#allocation8 + $0x3d0] sm:$0xff]
    %v316 = vld [vmem:[#allocation8 + $0x3d8] sm:$0xff]
    %v317 = vld [vmem:[#allocation8 + $0x3e0] sm:$0xff]
    %v318 = vld [vmem:[#allocation8 + $0x3e8] sm:$0xff]
    %v319 = vld [vmem:[#allocation8 + $0x3f0] sm:$0xff]
    %v320 = vld [vmem:[#allocation8 + $0x3f8] sm:$0xff]
    %v321 = vld [vmem:[#allocation8 + $0x400] sm:$0xff]
    %v322 = vld [vmem:[#allocation8 + $0x408] sm:$0xff]
    %v323 = vld [vmem:[#allocation8 + $0x410] sm:$0xff]
    %v324 = vld [vmem:[#allocation8 + $0x418] sm:$0xff]
    %v325 = vld [vmem:[#allocation8 + $0x420] sm:$0xff]
    %v326 = vld [vmem:[#allocation8 + $0x428] sm:$0xff]
    %v327 = vld [vmem:[#allocation8 + $0x430] sm:$0xff]
    %v328 = vld [vmem:[#allocation8 + $0x438] sm:$0xff]
    %v329 = vld [vmem:[#allocation8 + $0x440] sm:$0xff]
    %v330 = vld [vmem:[#allocation8 + $0x448] sm:$0xff]
    %v331 = vld [vmem:[#allocation8 + $0x450] sm:$0xff]
    %v332 = vld [vmem:[#allocation8 + $0x458] sm:$0xff]
    %v333 = vld [vmem:[#allocation8 + $0x460] sm:$0xff]
    %v334 = vld [vmem:[#allocation8 + $0x468] sm:$0xff]
    %v335 = vld [vmem:[#allocation8 + $0x470] sm:$0xff]
    %v336 = vld [vmem:[#allocation8 + $0x478] sm:$0xff]
    %v337 = vld [vmem:[#allocation8 + $0x480] sm:$0xff]
    %v338 = vld [vmem:[#allocation8 + $0x488] sm:$0xff]
    %v339 = vld [vmem:[#allocation8 + $0x490] sm:$0xff]
    %v340 = vld [vmem:[#allocation8 + $0x498] sm:$0xff]
    %v341 = vld [vmem:[#allocation8 + $0x4a0] sm:$0xff]
    %v342 = vld [vmem:[#allocation8 + $0x4a8] sm:$0xff]
    %v343 = vld [vmem:[#allocation8 + $0x4b0] sm:$0xff]
    %v344 = vld [vmem:[#allocation8 + $0x4b8] sm:$0xff]
    %v345 = vld [vmem:[#allocation8 + $0x4c0] sm:$0xff]
    %v346 = vld [vmem:[#allocation8 + $0x4c8] sm:$0xff]
    %v347 = vld [vmem:[#allocation8 + $0x4d0] sm:$0xff]
    %v348 = vld [vmem:[#allocation8 + $0x4d8] sm:$0xff]
    %v349 = vld [vmem:[#allocation8 + $0x4e0] sm:$0xff]
    %v350 = vld [vmem:[#allocation8 + $0x4e8] sm:$0xff]
    %v351 = vld [vmem:[#allocation8 + $0x4f0] sm:$0xff]
    %v352 = vld [vmem:[#allocation8 + $0x4f8] sm:$0xff]
    %v353 = vld [vmem:[#allocation8 + $0x500] sm:$0xff]
    %v354 = vld [vmem:[#allocation8 + $0x508] sm:$0xff]
    %v355 = vld [vmem:[#allocation8 + $0x510] sm:$0xff]
    %v356 = vld [vmem:[#allocation8 + $0x518] sm:$0xff]
    %v357 = vld [vmem:[#allocation8 + $0x520] sm:$0xff]
    %v358 = vld [vmem:[#allocation8 + $0x528] sm:$0xff]
    %v359 = vld [vmem:[#allocation8 + $0x530] sm:$0xff]
    %v360 = vld [vmem:[#allocation8 + $0x538] sm:$0xff]
    %v361 = vld [vmem:[#allocation8 + $0x540] sm:$0xff]
    %v362 = vld [vmem:[#allocation8 + $0x548] sm:$0xff]
    %v363 = vld [vmem:[#allocation8 + $0x550] sm:$0xff]
    %v364 = vld [vmem:[#allocation8 + $0x558] sm:$0xff]
    %v365 = vld [vmem:[#allocation8 + $0x560] sm:$0xff]
    %v366 = vld [vmem:[#allocation8 + $0x568] sm:$0xff]
    %v367 = vld [vmem:[#allocation8 + $0x570] sm:$0xff]
    %v368 = vld [vmem:[#allocation8 + $0x578] sm:$0xff]
    %v369 = vld [vmem:[#allocation8 + $0x580] sm:$0xff]
    %v370 = vld [vmem:[#allocation8 + $0x588] sm:$0xff]
    %v371 = vld [vmem:[#allocation8 + $0x590] sm:$0xff]
    %v372 = vld [vmem:[#allocation8 + $0x598] sm:$0xff]
    %v373 = vld [vmem:[#allocation8 + $0x5a0] sm:$0xff]
    %v374 = vld [vmem:[#allocation8 + $0x5a8] sm:$0xff]
    %v375 = vld [vmem:[#allocation8 + $0x5b0] sm:$0xff]
    %v376 = vld [vmem:[#allocation8 + $0x5b8] sm:$0xff]
    %v377 = vld [vmem:[#allocation8 + $0x5c0] sm:$0xff]
    %v378 = vld [vmem:[#allocation8 + $0x5c8] sm:$0xff]
    %v379 = vld [vmem:[#allocation8 + $0x5d0] sm:$0xff]
    %v380 = vld [vmem:[#allocation8 + $0x5d8] sm:$0xff]
    %v381 = vld [vmem:[#allocation8 + $0x5e0] sm:$0xff]
    %v382 = vld [vmem:[#allocation8 + $0x5e8] sm:$0xff]
    %v383 = vld [vmem:[#allocation8 + $0x5f0] sm:$0xff]
    %v384 = vld [vmem:[#allocation8 + $0x5f8] sm:$0xff]
    %v385 = vld [vmem:[#allocation9] sm:$0xff]
    %v386 = vld [vmem:[#allocation9 + $0x8] sm:$0xff]
    %v387 = vld [vmem:[#allocation9 + $0x10] sm:$0xff]
    %v388 = vld [vmem:[#allocation9 + $0x18] sm:$0xff]
    %v389 = vld [vmem:[#allocation9 + $0x20] sm:$0xff]
    %v390 = vld [vmem:[#allocation9 + $0x28] sm:$0xff]
    %v391 = vld [vmem:[#allocation9 + $0x30] sm:$0xff]
    %v392 = vld [vmem:[#allocation9 + $0x38] sm:$0xff]
    %v393 = vld [vmem:[#allocation9 + $0x40] sm:$0xff]
    %v394 = vld [vmem:[#allocation9 + $0x48] sm:$0xff]
    %v395 = vld [vmem:[#allocation9 + $0x50] sm:$0xff]
    %v396 = vld [vmem:[#allocation9 + $0x58] sm:$0xff]
    %v397 = vld [vmem:[#allocation9 + $0x60] sm:$0xff]
    %v398 = vld [vmem:[#allocation9 + $0x68] sm:$0xff]
    %v399 = vld [vmem:[#allocation9 + $0x70] sm:$0xff]
    %v400 = vld [vmem:[#allocation9 + $0x78] sm:$0xff]
    %v401 = vld [vmem:[#allocation9 + $0x80] sm:$0xff]
    %v402 = vld [vmem:[#allocation9 + $0x88] sm:$0xff]
    %v403 = vld [vmem:[#allocation9 + $0x90] sm:$0xff]
    %v404 = vld [vmem:[#allocation9 + $0x98] sm:$0xff]
    %v405 = vld [vmem:[#allocation9 + $0xa0] sm:$0xff]
    %v406 = vld [vmem:[#allocation9 + $0xa8] sm:$0xff]
    %v407 = vld [vmem:[#allocation9 + $0xb0] sm:$0xff]
    %v408 = vld [vmem:[#allocation9 + $0xb8] sm:$0xff]
    %v409 = vld [vmem:[#allocation9 + $0xc0] sm:$0xff]
    %v410 = vld [vmem:[#allocation9 + $0xc8] sm:$0xff]
    %v411 = vld [vmem:[#allocation9 + $0xd0] sm:$0xff]
    %v412 = vld [vmem:[#allocation9 + $0xd8] sm:$0xff]
    %v413 = vld [vmem:[#allocation9 + $0xe0] sm:$0xff]
    %v414 = vld [vmem:[#allocation9 + $0xe8] sm:$0xff]
    %v415 = vld [vmem:[#allocation9 + $0xf0] sm:$0xff]
    %v416 = vld [vmem:[#allocation9 + $0xf8] sm:$0xff]
    %v417 = vld [vmem:[#allocation9 + $0x100] sm:$0xff]
    %v418 = vld [vmem:[#allocation9 + $0x108] sm:$0xff]
    %v419 = vld [vmem:[#allocation9 + $0x110] sm:$0xff]
    %v420 = vld [vmem:[#allocation9 + $0x118] sm:$0xff]
    %v421 = vld [vmem:[#allocation9 + $0x120] sm:$0xff]
    %v422 = vld [vmem:[#allocation9 + $0x128] sm:$0xff]
    %v423 = vld [vmem:[#allocation9 + $0x130] sm:$0xff]
    %v424 = vld [vmem:[#allocation9 + $0x138] sm:$0xff]
    %v425 = vld [vmem:[#allocation9 + $0x140] sm:$0xff]
    %v426 = vld [vmem:[#allocation9 + $0x148] sm:$0xff]
    %v427 = vld [vmem:[#allocation9 + $0x150] sm:$0xff]
    %v428 = vld [vmem:[#allocation9 + $0x158] sm:$0xff]
    %v429 = vld [vmem:[#allocation9 + $0x160] sm:$0xff]
    %v430 = vld [vmem:[#allocation9 + $0x168] sm:$0xff]
    %v431 = vld [vmem:[#allocation9 + $0x170] sm:$0xff]
    %v432 = vld [vmem:[#allocation9 + $0x178] sm:$0xff]
    %v433 = vld [vmem:[#allocation9 + $0x180] sm:$0xff]
    %v434 = vld [vmem:[#allocation9 + $0x188] sm:$0xff]
    %v435 = vld [vmem:[#allocation9 + $0x190] sm:$0xff]
    %v436 = vld [vmem:[#allocation9 + $0x198] sm:$0xff]
    %v437 = vld [vmem:[#allocation9 + $0x1a0] sm:$0xff]
    %v438 = vld [vmem:[#allocation9 + $0x1a8] sm:$0xff]
    %v439 = vld [vmem:[#allocation9 + $0x1b0] sm:$0xff]
    %v440 = vld [vmem:[#allocation9 + $0x1b8] sm:$0xff]
    %v441 = vld [vmem:[#allocation9 + $0x1c0] sm:$0xff]
    %v442 = vld [vmem:[#allocation9 + $0x1c8] sm:$0xff]
    %v443 = vld [vmem:[#allocation9 + $0x1d0] sm:$0xff]
    %v444 = vld [vmem:[#allocation9 + $0x1d8] sm:$0xff]
    %v445 = vld [vmem:[#allocation9 + $0x1e0] sm:$0xff]
    %v446 = vld [vmem:[#allocation9 + $0x1e8] sm:$0xff]
    %v447 = vld [vmem:[#allocation9 + $0x1f0] sm:$0xff]
    %v448 = vld [vmem:[#allocation9 + $0x1f8] sm:$0xff]
    %v449 = vld [vmem:[#allocation9 + $0x200] sm:$0xff]
    %v450 = vld [vmem:[#allocation9 + $0x208] sm:$0xff]
    %v451 = vld [vmem:[#allocation9 + $0x210] sm:$0xff]
    %v452 = vld [vmem:[#allocation9 + $0x218] sm:$0xff]
    %v453 = vld [vmem:[#allocation9 + $0x220] sm:$0xff]
    %v454 = vld [vmem:[#allocation9 + $0x228] sm:$0xff]
    %v455 = vld [vmem:[#allocation9 + $0x230] sm:$0xff]
    %v456 = vld [vmem:[#allocation9 + $0x238] sm:$0xff]
    %v457 = vld [vmem:[#allocation9 + $0x240] sm:$0xff]
    %v458 = vld [vmem:[#allocation9 + $0x248] sm:$0xff]
    %v459 = vld [vmem:[#allocation9 + $0x250] sm:$0xff]
    %v460 = vld [vmem:[#allocation9 + $0x258] sm:$0xff]
    %v461 = vld [vmem:[#allocation9 + $0x260] sm:$0xff]
    %v462 = vld [vmem:[#allocation9 + $0x268] sm:$0xff]
    %v463 = vld [vmem:[#allocation9 + $0x270] sm:$0xff]
    %v464 = vld [vmem:[#allocation9 + $0x278] sm:$0xff]
    %v465 = vld [vmem:[#allocation9 + $0x280] sm:$0xff]
    %v466 = vld [vmem:[#allocation9 + $0x288] sm:$0xff]
    %v467 = vld [vmem:[#allocation9 + $0x290] sm:$0xff]
    %v468 = vld [vmem:[#allocation9 + $0x298] sm:$0xff]
    %v469 = vld [vmem:[#allocation9 + $0x2a0] sm:$0xff]
    %v470 = vld [vmem:[#allocation9 + $0x2a8] sm:$0xff]
    %v471 = vld [vmem:[#allocation9 + $0x2b0] sm:$0xff]
    %v472 = vld [vmem:[#allocation9 + $0x2b8] sm:$0xff]
    %v473 = vld [vmem:[#allocation9 + $0x2c0] sm:$0xff]
    %v474 = vld [vmem:[#allocation9 + $0x2c8] sm:$0xff]
    %v475 = vld [vmem:[#allocation9 + $0x2d0] sm:$0xff]
    %v476 = vld [vmem:[#allocation9 + $0x2d8] sm:$0xff]
    %v477 = vld [vmem:[#allocation9 + $0x2e0] sm:$0xff]
    %v478 = vld [vmem:[#allocation9 + $0x2e8] sm:$0xff]
    %v479 = vld [vmem:[#allocation9 + $0x2f0] sm:$0xff]
    %v480 = vld [vmem:[#allocation9 + $0x2f8] sm:$0xff]
    %v481 = vld [vmem:[#allocation9 + $0x300] sm:$0xff]
    %v482 = vld [vmem:[#allocation9 + $0x308] sm:$0xff]
    %v483 = vld [vmem:[#allocation9 + $0x310] sm:$0xff]
    %v484 = vld [vmem:[#allocation9 + $0x318] sm:$0xff]
    %v485 = vld [vmem:[#allocation9 + $0x320] sm:$0xff]
    %v486 = vld [vmem:[#allocation9 + $0x328] sm:$0xff]
    %v487 = vld [vmem:[#allocation9 + $0x330] sm:$0xff]
    %v488 = vld [vmem:[#allocation9 + $0x338] sm:$0xff]
    %v489 = vld [vmem:[#allocation9 + $0x340] sm:$0xff]
    %v490 = vld [vmem:[#allocation9 + $0x348] sm:$0xff]
    %v491 = vld [vmem:[#allocation9 + $0x350] sm:$0xff]
    %v492 = vld [vmem:[#allocation9 + $0x358] sm:$0xff]
    %v493 = vld [vmem:[#allocation9 + $0x360] sm:$0xff]
    %v494 = vld [vmem:[#allocation9 + $0x368] sm:$0xff]
    %v495 = vld [vmem:[#allocation9 + $0x370] sm:$0xff]
    %v496 = vld [vmem:[#allocation9 + $0x378] sm:$0xff]
    %v497 = vld [vmem:[#allocation9 + $0x380] sm:$0xff]
    %v498 = vld [vmem:[#allocation9 + $0x388] sm:$0xff]
    %v499 = vld [vmem:[#allocation9 + $0x390] sm:$0xff]
    %v500 = vld [vmem:[#allocation9 + $0x398] sm:$0xff]
    %v501 = vld [vmem:[#allocation9 + $0x3a0] sm:$0xff]
    %v502 = vld [vmem:[#allocation9 + $0x3a8] sm:$0xff]
    %v503 = vld [vmem:[#allocation9 + $0x3b0] sm:$0xff]
    %v504 = vld [vmem:[#allocation9 + $0x3b8] sm:$0xff]
    %v505 = vld [vmem:[#allocation9 + $0x3c0] sm:$0xff]
    %v506 = vld [vmem:[#allocation9 + $0x3c8] sm:$0xff]
    %v507 = vld [vmem:[#allocation9 + $0x3d0] sm:$0xff]
    %v508 = vld [vmem:[#allocation9 + $0x3d8] sm:$0xff]
    %v509 = vld [vmem:[#allocation9 + $0x3e0] sm:$0xff]
    %v510 = vld [vmem:[#allocation9 + $0x3e8] sm:$0xff]
    %v511 = vld [vmem:[#allocation9 + $0x3f0] sm:$0xff]
    %v512 = vld [vmem:[#allocation9 + $0x3f8] sm:$0xff]
    %v513 = vld [vmem:[#allocation9 + $0x400] sm:$0xff]
    %v514 = vld [vmem:[#allocation9 + $0x408] sm:$0xff]
    %v515 = vld [vmem:[#allocation9 + $0x410] sm:$0xff]
    %v516 = vld [vmem:[#allocation9 + $0x418] sm:$0xff]
    %v517 = vld [vmem:[#allocation9 + $0x420] sm:$0xff]
    %v518 = vld [vmem:[#allocation9 + $0x428] sm:$0xff]
    %v519 = vld [vmem:[#allocation9 + $0x430] sm:$0xff]
    %v520 = vld [vmem:[#allocation9 + $0x438] sm:$0xff]
    %v521 = vld [vmem:[#allocation9 + $0x440] sm:$0xff]
    %v522 = vld [vmem:[#allocation9 + $0x448] sm:$0xff]
    %v523 = vld [vmem:[#allocation9 + $0x450] sm:$0xff]
    %v524 = vld [vmem:[#allocation9 + $0x458] sm:$0xff]
    %v525 = vld [vmem:[#allocation9 + $0x460] sm:$0xff]
    %v526 = vld [vmem:[#allocation9 + $0x468] sm:$0xff]
    %v527 = vld [vmem:[#allocation9 + $0x470] sm:$0xff]
    %v528 = vld [vmem:[#allocation9 + $0x478] sm:$0xff]
    %v529 = vld [vmem:[#allocation9 + $0x480] sm:$0xff]
    %v530 = vld [vmem:[#allocation9 + $0x488] sm:$0xff]
    %v531 = vld [vmem:[#allocation9 + $0x490] sm:$0xff]
    %v532 = vld [vmem:[#allocation9 + $0x498] sm:$0xff]
    %v533 = vld [vmem:[#allocation9 + $0x4a0] sm:$0xff]
    %v534 = vld [vmem:[#allocation9 + $0x4a8] sm:$0xff]
    %v535 = vld [vmem:[#allocation9 + $0x4b0] sm:$0xff]
    %v536 = vld [vmem:[#allocation9 + $0x4b8] sm:$0xff]
    %v537 = vld [vmem:[#allocation9 + $0x4c0] sm:$0xff]
    %v538 = vld [vmem:[#allocation9 + $0x4c8] sm:$0xff]
    %v539 = vld [vmem:[#allocation9 + $0x4d0] sm:$0xff]
    %v540 = vld [vmem:[#allocation9 + $0x4d8] sm:$0xff]
    %v541 = vld [vmem:[#allocation9 + $0x4e0] sm:$0xff]
    %v542 = vld [vmem:[#allocation9 + $0x4e8] sm:$0xff]
    %v543 = vld [vmem:[#allocation9 + $0x4f0] sm:$0xff]
    %v544 = vld [vmem:[#allocation9 + $0x4f8] sm:$0xff]
    %v545 = vld [vmem:[#allocation9 + $0x500] sm:$0xff]
    %v546 = vld [vmem:[#allocation9 + $0x508] sm:$0xff]
    %v547 = vld [vmem:[#allocation9 + $0x510] sm:$0xff]
    %v548 = vld [vmem:[#allocation9 + $0x518] sm:$0xff]
    %v549 = vld [vmem:[#allocation9 + $0x520] sm:$0xff]
    %v550 = vld [vmem:[#allocation9 + $0x528] sm:$0xff]
    %v551 = vld [vmem:[#allocation9 + $0x530] sm:$0xff]
    %v552 = vld [vmem:[#allocation9 + $0x538] sm:$0xff]
    %v553 = vld [vmem:[#allocation9 + $0x540] sm:$0xff]
    %v554 = vld [vmem:[#allocation9 + $0x548] sm:$0xff]
    %v555 = vld [vmem:[#allocation9 + $0x550] sm:$0xff]
    %v556 = vld [vmem:[#allocation9 + $0x558] sm:$0xff]
    %v557 = vld [vmem:[#allocation9 + $0x560] sm:$0xff]
    %v558 = vld [vmem:[#allocation9 + $0x568] sm:$0xff]
    %v559 = vld [vmem:[#allocation9 + $0x570] sm:$0xff]
    %v560 = vld [vmem:[#allocation9 + $0x578] sm:$0xff]
    %v561 = vld [vmem:[#allocation9 + $0x580] sm:$0xff]
    %v562 = vld [vmem:[#allocation9 + $0x588] sm:$0xff]
    %v563 = vld [vmem:[#allocation9 + $0x590] sm:$0xff]
    %v564 = vld [vmem:[#allocation9 + $0x598] sm:$0xff]
    %v565 = vld [vmem:[#allocation9 + $0x5a0] sm:$0xff]
    %v566 = vld [vmem:[#allocation9 + $0x5a8] sm:$0xff]
    %v567 = vld [vmem:[#allocation9 + $0x5b0] sm:$0xff]
    %v568 = vld [vmem:[#allocation9 + $0x5b8] sm:$0xff]
    %v569 = vld [vmem:[#allocation9 + $0x5c0] sm:$0xff]
    %v570 = vld [vmem:[#allocation9 + $0x5c8] sm:$0xff]
    %v571 = vld [vmem:[#allocation9 + $0x5d0] sm:$0xff]
    %v572 = vld [vmem:[#allocation9 + $0x5d8] sm:$0xff]
    %v573 = vld [vmem:[#allocation9 + $0x5e0] sm:$0xff]
    %v574 = vld [vmem:[#allocation9 + $0x5e8] sm:$0xff]
    %v575 = vld [vmem:[#allocation9 + $0x5f0] sm:$0xff]
    %v576 = vld [vmem:[#allocation9 + $0x5f8] sm:$0xff]
    %v601 = vunpack.c.l.b16 %v169
    %v602 = vunpack.c.h.b16 %v169
    %v603 = vunpack.c.l.b16 %v170
    %v604 = vunpack.c.h.b16 %v170
    %v605 = vunpack.c.l.b16 %v171
    %v606 = vunpack.c.h.b16 %v171
    %v607 = vunpack.c.l.b16 %v172
    %v608 = vunpack.c.h.b16 %v172
    %v609 = vunpack.c.l.b16 %v173
    %v610 = vunpack.c.h.b16 %v173
    %v611 = vunpack.c.l.b16 %v174
    %v612 = vunpack.c.h.b16 %v174
    %v613 = vunpack.c.l.b16 %v175
    %v614 = vunpack.c.h.b16 %v175
    %v615 = vunpack.c.l.b16 %v176
    %v616 = vunpack.c.h.b16 %v176
    %v617 = vunpack.c.l.b16 %v177
    %v618 = vunpack.c.h.b16 %v177
    %v619 = vunpack.c.l.b16 %v178
    %v620 = vunpack.c.h.b16 %v178
    %v621 = vunpack.c.l.b16 %v179
    %v622 = vunpack.c.h.b16 %v179
    %v623 = vunpack.c.l.b16 %v180
    %v624 = vunpack.c.h.b16 %v180
    %v625 = vunpack.c.l.b16 %v181
    %v626 = vunpack.c.h.b16 %v181
    %v627 = vunpack.c.l.b16 %v182
    %v628 = vunpack.c.h.b16 %v182
    %v629 = vunpack.c.l.b16 %v183
    %v630 = vunpack.c.h.b16 %v183
    %v631 = vunpack.c.l.b16 %v184
    %v632 = vunpack.c.h.b16 %v184
    %v633 = vunpack.c.l.b16 %v185
    %v634 = vunpack.c.h.b16 %v185
    %v635 = vunpack.c.l.b16 %v186
    %v636 = vunpack.c.h.b16 %v186
    %v637 = vunpack.c.l.b16 %v187
    %v638 = vunpack.c.h.b16 %v187
    %v639 = vunpack.c.l.b16 %v188
    %v640 = vunpack.c.h.b16 %v188
    %v641 = vunpack.c.l.b16 %v189
    %v642 = vunpack.c.h.b16 %v189
    %v643 = vunpack.c.l.b16 %v190
    %v644 = vunpack.c.h.b16 %v190
    %v645 = vunpack.c.l.b16 %v191
    %v646 = vunpack.c.h.b16 %v191
    %v647 = vunpack.c.l.b16 %v192
    %v648 = vunpack.c.h.b16 %v192
    %v649 = vpack.c.b16 %v607, %v601
    %v650 = vpack.c.b16 %v608, %v602
    %v651 = vpack.c.b16 %v609, %v603
    %v652 = vpack.c.b16 %v610, %v604
    %v653 = vpack.c.b16 %v611, %v605
    %v654 = vpack.c.b16 %v612, %v606
    %v655 = vpack.c.b16 %v619, %v613
    %v656 = vpack.c.b16 %v620, %v614
    %v657 = vpack.c.b16 %v621, %v615
    %v658 = vpack.c.b16 %v622, %v616
    %v659 = vpack.c.b16 %v623, %v617
    %v660 = vpack.c.b16 %v624, %v618
    %v661 = vpack.c.b16 %v631, %v625
    %v662 = vpack.c.b16 %v632, %v626
    %v663 = vpack.c.b16 %v633, %v627
    %v664 = vpack.c.b16 %v634, %v628
    %v665 = vpack.c.b16 %v635, %v629
    %v666 = vpack.c.b16 %v636, %v630
    %v667 = vpack.c.b16 %v643, %v637
    %v668 = vpack.c.b16 %v644, %v638
    %v669 = vpack.c.b16 %v645, %v639
    %v670 = vpack.c.b16 %v646, %v640
    %v671 = vpack.c.b16 %v647, %v641
    %v672 = vpack.c.b16 %v648, %v642
    %v889 = vunpack.c.l.b16 %v385
    %v890 = vunpack.c.h.b16 %v385
    %v891 = vunpack.c.l.b16 %v386
    %v892 = vunpack.c.h.b16 %v386
    %v893 = vunpack.c.l.b16 %v387
    %v894 = vunpack.c.h.b16 %v387
    %v895 = vunpack.c.l.b16 %v388
    %v896 = vunpack.c.h.b16 %v388
    %v897 = vunpack.c.l.b16 %v389
    %v898 = vunpack.c.h.b16 %v389
    %v899 = vunpack.c.l.b16 %v390
    %v900 = vunpack.c.h.b16 %v390
    %v901 = vunpack.c.l.b16 %v391
    %v902 = vunpack.c.h.b16 %v391
    %v903 = vunpack.c.l.b16 %v392
    %v904 = vunpack.c.h.b16 %v392
    %v905 = vunpack.c.l.b16 %v393
    %v906 = vunpack.c.h.b16 %v393
    %v907 = vunpack.c.l.b16 %v394
    %v908 = vunpack.c.h.b16 %v394
    %v909 = vunpack.c.l.b16 %v395
    %v910 = vunpack.c.h.b16 %v395
    %v911 = vunpack.c.l.b16 %v396
    %v912 = vunpack.c.h.b16 %v396
    %v913 = vunpack.c.l.b16 %v397
    %v914 = vunpack.c.h.b16 %v397
    %v915 = vunpack.c.l.b16 %v398
    %v916 = vunpack.c.h.b16 %v398
    %v917 = vunpack.c.l.b16 %v399
    %v918 = vunpack.c.h.b16 %v399
    %v919 = vunpack.c.l.b16 %v400
    %v920 = vunpack.c.h.b16 %v400
    %v921 = vunpack.c.l.b16 %v401
    %v922 = vunpack.c.h.b16 %v401
    %v923 = vunpack.c.l.b16 %v402
    %v924 = vunpack.c.h.b16 %v402
    %v925 = vunpack.c.l.b16 %v403
    %v926 = vunpack.c.h.b16 %v403
    %v927 = vunpack.c.l.b16 %v404
    %v928 = vunpack.c.h.b16 %v404
    %v929 = vunpack.c.l.b16 %v405
    %v930 = vunpack.c.h.b16 %v405
    %v931 = vunpack.c.l.b16 %v406
    %v932 = vunpack.c.h.b16 %v406
    %v933 = vunpack.c.l.b16 %v407
    %v934 = vunpack.c.h.b16 %v407
    %v935 = vunpack.c.l.b16 %v408
    %v936 = vunpack.c.h.b16 %v408
    %v937 = vunpack.c.l.b16 %v409
    %v938 = vunpack.c.h.b16 %v409
    %v939 = vunpack.c.l.b16 %v410
    %v940 = vunpack.c.h.b16 %v410
    %v941 = vunpack.c.l.b16 %v411
    %v942 = vunpack.c.h.b16 %v411
    %v943 = vunpack.c.l.b16 %v412
    %v944 = vunpack.c.h.b16 %v412
    %v945 = vunpack.c.l.b16 %v413
    %v946 = vunpack.c.h.b16 %v413
    %v947 = vunpack.c.l.b16 %v414
    %v948 = vunpack.c.h.b16 %v414
    %v949 = vunpack.c.l.b16 %v415
    %v950 = vunpack.c.h.b16 %v415
    %v951 = vunpack.c.l.b16 %v416
    %v952 = vunpack.c.h.b16 %v416
    %v953 = vunpack.c.l.b16 %v417
    %v954 = vunpack.c.h.b16 %v417
    %v955 = vunpack.c.l.b16 %v418
    %v956 = vunpack.c.h.b16 %v418
    %v957 = vunpack.c.l.b16 %v419
    %v958 = vunpack.c.h.b16 %v419
    %v959 = vunpack.c.l.b16 %v420
    %v960 = vunpack.c.h.b16 %v420
    %v961 = vunpack.c.l.b16 %v421
    %v962 = vunpack.c.h.b16 %v421
    %v963 = vunpack.c.l.b16 %v422
    %v964 = vunpack.c.h.b16 %v422
    %v965 = vunpack.c.l.b16 %v423
    %v966 = vunpack.c.h.b16 %v423
    %v967 = vunpack.c.l.b16 %v424
    %v968 = vunpack.c.h.b16 %v424
    %v969 = vunpack.c.l.b16 %v425
    %v970 = vunpack.c.h.b16 %v425
    %v971 = vunpack.c.l.b16 %v426
    %v972 = vunpack.c.h.b16 %v426
    %v973 = vunpack.c.l.b16 %v427
    %v974 = vunpack.c.h.b16 %v427
    %v975 = vunpack.c.l.b16 %v428
    %v976 = vunpack.c.h.b16 %v428
    %v977 = vunpack.c.l.b16 %v429
    %v978 = vunpack.c.h.b16 %v429
    %v979 = vunpack.c.l.b16 %v430
    %v980 = vunpack.c.h.b16 %v430
    %v981 = vunpack.c.l.b16 %v431
    %v982 = vunpack.c.h.b16 %v431
    %v983 = vunpack.c.l.b16 %v432
    %v984 = vunpack.c.h.b16 %v432
    %v985 = vunpack.c.l.b16 %v433
    %v986 = vunpack.c.h.b16 %v433
    %v987 = vunpack.c.l.b16 %v434
    %v988 = vunpack.c.h.b16 %v434
    %v989 = vunpack.c.l.b16 %v435
    %v990 = vunpack.c.h.b16 %v435
    %v991 = vunpack.c.l.b16 %v436
    %v992 = vunpack.c.h.b16 %v436
    %v993 = vunpack.c.l.b16 %v437
    %v994 = vunpack.c.h.b16 %v437
    %v995 = vunpack.c.l.b16 %v438
    %v996 = vunpack.c.h.b16 %v438
    %v997 = vunpack.c.l.b16 %v439
    %v998 = vunpack.c.h.b16 %v439
    %v999 = vunpack.c.l.b16 %v440
    %v1000 = vunpack.c.h.b16 %v440
    %v1001 = vunpack.c.l.b16 %v441
    %v1002 = vunpack.c.h.b16 %v441
    %v1003 = vunpack.c.l.b16 %v442
    %v1004 = vunpack.c.h.b16 %v442
    %v1005 = vunpack.c.l.b16 %v443
    %v1006 = vunpack.c.h.b16 %v443
    %v1007 = vunpack.c.l.b16 %v444
    %v1008 = vunpack.c.h.b16 %v444
    %v1009 = vunpack.c.l.b16 %v445
    %v1010 = vunpack.c.h.b16 %v445
    %v1011 = vunpack.c.l.b16 %v446
    %v1012 = vunpack.c.h.b16 %v446
    %v1013 = vunpack.c.l.b16 %v447
    %v1014 = vunpack.c.h.b16 %v447
    %v1015 = vunpack.c.l.b16 %v448
    %v1016 = vunpack.c.h.b16 %v448
    %v1017 = vunpack.c.l.b16 %v449
    %v1018 = vunpack.c.h.b16 %v449
    %v1019 = vunpack.c.l.b16 %v450
    %v1020 = vunpack.c.h.b16 %v450
    %v1021 = vunpack.c.l.b16 %v451
    %v1022 = vunpack.c.h.b16 %v451
    %v1023 = vunpack.c.l.b16 %v452
    %v1024 = vunpack.c.h.b16 %v452
    %v1025 = vunpack.c.l.b16 %v453
    %v1026 = vunpack.c.h.b16 %v453
    %v1027 = vunpack.c.l.b16 %v454
    %v1028 = vunpack.c.h.b16 %v454
    %v1029 = vunpack.c.l.b16 %v455
    %v1030 = vunpack.c.h.b16 %v455
    %v1031 = vunpack.c.l.b16 %v456
    %v1032 = vunpack.c.h.b16 %v456
    %v1033 = vunpack.c.l.b16 %v457
    %v1034 = vunpack.c.h.b16 %v457
    %v1035 = vunpack.c.l.b16 %v458
    %v1036 = vunpack.c.h.b16 %v458
    %v1037 = vunpack.c.l.b16 %v459
    %v1038 = vunpack.c.h.b16 %v459
    %v1039 = vunpack.c.l.b16 %v460
    %v1040 = vunpack.c.h.b16 %v460
    %v1041 = vunpack.c.l.b16 %v461
    %v1042 = vunpack.c.h.b16 %v461
    %v1043 = vunpack.c.l.b16 %v462
    %v1044 = vunpack.c.h.b16 %v462
    %v1045 = vunpack.c.l.b16 %v463
    %v1046 = vunpack.c.h.b16 %v463
    %v1047 = vunpack.c.l.b16 %v464
    %v1048 = vunpack.c.h.b16 %v464
    %v1049 = vunpack.c.l.b16 %v465
    %v1050 = vunpack.c.h.b16 %v465
    %v1051 = vunpack.c.l.b16 %v466
    %v1052 = vunpack.c.h.b16 %v466
    %v1053 = vunpack.c.l.b16 %v467
    %v1054 = vunpack.c.h.b16 %v467
    %v1055 = vunpack.c.l.b16 %v468
    %v1056 = vunpack.c.h.b16 %v468
    %v1057 = vunpack.c.l.b16 %v469
    %v1058 = vunpack.c.h.b16 %v469
    %v1059 = vunpack.c.l.b16 %v470
    %v1060 = vunpack.c.h.b16 %v470
    %v1061 = vunpack.c.l.b16 %v471
    %v1062 = vunpack.c.h.b16 %v471
    %v1063 = vunpack.c.l.b16 %v472
    %v1064 = vunpack.c.h.b16 %v472
    %v1065 = vunpack.c.l.b16 %v473
    %v1066 = vunpack.c.h.b16 %v473
    %v1067 = vunpack.c.l.b16 %v474
    %v1068 = vunpack.c.h.b16 %v474
    %v1069 = vunpack.c.l.b16 %v475
    %v1070 = vunpack.c.h.b16 %v475
    %v1071 = vunpack.c.l.b16 %v476
    %v1072 = vunpack.c.h.b16 %v476
    %v1073 = vunpack.c.l.b16 %v477
    %v1074 = vunpack.c.h.b16 %v477
    %v1075 = vunpack.c.l.b16 %v478
    %v1076 = vunpack.c.h.b16 %v478
    %v1077 = vunpack.c.l.b16 %v479
    %v1078 = vunpack.c.h.b16 %v479
    %v1079 = vunpack.c.l.b16 %v480
    %v1080 = vunpack.c.h.b16 %v480
    %v1081 = vunpack.c.l.b16 %v481
    %v1082 = vunpack.c.h.b16 %v481
    %v1083 = vunpack.c.l.b16 %v482
    %v1084 = vunpack.c.h.b16 %v482
    %v1085 = vunpack.c.l.b16 %v483
    %v1086 = vunpack.c.h.b16 %v483
    %v1087 = vunpack.c.l.b16 %v484
    %v1088 = vunpack.c.h.b16 %v484
    %v1089 = vunpack.c.l.b16 %v485
    %v1090 = vunpack.c.h.b16 %v485
    %v1091 = vunpack.c.l.b16 %v486
    %v1092 = vunpack.c.h.b16 %v486
    %v1093 = vunpack.c.l.b16 %v487
    %v1094 = vunpack.c.h.b16 %v487
    %v1095 = vunpack.c.l.b16 %v488
    %v1096 = vunpack.c.h.b16 %v488
    %v1097 = vunpack.c.l.b16 %v489
    %v1098 = vunpack.c.h.b16 %v489
    %v1099 = vunpack.c.l.b16 %v490
    %v1100 = vunpack.c.h.b16 %v490
    %v1101 = vunpack.c.l.b16 %v491
    %v1102 = vunpack.c.h.b16 %v491
    %v1103 = vunpack.c.l.b16 %v492
    %v1104 = vunpack.c.h.b16 %v492
    %v1105 = vunpack.c.l.b16 %v493
    %v1106 = vunpack.c.h.b16 %v493
    %v1107 = vunpack.c.l.b16 %v494
    %v1108 = vunpack.c.h.b16 %v494
    %v1109 = vunpack.c.l.b16 %v495
    %v1110 = vunpack.c.h.b16 %v495
    %v1111 = vunpack.c.l.b16 %v496
    %v1112 = vunpack.c.h.b16 %v496
    %v1113 = vunpack.c.l.b16 %v497
    %v1114 = vunpack.c.h.b16 %v497
    %v1115 = vunpack.c.l.b16 %v498
    %v1116 = vunpack.c.h.b16 %v498
    %v1117 = vunpack.c.l.b16 %v499
    %v1118 = vunpack.c.h.b16 %v499
    %v1119 = vunpack.c.l.b16 %v500
    %v1120 = vunpack.c.h.b16 %v500
    %v1121 = vunpack.c.l.b16 %v501
    %v1122 = vunpack.c.h.b16 %v501
    %v1123 = vunpack.c.l.b16 %v502
    %v1124 = vunpack.c.h.b16 %v502
    %v1125 = vunpack.c.l.b16 %v503
    %v1126 = vunpack.c.h.b16 %v503
    %v1127 = vunpack.c.l.b16 %v504
    %v1128 = vunpack.c.h.b16 %v504
    %v1129 = vunpack.c.l.b16 %v505
    %v1130 = vunpack.c.h.b16 %v505
    %v1131 = vunpack.c.l.b16 %v506
    %v1132 = vunpack.c.h.b16 %v506
    %v1133 = vunpack.c.l.b16 %v507
    %v1134 = vunpack.c.h.b16 %v507
    %v1135 = vunpack.c.l.b16 %v508
    %v1136 = vunpack.c.h.b16 %v508
    %v1137 = vunpack.c.l.b16 %v509
    %v1138 = vunpack.c.h.b16 %v509
    %v1139 = vunpack.c.l.b16 %v510
    %v1140 = vunpack.c.h.b16 %v510
    %v1141 = vunpack.c.l.b16 %v511
    %v1142 = vunpack.c.h.b16 %v511
    %v1143 = vunpack.c.l.b16 %v512
    %v1144 = vunpack.c.h.b16 %v512
    %v1145 = vunpack.c.l.b16 %v513
    %v1146 = vunpack.c.h.b16 %v513
    %v1147 = vunpack.c.l.b16 %v514
    %v1148 = vunpack.c.h.b16 %v514
    %v1149 = vunpack.c.l.b16 %v515
    %v1150 = vunpack.c.h.b16 %v515
    %v1151 = vunpack.c.l.b16 %v516
    %v1152 = vunpack.c.h.b16 %v516
    %v1153 = vunpack.c.l.b16 %v517
    %v1154 = vunpack.c.h.b16 %v517
    %v1155 = vunpack.c.l.b16 %v518
    %v1156 = vunpack.c.h.b16 %v518
    %v1157 = vunpack.c.l.b16 %v519
    %v1158 = vunpack.c.h.b16 %v519
    %v1159 = vunpack.c.l.b16 %v520
    %v1160 = vunpack.c.h.b16 %v520
    %v1161 = vunpack.c.l.b16 %v521
    %v1162 = vunpack.c.h.b16 %v521
    %v1163 = vunpack.c.l.b16 %v522
    %v1164 = vunpack.c.h.b16 %v522
    %v1165 = vunpack.c.l.b16 %v523
    %v1166 = vunpack.c.h.b16 %v523
    %v1167 = vunpack.c.l.b16 %v524
    %v1168 = vunpack.c.h.b16 %v524
    %v1169 = vunpack.c.l.b16 %v525
    %v1170 = vunpack.c.h.b16 %v525
    %v1171 = vunpack.c.l.b16 %v526
    %v1172 = vunpack.c.h.b16 %v526
    %v1173 = vunpack.c.l.b16 %v527
    %v1174 = vunpack.c.h.b16 %v527
    %v1175 = vunpack.c.l.b16 %v528
    %v1176 = vunpack.c.h.b16 %v528
    %v1177 = vunpack.c.l.b16 %v529
    %v1178 = vunpack.c.h.b16 %v529
    %v1179 = vunpack.c.l.b16 %v530
    %v1180 = vunpack.c.h.b16 %v530
    %v1181 = vunpack.c.l.b16 %v531
    %v1182 = vunpack.c.h.b16 %v531
    %v1183 = vunpack.c.l.b16 %v532
    %v1184 = vunpack.c.h.b16 %v532
    %v1185 = vunpack.c.l.b16 %v533
    %v1186 = vunpack.c.h.b16 %v533
    %v1187 = vunpack.c.l.b16 %v534
    %v1188 = vunpack.c.h.b16 %v534
    %v1189 = vunpack.c.l.b16 %v535
    %v1190 = vunpack.c.h.b16 %v535
    %v1191 = vunpack.c.l.b16 %v536
    %v1192 = vunpack.c.h.b16 %v536
    %v1193 = vunpack.c.l.b16 %v537
    %v1194 = vunpack.c.h.b16 %v537
    %v1195 = vunpack.c.l.b16 %v538
    %v1196 = vunpack.c.h.b16 %v538
    %v1197 = vunpack.c.l.b16 %v539
    %v1198 = vunpack.c.h.b16 %v539
    %v1199 = vunpack.c.l.b16 %v540
    %v1200 = vunpack.c.h.b16 %v540
    %v1201 = vunpack.c.l.b16 %v541
    %v1202 = vunpack.c.h.b16 %v541
    %v1203 = vunpack.c.l.b16 %v542
    %v1204 = vunpack.c.h.b16 %v542
    %v1205 = vunpack.c.l.b16 %v543
    %v1206 = vunpack.c.h.b16 %v543
    %v1207 = vunpack.c.l.b16 %v544
    %v1208 = vunpack.c.h.b16 %v544
    %v1209 = vunpack.c.l.b16 %v545
    %v1210 = vunpack.c.h.b16 %v545
    %v1211 = vunpack.c.l.b16 %v546
    %v1212 = vunpack.c.h.b16 %v546
    %v1213 = vunpack.c.l.b16 %v547
    %v1214 = vunpack.c.h.b16 %v547
    %v1215 = vunpack.c.l.b16 %v548
    %v1216 = vunpack.c.h.b16 %v548
    %v1217 = vunpack.c.l.b16 %v549
    %v1218 = vunpack.c.h.b16 %v549
    %v1219 = vunpack.c.l.b16 %v550
    %v1220 = vunpack.c.h.b16 %v550
    %v1221 = vunpack.c.l.b16 %v551
    %v1222 = vunpack.c.h.b16 %v551
    %v1223 = vunpack.c.l.b16 %v552
    %v1224 = vunpack.c.h.b16 %v552
    %v1225 = vunpack.c.l.b16 %v553
    %v1226 = vunpack.c.h.b16 %v553
    %v1227 = vunpack.c.l.b16 %v554
    %v1228 = vunpack.c.h.b16 %v554
    %v1229 = vunpack.c.l.b16 %v555
    %v1230 = vunpack.c.h.b16 %v555
    %v1231 = vunpack.c.l.b16 %v556
    %v1232 = vunpack.c.h.b16 %v556
    %v1233 = vunpack.c.l.b16 %v557
    %v1234 = vunpack.c.h.b16 %v557
    %v1235 = vunpack.c.l.b16 %v558
    %v1236 = vunpack.c.h.b16 %v558
    %v1237 = vunpack.c.l.b16 %v559
    %v1238 = vunpack.c.h.b16 %v559
    %v1239 = vunpack.c.l.b16 %v560
    %v1240 = vunpack.c.h.b16 %v560
    %v1241 = vunpack.c.l.b16 %v561
    %v1242 = vunpack.c.h.b16 %v561
    %v1243 = vunpack.c.l.b16 %v562
    %v1244 = vunpack.c.h.b16 %v562
    %v1245 = vunpack.c.l.b16 %v563
    %v1246 = vunpack.c.h.b16 %v563
    %v1247 = vunpack.c.l.b16 %v564
    %v1248 = vunpack.c.h.b16 %v564
    %v1249 = vunpack.c.l.b16 %v565
    %v1250 = vunpack.c.h.b16 %v565
    %v1251 = vunpack.c.l.b16 %v566
    %v1252 = vunpack.c.h.b16 %v566
    %v1253 = vunpack.c.l.b16 %v567
    %v1254 = vunpack.c.h.b16 %v567
    %v1255 = vunpack.c.l.b16 %v568
    %v1256 = vunpack.c.h.b16 %v568
    %v1257 = vunpack.c.l.b16 %v569
    %v1258 = vunpack.c.h.b16 %v569
    %v1259 = vunpack.c.l.b16 %v570
    %v1260 = vunpack.c.h.b16 %v570
    %v1261 = vunpack.c.l.b16 %v571
    %v1262 = vunpack.c.h.b16 %v571
    %v1263 = vunpack.c.l.b16 %v572
    %v1264 = vunpack.c.h.b16 %v572
    %v1265 = vunpack.c.l.b16 %v573
    %v1266 = vunpack.c.h.b16 %v573
    %v1267 = vunpack.c.l.b16 %v574
    %v1268 = vunpack.c.h.b16 %v574
    %v1269 = vunpack.c.l.b16 %v575
    %v1270 = vunpack.c.h.b16 %v575
    %v1271 = vunpack.c.l.b16 %v576
    %v1272 = vunpack.c.h.b16 %v576
    %v1273 = vpack.c.b16 %v893, %v889
    %v1274 = vpack.c.b16 %v894, %v890
    %v1275 = vpack.c.b16 %v895, %v891
    %v1276 = vpack.c.b16 %v896, %v892
    %v1277 = vpack.c.b16 %v901, %v897
    %v1278 = vpack.c.b16 %v902, %v898
    %v1279 = vpack.c.b16 %v903, %v899
    %v1280 = vpack.c.b16 %v904, %v900
    %v1281 = vpack.c.b16 %v909, %v905
    %v1282 = vpack.c.b16 %v910, %v906
    %v1283 = vpack.c.b16 %v911, %v907
    %v1284 = vpack.c.b16 %v912, %v908
    %v1285 = vpack.c.b16 %v917, %v913
    %v1286 = vpack.c.b16 %v918, %v914
    %v1287 = vpack.c.b16 %v919, %v915
    %v1288 = vpack.c.b16 %v920, %v916
    %v1289 = vpack.c.b16 %v925, %v921
    %v1290 = vpack.c.b16 %v926, %v922
    %v1291 = vpack.c.b16 %v927, %v923
    %v1292 = vpack.c.b16 %v928, %v924
    %v1293 = vpack.c.b16 %v933, %v929
    %v1294 = vpack.c.b16 %v934, %v930
    %v1295 = vpack.c.b16 %v935, %v931
    %v1296 = vpack.c.b16 %v936, %v932
    %v1297 = vpack.c.b16 %v941, %v937
    %v1298 = vpack.c.b16 %v942, %v938
    %v1299 = vpack.c.b16 %v943, %v939
    %v1300 = vpack.c.b16 %v944, %v940
    %v1301 = vpack.c.b16 %v949, %v945
    %v1302 = vpack.c.b16 %v950, %v946
    %v1303 = vpack.c.b16 %v951, %v947
    %v1304 = vpack.c.b16 %v952, %v948
    %v1305 = vpack.c.b16 %v957, %v953
    %v1306 = vpack.c.b16 %v958, %v954
    %v1307 = vpack.c.b16 %v959, %v955
    %v1308 = vpack.c.b16 %v960, %v956
    %v1309 = vpack.c.b16 %v965, %v961
    %v1310 = vpack.c.b16 %v966, %v962
    %v1311 = vpack.c.b16 %v967, %v963
    %v1312 = vpack.c.b16 %v968, %v964
    %v1313 = vpack.c.b16 %v973, %v969
    %v1314 = vpack.c.b16 %v974, %v970
    %v1315 = vpack.c.b16 %v975, %v971
    %v1316 = vpack.c.b16 %v976, %v972
    %v1317 = vpack.c.b16 %v981, %v977
    %v1318 = vpack.c.b16 %v982, %v978
    %v1319 = vpack.c.b16 %v983, %v979
    %v1320 = vpack.c.b16 %v984, %v980
    %v1321 = vpack.c.b16 %v989, %v985
    %v1322 = vpack.c.b16 %v990, %v986
    %v1323 = vpack.c.b16 %v991, %v987
    %v1324 = vpack.c.b16 %v992, %v988
    %v1325 = vpack.c.b16 %v997, %v993
    %v1326 = vpack.c.b16 %v998, %v994
    %v1327 = vpack.c.b16 %v999, %v995
    %v1328 = vpack.c.b16 %v1000, %v996
    %v1329 = vpack.c.b16 %v1005, %v1001
    %v1330 = vpack.c.b16 %v1006, %v1002
    %v1331 = vpack.c.b16 %v1007, %v1003
    %v1332 = vpack.c.b16 %v1008, %v1004
    %v1333 = vpack.c.b16 %v1013, %v1009
    %v1334 = vpack.c.b16 %v1014, %v1010
    %v1335 = vpack.c.b16 %v1015, %v1011
    %v1336 = vpack.c.b16 %v1016, %v1012
    %v1337 = vpack.c.b16 %v1021, %v1017
    %v1338 = vpack.c.b16 %v1022, %v1018
    %v1339 = vpack.c.b16 %v1023, %v1019
    %v1340 = vpack.c.b16 %v1024, %v1020
    %v1341 = vpack.c.b16 %v1029, %v1025
    %v1342 = vpack.c.b16 %v1030, %v1026
    %v1343 = vpack.c.b16 %v1031, %v1027
    %v1344 = vpack.c.b16 %v1032, %v1028
    %v1345 = vpack.c.b16 %v1037, %v1033
    %v1346 = vpack.c.b16 %v1038, %v1034
    %v1347 = vpack.c.b16 %v1039, %v1035
    %v1348 = vpack.c.b16 %v1040, %v1036
    %v1349 = vpack.c.b16 %v1045, %v1041
    %v1350 = vpack.c.b16 %v1046, %v1042
    %v1351 = vpack.c.b16 %v1047, %v1043
    %v1352 = vpack.c.b16 %v1048, %v1044
    %v1353 = vpack.c.b16 %v1053, %v1049
    %v1354 = vpack.c.b16 %v1054, %v1050
    %v1355 = vpack.c.b16 %v1055, %v1051
    %v1356 = vpack.c.b16 %v1056, %v1052
    %v1357 = vpack.c.b16 %v1061, %v1057
    %v1358 = vpack.c.b16 %v1062, %v1058
    %v1359 = vpack.c.b16 %v1063, %v1059
    %v1360 = vpack.c.b16 %v1064, %v1060
    %v1361 = vpack.c.b16 %v1069, %v1065
    %v1362 = vpack.c.b16 %v1070, %v1066
    %v1363 = vpack.c.b16 %v1071, %v1067
    %v1364 = vpack.c.b16 %v1072, %v1068
    %v1365 = vpack.c.b16 %v1077, %v1073
    %v1366 = vpack.c.b16 %v1078, %v1074
    %v1367 = vpack.c.b16 %v1079, %v1075
    %v1368 = vpack.c.b16 %v1080, %v1076
    %v1369 = vpack.c.b16 %v1085, %v1081
    %v1370 = vpack.c.b16 %v1086, %v1082
    %v1371 = vpack.c.b16 %v1087, %v1083
    %v1372 = vpack.c.b16 %v1088, %v1084
    %v1373 = vpack.c.b16 %v1093, %v1089
    %v1374 = vpack.c.b16 %v1094, %v1090
    %v1375 = vpack.c.b16 %v1095, %v1091
    %v1376 = vpack.c.b16 %v1096, %v1092
    %v1377 = vpack.c.b16 %v1101, %v1097
    %v1378 = vpack.c.b16 %v1102, %v1098
    %v1379 = vpack.c.b16 %v1103, %v1099
    %v1380 = vpack.c.b16 %v1104, %v1100
    %v1381 = vpack.c.b16 %v1109, %v1105
    %v1382 = vpack.c.b16 %v1110, %v1106
    %v1383 = vpack.c.b16 %v1111, %v1107
    %v1384 = vpack.c.b16 %v1112, %v1108
    %v1385 = vpack.c.b16 %v1117, %v1113
    %v1386 = vpack.c.b16 %v1118, %v1114
    %v1387 = vpack.c.b16 %v1119, %v1115
    %v1388 = vpack.c.b16 %v1120, %v1116
    %v1389 = vpack.c.b16 %v1125, %v1121
    %v1390 = vpack.c.b16 %v1126, %v1122
    %v1391 = vpack.c.b16 %v1127, %v1123
    %v1392 = vpack.c.b16 %v1128, %v1124
    %v1393 = vpack.c.b16 %v1133, %v1129
    %v1394 = vpack.c.b16 %v1134, %v1130
    %v1395 = vpack.c.b16 %v1135, %v1131
    %v1396 = vpack.c.b16 %v1136, %v1132
    %v1397 = vpack.c.b16 %v1141, %v1137
    %v1398 = vpack.c.b16 %v1142, %v1138
    %v1399 = vpack.c.b16 %v1143, %v1139
    %v1400 = vpack.c.b16 %v1144, %v1140
    %v1401 = vpack.c.b16 %v1149, %v1145
    %v1402 = vpack.c.b16 %v1150, %v1146
    %v1403 = vpack.c.b16 %v1151, %v1147
    %v1404 = vpack.c.b16 %v1152, %v1148
    %v1405 = vpack.c.b16 %v1157, %v1153
    %v1406 = vpack.c.b16 %v1158, %v1154
    %v1407 = vpack.c.b16 %v1159, %v1155
    %v1408 = vpack.c.b16 %v1160, %v1156
    %v1409 = vpack.c.b16 %v1165, %v1161
    %v1410 = vpack.c.b16 %v1166, %v1162
    %v1411 = vpack.c.b16 %v1167, %v1163
    %v1412 = vpack.c.b16 %v1168, %v1164
    %v1413 = vpack.c.b16 %v1173, %v1169
    %v1414 = vpack.c.b16 %v1174, %v1170
    %v1415 = vpack.c.b16 %v1175, %v1171
    %v1416 = vpack.c.b16 %v1176, %v1172
    %v1417 = vpack.c.b16 %v1181, %v1177
    %v1418 = vpack.c.b16 %v1182, %v1178
    %v1419 = vpack.c.b16 %v1183, %v1179
    %v1420 = vpack.c.b16 %v1184, %v1180
    %v1421 = vpack.c.b16 %v1189, %v1185
    %v1422 = vpack.c.b16 %v1190, %v1186
    %v1423 = vpack.c.b16 %v1191, %v1187
    %v1424 = vpack.c.b16 %v1192, %v1188
    %v1425 = vpack.c.b16 %v1197, %v1193
    %v1426 = vpack.c.b16 %v1198, %v1194
    %v1427 = vpack.c.b16 %v1199, %v1195
    %v1428 = vpack.c.b16 %v1200, %v1196
    %v1429 = vpack.c.b16 %v1205, %v1201
    %v1430 = vpack.c.b16 %v1206, %v1202
    %v1431 = vpack.c.b16 %v1207, %v1203
    %v1432 = vpack.c.b16 %v1208, %v1204
    %v1433 = vpack.c.b16 %v1213, %v1209
    %v1434 = vpack.c.b16 %v1214, %v1210
    %v1435 = vpack.c.b16 %v1215, %v1211
    %v1436 = vpack.c.b16 %v1216, %v1212
    %v1437 = vpack.c.b16 %v1221, %v1217
    %v1438 = vpack.c.b16 %v1222, %v1218
    %v1439 = vpack.c.b16 %v1223, %v1219
    %v1440 = vpack.c.b16 %v1224, %v1220
    %v1441 = vpack.c.b16 %v1229, %v1225
    %v1442 = vpack.c.b16 %v1230, %v1226
    %v1443 = vpack.c.b16 %v1231, %v1227
    %v1444 = vpack.c.b16 %v1232, %v1228
    %v1445 = vpack.c.b16 %v1237, %v1233
    %v1446 = vpack.c.b16 %v1238, %v1234
    %v1447 = vpack.c.b16 %v1239, %v1235
    %v1448 = vpack.c.b16 %v1240, %v1236
    %v1449 = vpack.c.b16 %v1245, %v1241
    %v1450 = vpack.c.b16 %v1246, %v1242
    %v1451 = vpack.c.b16 %v1247, %v1243
    %v1452 = vpack.c.b16 %v1248, %v1244
    %v1453 = vpack.c.b16 %v1253, %v1249
    %v1454 = vpack.c.b16 %v1254, %v1250
    %v1455 = vpack.c.b16 %v1255, %v1251
    %v1456 = vpack.c.b16 %v1256, %v1252
    %v1457 = vpack.c.b16 %v1261, %v1257
    %v1458 = vpack.c.b16 %v1262, %v1258
    %v1459 = vpack.c.b16 %v1263, %v1259
    %v1460 = vpack.c.b16 %v1264, %v1260
    %v1461 = vpack.c.b16 %v1269, %v1265
    %v1462 = vpack.c.b16 %v1270, %v1266
    %v1463 = vpack.c.b16 %v1271, %v1267
    %v1464 = vpack.c.b16 %v1272, %v1268
    %1657 = vmatpush.bf16.msra.mxu0 %v1301
    %1658 = vmatpush.bf16.msra.mxu0 %v1297
    %1659 = vmatpush.bf16.msra.mxu0 %v1293
    %1660 = vmatpush.bf16.msra.mxu0 %v1289
    %1661 = vmatpush.bf16.msra.mxu0 %v1285
    %1662 = vmatpush.bf16.msra.mxu0 %v1281
    %1663 = vmatpush.bf16.msra.mxu0 %v1277
    %1664 = vmatpush.bf16.msra.mxu0 %v1273
    %1665 = vmatmul.bf16.gmra.mxu0 %v649
    %v1666 = vpop.f32.mrf.mxu0
    %v1667 = vadd.f32 0.0, %v1666
    %v1668 = vpop.f32.mrf.mxu0
    %v1669 = vadd.f32 0.0, %v1668
    %1670 = vmatmul.bf16.gmra.mxu0 %v655
    %v1671 = vpop.f32.mrf.mxu0
    %v1672 = vadd.f32 0.0, %v1671
    %v1673 = vpop.f32.mrf.mxu0
    %v1674 = vadd.f32 0.0, %v1673
    %1675 = vmatmul.bf16.gmra.mxu0 %v661
    %v1676 = vpop.f32.mrf.mxu0
    %v1677 = vadd.f32 0.0, %v1676
    %v1678 = vpop.f32.mrf.mxu0
    %v1679 = vadd.f32 0.0, %v1678
    %1680 = vmatmul.bf16.gmra.mxu0 %v667
    %v1681 = vpop.f32.mrf.mxu0
    %v1682 = vadd.f32 0.0, %v1681
    %v1683 = vpop.f32.mrf.mxu0
    %v1684 = vadd.f32 0.0, %v1683
    %1685 = vdwg.mxu0
    %1686 = vmatpush.bf16.msra.mxu0 %v1333
    %1687 = vmatpush.bf16.msra.mxu0 %v1329
    %1688 = vmatpush.bf16.msra.mxu0 %v1325
    %1689 = vmatpush.bf16.msra.mxu0 %v1321
    %1690 = vmatpush.bf16.msra.mxu0 %v1317
    %1691 = vmatpush.bf16.msra.mxu0 %v1313
    %1692 = vmatpush.bf16.msra.mxu0 %v1309
    %1693 = vmatpush.bf16.msra.mxu0 %v1305
    %1694 = vmatmul.bf16.gmra.mxu0 %v650
    %v1695 = vpop.f32.mrf.mxu0
    %v1696 = vadd.f32 %v1667, %v1695
    %v1697 = vpop.f32.mrf.mxu0
    %v1698 = vadd.f32 %v1669, %v1697
    %1699 = vmatmul.bf16.gmra.mxu0 %v656
    %v1700 = vpop.f32.mrf.mxu0
    %v1701 = vadd.f32 %v1672, %v1700
    %v1702 = vpop.f32.mrf.mxu0
    %v1703 = vadd.f32 %v1674, %v1702
    %1704 = vmatmul.bf16.gmra.mxu0 %v662
    %v1705 = vpop.f32.mrf.mxu0
    %v1706 = vadd.f32 %v1677, %v1705
    %v1707 = vpop.f32.mrf.mxu0
    %v1708 = vadd.f32 %v1679, %v1707
    %1709 = vmatmul.bf16.gmra.mxu0 %v668
    %v1710 = vpop.f32.mrf.mxu0
    %v1711 = vadd.f32 %v1682, %v1710
    %v1712 = vpop.f32.mrf.mxu0
    %v1713 = vadd.f32 %v1684, %v1712
    %1714 = vdwg.mxu0
    %1715 = vmatpush.bf16.msra.mxu0 %v1365
    %1716 = vmatpush.bf16.msra.mxu0 %v1361
    %1717 = vmatpush.bf16.msra.mxu0 %v1357
    %1718 = vmatpush.bf16.msra.mxu0 %v1353
    %1719 = vmatpush.bf16.msra.mxu0 %v1349
    %1720 = vmatpush.bf16.msra.mxu0 %v1345
    %1721 = vmatpush.bf16.msra.mxu0 %v1341
    %1722 = vmatpush.bf16.msra.mxu0 %v1337
    %1723 = vmatmul.bf16.gmra.mxu0 %v651
    %v1724 = vpop.f32.mrf.mxu0
    %v1725 = vadd.f32 %v1696, %v1724
    %v1726 = vpop.f32.mrf.mxu0
    %v1727 = vadd.f32 %v1698, %v1726
    %1728 = vmatmul.bf16.gmra.mxu0 %v657
    %v1729 = vpop.f32.mrf.mxu0
    %v1730 = vadd.f32 %v1701, %v1729
    %v1731 = vpop.f32.mrf.mxu0
    %v1732 = vadd.f32 %v1703, %v1731
    %1733 = vmatmul.bf16.gmra.mxu0 %v663
    %v1734 = vpop.f32.mrf.mxu0
    %v1735 = vadd.f32 %v1706, %v1734
    %v1736 = vpop.f32.mrf.mxu0
    %v1737 = vadd.f32 %v1708, %v1736
    %1738 = vmatmul.bf16.gmra.mxu0 %v669
    %v1739 = vpop.f32.mrf.mxu0
    %v1740 = vadd.f32 %v1711, %v1739
    %v1741 = vpop.f32.mrf.mxu0
    %v1742 = vadd.f32 %v1713, %v1741
    %1743 = vdwg.mxu0
    %1744 = vmatpush.bf16.msra.mxu0 %v1397
    %1745 = vmatpush.bf16.msra.mxu0 %v1393
    %1746 = vmatpush.bf16.msra.mxu0 %v1389
    %1747 = vmatpush.bf16.msra.mxu0 %v1385
    %1748 = vmatpush.bf16.msra.mxu0 %v1381
    %1749 = vmatpush.bf16.msra.mxu0 %v1377
    %1750 = vmatpush.bf16.msra.mxu0 %v1373
    %1751 = vmatpush.bf16.msra.mxu0 %v1369
    %1752 = vmatmul.bf16.gmra.mxu0 %v652
    %v1753 = vpop.f32.mrf.mxu0
    %v1754 = vadd.f32 %v1725, %v1753
    %v1755 = vpop.f32.mrf.mxu0
    %v1756 = vadd.f32 %v1727, %v1755
    %1757 = vmatmul.bf16.gmra.mxu0 %v658
    %v1758 = vpop.f32.mrf.mxu0
    %v1759 = vadd.f32 %v1730, %v1758
    %v1760 = vpop.f32.mrf.mxu0
    %v1761 = vadd.f32 %v1732, %v1760
    %1762 = vmatmul.bf16.gmra.mxu0 %v664
    %v1763 = vpop.f32.mrf.mxu0
    %v1764 = vadd.f32 %v1735, %v1763
    %v1765 = vpop.f32.mrf.mxu0
    %v1766 = vadd.f32 %v1737, %v1765
    %1767 = vmatmul.bf16.gmra.mxu0 %v670
    %v1768 = vpop.f32.mrf.mxu0
    %v1769 = vadd.f32 %v1740, %v1768
    %v1770 = vpop.f32.mrf.mxu0
    %v1771 = vadd.f32 %v1742, %v1770
    %1772 = vdwg.mxu0
    %1773 = vmatpush.bf16.msra.mxu0 %v1429
    %1774 = vmatpush.bf16.msra.mxu0 %v1425
    %1775 = vmatpush.bf16.msra.mxu0 %v1421
    %1776 = vmatpush.bf16.msra.mxu0 %v1417
    %1777 = vmatpush.bf16.msra.mxu0 %v1413
    %1778 = vmatpush.bf16.msra.mxu0 %v1409
    %1779 = vmatpush.bf16.msra.mxu0 %v1405
    %1780 = vmatpush.bf16.msra.mxu0 %v1401
    %1781 = vmatmul.bf16.gmra.mxu0 %v653
    %v1782 = vpop.f32.mrf.mxu0
    %v1783 = vadd.f32 %v1754, %v1782
    %v1784 = vpop.f32.mrf.mxu0
    %v1785 = vadd.f32 %v1756, %v1784
    %1786 = vmatmul.bf16.gmra.mxu0 %v659
    %v1787 = vpop.f32.mrf.mxu0
    %v1788 = vadd.f32 %v1759, %v1787
    %v1789 = vpop.f32.mrf.mxu0
    %v1790 = vadd.f32 %v1761, %v1789
    %1791 = vmatmul.bf16.gmra.mxu0 %v665
    %v1792 = vpop.f32.mrf.mxu0
    %v1793 = vadd.f32 %v1764, %v1792
    %v1794 = vpop.f32.mrf.mxu0
    %v1795 = vadd.f32 %v1766, %v1794
    %1796 = vmatmul.bf16.gmra.mxu0 %v671
    %v1797 = vpop.f32.mrf.mxu0
    %v1798 = vadd.f32 %v1769, %v1797
    %v1799 = vpop.f32.mrf.mxu0
    %v1800 = vadd.f32 %v1771, %v1799
    %1801 = vdwg.mxu0
    %1802 = vmatpush.bf16.msra.mxu0 %v1461
    %1803 = vmatpush.bf16.msra.mxu0 %v1457
    %1804 = vmatpush.bf16.msra.mxu0 %v1453
    %1805 = vmatpush.bf16.msra.mxu0 %v1449
    %1806 = vmatpush.bf16.msra.mxu0 %v1445
    %1807 = vmatpush.bf16.msra.mxu0 %v1441
    %1808 = vmatpush.bf16.msra.mxu0 %v1437
    %1809 = vmatpush.bf16.msra.mxu0 %v1433
    %1810 = vmatmul.bf16.gmra.mxu0 %v654
    %v1811 = vpop.f32.mrf.mxu0
    %v1812 = vadd.f32 %v1783, %v1811
    %v1813 = vpop.f32.mrf.mxu0
    %v1814 = vadd.f32 %v1785, %v1813
    %1815 = vmatmul.bf16.gmra.mxu0 %v660
    %v1816 = vpop.f32.mrf.mxu0
    %v1817 = vadd.f32 %v1788, %v1816
    %v1818 = vpop.f32.mrf.mxu0
    %v1819 = vadd.f32 %v1790, %v1818
    %1820 = vmatmul.bf16.gmra.mxu0 %v666
    %v1821 = vpop.f32.mrf.mxu0
    %v1822 = vadd.f32 %v1793, %v1821
    %v1823 = vpop.f32.mrf.mxu0
    %v1824 = vadd.f32 %v1795, %v1823
    %1825 = vmatmul.bf16.gmra.mxu0 %v672
    %v1826 = vpop.f32.mrf.mxu0
    %v1827 = vadd.f32 %v1798, %v1826
    %v1828 = vpop.f32.mrf.mxu0
    %v1829 = vadd.f32 %v1800, %v1828
    %1830 = vdwg.mxu0
    %1831 = vmatpush.bf16.msra.mxu0 %v1302
    %1832 = vmatpush.bf16.msra.mxu0 %v1298
    %1833 = vmatpush.bf16.msra.mxu0 %v1294
    %1834 = vmatpush.bf16.msra.mxu0 %v1290
    %1835 = vmatpush.bf16.msra.mxu0 %v1286
    %1836 = vmatpush.bf16.msra.mxu0 %v1282
    %1837 = vmatpush.bf16.msra.mxu0 %v1278
    %1838 = vmatpush.bf16.msra.mxu0 %v1274
    %1839 = vmatmul.bf16.gmra.mxu0 %v649
    %v1840 = vpop.f32.mrf.mxu0
    %v1841 = vadd.f32 0.0, %v1840
    %v1842 = vpop.f32.mrf.mxu0
    %v1843 = vadd.f32 0.0, %v1842
    %1844 = vmatmul.bf16.gmra.mxu0 %v655
    %v1845 = vpop.f32.mrf.mxu0
    %v1846 = vadd.f32 0.0, %v1845
    %v1847 = vpop.f32.mrf.mxu0
    %v1848 = vadd.f32 0.0, %v1847
    %1849 = vmatmul.bf16.gmra.mxu0 %v661
    %v1850 = vpop.f32.mrf.mxu0
    %v1851 = vadd.f32 0.0, %v1850
    %v1852 = vpop.f32.mrf.mxu0
    %v1853 = vadd.f32 0.0, %v1852
    %1854 = vmatmul.bf16.gmra.mxu0 %v667
    %v1855 = vpop.f32.mrf.mxu0
    %v1856 = vadd.f32 0.0, %v1855
    %v1857 = vpop.f32.mrf.mxu0
    %v1858 = vadd.f32 0.0, %v1857
    %1859 = vdwg.mxu0
    %1860 = vmatpush.bf16.msra.mxu0 %v1334
    %1861 = vmatpush.bf16.msra.mxu0 %v1330
    %1862 = vmatpush.bf16.msra.mxu0 %v1326
    %1863 = vmatpush.bf16.msra.mxu0 %v1322
    %1864 = vmatpush.bf16.msra.mxu0 %v1318
    %1865 = vmatpush.bf16.msra.mxu0 %v1314
    %1866 = vmatpush.bf16.msra.mxu0 %v1310
    %1867 = vmatpush.bf16.msra.mxu0 %v1306
    %1868 = vmatmul.bf16.gmra.mxu0 %v650
    %v1869 = vpop.f32.mrf.mxu0
    %v1870 = vadd.f32 %v1841, %v1869
    %v1871 = vpop.f32.mrf.mxu0
    %v1872 = vadd.f32 %v1843, %v1871
    %1873 = vmatmul.bf16.gmra.mxu0 %v656
    %v1874 = vpop.f32.mrf.mxu0
    %v1875 = vadd.f32 %v1846, %v1874
    %v1876 = vpop.f32.mrf.mxu0
    %v1877 = vadd.f32 %v1848, %v1876
    %1878 = vmatmul.bf16.gmra.mxu0 %v662
    %v1879 = vpop.f32.mrf.mxu0
    %v1880 = vadd.f32 %v1851, %v1879
    %v1881 = vpop.f32.mrf.mxu0
    %v1882 = vadd.f32 %v1853, %v1881
    %1883 = vmatmul.bf16.gmra.mxu0 %v668
    %v1884 = vpop.f32.mrf.mxu0
    %v1885 = vadd.f32 %v1856, %v1884
    %v1886 = vpop.f32.mrf.mxu0
    %v1887 = vadd.f32 %v1858, %v1886
    %1888 = vdwg.mxu0
    %1889 = vmatpush.bf16.msra.mxu0 %v1366
    %1890 = vmatpush.bf16.msra.mxu0 %v1362
    %1891 = vmatpush.bf16.msra.mxu0 %v1358
    %1892 = vmatpush.bf16.msra.mxu0 %v1354
    %1893 = vmatpush.bf16.msra.mxu0 %v1350
    %1894 = vmatpush.bf16.msra.mxu0 %v1346
    %1895 = vmatpush.bf16.msra.mxu0 %v1342
    %1896 = vmatpush.bf16.msra.mxu0 %v1338
    %1897 = vmatmul.bf16.gmra.mxu0 %v651
    %v1898 = vpop.f32.mrf.mxu0
    %v1899 = vadd.f32 %v1870, %v1898
    %v1900 = vpop.f32.mrf.mxu0
    %v1901 = vadd.f32 %v1872, %v1900
    %1902 = vmatmul.bf16.gmra.mxu0 %v657
    %v1903 = vpop.f32.mrf.mxu0
    %v1904 = vadd.f32 %v1875, %v1903
    %v1905 = vpop.f32.mrf.mxu0
    %v1906 = vadd.f32 %v1877, %v1905
    %1907 = vmatmul.bf16.gmra.mxu0 %v663
    %v1908 = vpop.f32.mrf.mxu0
    %v1909 = vadd.f32 %v1880, %v1908
    %v1910 = vpop.f32.mrf.mxu0
    %v1911 = vadd.f32 %v1882, %v1910
    %1912 = vmatmul.bf16.gmra.mxu0 %v669
    %v1913 = vpop.f32.mrf.mxu0
    %v1914 = vadd.f32 %v1885, %v1913
    %v1915 = vpop.f32.mrf.mxu0
    %v1916 = vadd.f32 %v1887, %v1915
    %1917 = vdwg.mxu0
    %1918 = vmatpush.bf16.msra.mxu0 %v1398
    %1919 = vmatpush.bf16.msra.mxu0 %v1394
    %1920 = vmatpush.bf16.msra.mxu0 %v1390
    %1921 = vmatpush.bf16.msra.mxu0 %v1386
    %1922 = vmatpush.bf16.msra.mxu0 %v1382
    %1923 = vmatpush.bf16.msra.mxu0 %v1378
    %1924 = vmatpush.bf16.msra.mxu0 %v1374
    %1925 = vmatpush.bf16.msra.mxu0 %v1370
    %1926 = vmatmul.bf16.gmra.mxu0 %v652
    %v1927 = vpop.f32.mrf.mxu0
    %v1928 = vadd.f32 %v1899, %v1927
    %v1929 = vpop.f32.mrf.mxu0
    %v1930 = vadd.f32 %v1901, %v1929
    %1931 = vmatmul.bf16.gmra.mxu0 %v658
    %v1932 = vpop.f32.mrf.mxu0
    %v1933 = vadd.f32 %v1904, %v1932
    %v1934 = vpop.f32.mrf.mxu0
    %v1935 = vadd.f32 %v1906, %v1934
    %1936 = vmatmul.bf16.gmra.mxu0 %v664
    %v1937 = vpop.f32.mrf.mxu0
    %v1938 = vadd.f32 %v1909, %v1937
    %v1939 = vpop.f32.mrf.mxu0
    %v1940 = vadd.f32 %v1911, %v1939
    %1941 = vmatmul.bf16.gmra.mxu0 %v670
    %v1942 = vpop.f32.mrf.mxu0
    %v1943 = vadd.f32 %v1914, %v1942
    %v1944 = vpop.f32.mrf.mxu0
    %v1945 = vadd.f32 %v1916, %v1944
    %1946 = vdwg.mxu0
    %1947 = vmatpush.bf16.msra.mxu0 %v1430
    %1948 = vmatpush.bf16.msra.mxu0 %v1426
    %1949 = vmatpush.bf16.msra.mxu0 %v1422
    %1950 = vmatpush.bf16.msra.mxu0 %v1418
    %1951 = vmatpush.bf16.msra.mxu0 %v1414
    %1952 = vmatpush.bf16.msra.mxu0 %v1410
    %1953 = vmatpush.bf16.msra.mxu0 %v1406
    %1954 = vmatpush.bf16.msra.mxu0 %v1402
    %1955 = vmatmul.bf16.gmra.mxu0 %v653
    %v1956 = vpop.f32.mrf.mxu0
    %v1957 = vadd.f32 %v1928, %v1956
    %v1958 = vpop.f32.mrf.mxu0
    %v1959 = vadd.f32 %v1930, %v1958
    %1960 = vmatmul.bf16.gmra.mxu0 %v659
    %v1961 = vpop.f32.mrf.mxu0
    %v1962 = vadd.f32 %v1933, %v1961
    %v1963 = vpop.f32.mrf.mxu0
    %v1964 = vadd.f32 %v1935, %v1963
    %1965 = vmatmul.bf16.gmra.mxu0 %v665
    %v1966 = vpop.f32.mrf.mxu0
    %v1967 = vadd.f32 %v1938, %v1966
    %v1968 = vpop.f32.mrf.mxu0
    %v1969 = vadd.f32 %v1940, %v1968
    %1970 = vmatmul.bf16.gmra.mxu0 %v671
    %v1971 = vpop.f32.mrf.mxu0
    %v1972 = vadd.f32 %v1943, %v1971
    %v1973 = vpop.f32.mrf.mxu0
    %v1974 = vadd.f32 %v1945, %v1973
    %1975 = vdwg.mxu0
    %1976 = vmatpush.bf16.msra.mxu0 %v1462
    %1977 = vmatpush.bf16.msra.mxu0 %v1458
    %1978 = vmatpush.bf16.msra.mxu0 %v1454
    %1979 = vmatpush.bf16.msra.mxu0 %v1450
    %1980 = vmatpush.bf16.msra.mxu0 %v1446
    %1981 = vmatpush.bf16.msra.mxu0 %v1442
    %1982 = vmatpush.bf16.msra.mxu0 %v1438
    %1983 = vmatpush.bf16.msra.mxu0 %v1434
    %1984 = vmatmul.bf16.gmra.mxu0 %v654
    %v1985 = vpop.f32.mrf.mxu0
    %v1986 = vadd.f32 %v1957, %v1985
    %v1987 = vpop.f32.mrf.mxu0
    %v1988 = vadd.f32 %v1959, %v1987
    %1989 = vmatmul.bf16.gmra.mxu0 %v660
    %v1990 = vpop.f32.mrf.mxu0
    %v1991 = vadd.f32 %v1962, %v1990
    %v1992 = vpop.f32.mrf.mxu0
    %v1993 = vadd.f32 %v1964, %v1992
    %1994 = vmatmul.bf16.gmra.mxu0 %v666
    %v1995 = vpop.f32.mrf.mxu0
    %v1996 = vadd.f32 %v1967, %v1995
    %v1997 = vpop.f32.mrf.mxu0
    %v1998 = vadd.f32 %v1969, %v1997
    %1999 = vmatmul.bf16.gmra.mxu0 %v672
    %v2000 = vpop.f32.mrf.mxu0
    %v2001 = vadd.f32 %v1972, %v2000
    %v2002 = vpop.f32.mrf.mxu0
    %v2003 = vadd.f32 %v1974, %v2002
    %2004 = vdwg.mxu0
    %2005 = vmatpush.bf16.msra.mxu0 %v1303
    %2006 = vmatpush.bf16.msra.mxu0 %v1299
    %2007 = vmatpush.bf16.msra.mxu0 %v1295
    %2008 = vmatpush.bf16.msra.mxu0 %v1291
    %2009 = vmatpush.bf16.msra.mxu0 %v1287
    %2010 = vmatpush.bf16.msra.mxu0 %v1283
    %2011 = vmatpush.bf16.msra.mxu0 %v1279
    %2012 = vmatpush.bf16.msra.mxu0 %v1275
    %2013 = vmatmul.bf16.gmra.mxu0 %v649
    %v2014 = vpop.f32.mrf.mxu0
    %v2015 = vadd.f32 0.0, %v2014
    %v2016 = vpop.f32.mrf.mxu0
    %v2017 = vadd.f32 0.0, %v2016
    %2018 = vmatmul.bf16.gmra.mxu0 %v655
    %v2019 = vpop.f32.mrf.mxu0
    %v2020 = vadd.f32 0.0, %v2019
    %v2021 = vpop.f32.mrf.mxu0
    %v2022 = vadd.f32 0.0, %v2021
    %2023 = vmatmul.bf16.gmra.mxu0 %v661
    %v2024 = vpop.f32.mrf.mxu0
    %v2025 = vadd.f32 0.0, %v2024
    %v2026 = vpop.f32.mrf.mxu0
    %v2027 = vadd.f32 0.0, %v2026
    %2028 = vmatmul.bf16.gmra.mxu0 %v667
    %v2029 = vpop.f32.mrf.mxu0
    %v2030 = vadd.f32 0.0, %v2029
    %v2031 = vpop.f32.mrf.mxu0
    %v2032 = vadd.f32 0.0, %v2031
    %2033 = vdwg.mxu0
    %2034 = vmatpush.bf16.msra.mxu0 %v1335
    %2035 = vmatpush.bf16.msra.mxu0 %v1331
    %2036 = vmatpush.bf16.msra.mxu0 %v1327
    %2037 = vmatpush.bf16.msra.mxu0 %v1323
    %2038 = vmatpush.bf16.msra.mxu0 %v1319
    %2039 = vmatpush.bf16.msra.mxu0 %v1315
    %2040 = vmatpush.bf16.msra.mxu0 %v1311
    %2041 = vmatpush.bf16.msra.mxu0 %v1307
    %2042 = vmatmul.bf16.gmra.mxu0 %v650
    %v2043 = vpop.f32.mrf.mxu0
    %v2044 = vadd.f32 %v2015, %v2043
    %v2045 = vpop.f32.mrf.mxu0
    %v2046 = vadd.f32 %v2017, %v2045
    %2047 = vmatmul.bf16.gmra.mxu0 %v656
    %v2048 = vpop.f32.mrf.mxu0
    %v2049 = vadd.f32 %v2020, %v2048
    %v2050 = vpop.f32.mrf.mxu0
    %v2051 = vadd.f32 %v2022, %v2050
    %2052 = vmatmul.bf16.gmra.mxu0 %v662
    %v2053 = vpop.f32.mrf.mxu0
    %v2054 = vadd.f32 %v2025, %v2053
    %v2055 = vpop.f32.mrf.mxu0
    %v2056 = vadd.f32 %v2027, %v2055
    %2057 = vmatmul.bf16.gmra.mxu0 %v668
    %v2058 = vpop.f32.mrf.mxu0
    %v2059 = vadd.f32 %v2030, %v2058
    %v2060 = vpop.f32.mrf.mxu0
    %v2061 = vadd.f32 %v2032, %v2060
    %2062 = vdwg.mxu0
    %2063 = vmatpush.bf16.msra.mxu0 %v1367
    %2064 = vmatpush.bf16.msra.mxu0 %v1363
    %2065 = vmatpush.bf16.msra.mxu0 %v1359
    %2066 = vmatpush.bf16.msra.mxu0 %v1355
    %2067 = vmatpush.bf16.msra.mxu0 %v1351
    %2068 = vmatpush.bf16.msra.mxu0 %v1347
    %2069 = vmatpush.bf16.msra.mxu0 %v1343
    %2070 = vmatpush.bf16.msra.mxu0 %v1339
    %2071 = vmatmul.bf16.gmra.mxu0 %v651
    %v2072 = vpop.f32.mrf.mxu0
    %v2073 = vadd.f32 %v2044, %v2072
    %v2074 = vpop.f32.mrf.mxu0
    %v2075 = vadd.f32 %v2046, %v2074
    %2076 = vmatmul.bf16.gmra.mxu0 %v657
    %v2077 = vpop.f32.mrf.mxu0
    %v2078 = vadd.f32 %v2049, %v2077
    %v2079 = vpop.f32.mrf.mxu0
    %v2080 = vadd.f32 %v2051, %v2079
    %2081 = vmatmul.bf16.gmra.mxu0 %v663
    %v2082 = vpop.f32.mrf.mxu0
    %v2083 = vadd.f32 %v2054, %v2082
    %v2084 = vpop.f32.mrf.mxu0
    %v2085 = vadd.f32 %v2056, %v2084
    %2086 = vmatmul.bf16.gmra.mxu0 %v669
    %v2087 = vpop.f32.mrf.mxu0
    %v2088 = vadd.f32 %v2059, %v2087
    %v2089 = vpop.f32.mrf.mxu0
    %v2090 = vadd.f32 %v2061, %v2089
    %2091 = vdwg.mxu0
    %2092 = vmatpush.bf16.msra.mxu0 %v1399
    %2093 = vmatpush.bf16.msra.mxu0 %v1395
    %2094 = vmatpush.bf16.msra.mxu0 %v1391
    %2095 = vmatpush.bf16.msra.mxu0 %v1387
    %2096 = vmatpush.bf16.msra.mxu0 %v1383
    %2097 = vmatpush.bf16.msra.mxu0 %v1379
    %2098 = vmatpush.bf16.msra.mxu0 %v1375
    %2099 = vmatpush.bf16.msra.mxu0 %v1371
    %2100 = vmatmul.bf16.gmra.mxu0 %v652
    %v2101 = vpop.f32.mrf.mxu0
    %v2102 = vadd.f32 %v2073, %v2101
    %v2103 = vpop.f32.mrf.mxu0
    %v2104 = vadd.f32 %v2075, %v2103
    %2105 = vmatmul.bf16.gmra.mxu0 %v658
    %v2106 = vpop.f32.mrf.mxu0
    %v2107 = vadd.f32 %v2078, %v2106
    %v2108 = vpop.f32.mrf.mxu0
    %v2109 = vadd.f32 %v2080, %v2108
    %2110 = vmatmul.bf16.gmra.mxu0 %v664
    %v2111 = vpop.f32.mrf.mxu0
    %v2112 = vadd.f32 %v2083, %v2111
    %v2113 = vpop.f32.mrf.mxu0
    %v2114 = vadd.f32 %v2085, %v2113
    %2115 = vmatmul.bf16.gmra.mxu0 %v670
    %v2116 = vpop.f32.mrf.mxu0
    %v2117 = vadd.f32 %v2088, %v2116
    %v2118 = vpop.f32.mrf.mxu0
    %v2119 = vadd.f32 %v2090, %v2118
    %2120 = vdwg.mxu0
    %2121 = vmatpush.bf16.msra.mxu0 %v1431
    %2122 = vmatpush.bf16.msra.mxu0 %v1427
    %2123 = vmatpush.bf16.msra.mxu0 %v1423
    %2124 = vmatpush.bf16.msra.mxu0 %v1419
    %2125 = vmatpush.bf16.msra.mxu0 %v1415
    %2126 = vmatpush.bf16.msra.mxu0 %v1411
    %2127 = vmatpush.bf16.msra.mxu0 %v1407
    %2128 = vmatpush.bf16.msra.mxu0 %v1403
    %2129 = vmatmul.bf16.gmra.mxu0 %v653
    %v2130 = vpop.f32.mrf.mxu0
    %v2131 = vadd.f32 %v2102, %v2130
    %v2132 = vpop.f32.mrf.mxu0
    %v2133 = vadd.f32 %v2104, %v2132
    %2134 = vmatmul.bf16.gmra.mxu0 %v659
    %v2135 = vpop.f32.mrf.mxu0
    %v2136 = vadd.f32 %v2107, %v2135
    %v2137 = vpop.f32.mrf.mxu0
    %v2138 = vadd.f32 %v2109, %v2137
    %2139 = vmatmul.bf16.gmra.mxu0 %v665
    %v2140 = vpop.f32.mrf.mxu0
    %v2141 = vadd.f32 %v2112, %v2140
    %v2142 = vpop.f32.mrf.mxu0
    %v2143 = vadd.f32 %v2114, %v2142
    %2144 = vmatmul.bf16.gmra.mxu0 %v671
    %v2145 = vpop.f32.mrf.mxu0
    %v2146 = vadd.f32 %v2117, %v2145
    %v2147 = vpop.f32.mrf.mxu0
    %v2148 = vadd.f32 %v2119, %v2147
    %2149 = vdwg.mxu0
    %2150 = vmatpush.bf16.msra.mxu0 %v1463
    %2151 = vmatpush.bf16.msra.mxu0 %v1459
    %2152 = vmatpush.bf16.msra.mxu0 %v1455
    %2153 = vmatpush.bf16.msra.mxu0 %v1451
    %2154 = vmatpush.bf16.msra.mxu0 %v1447
    %2155 = vmatpush.bf16.msra.mxu0 %v1443
    %2156 = vmatpush.bf16.msra.mxu0 %v1439
    %2157 = vmatpush.bf16.msra.mxu0 %v1435
    %2158 = vmatmul.bf16.gmra.mxu0 %v654
    %v2159 = vpop.f32.mrf.mxu0
    %v2160 = vadd.f32 %v2131, %v2159
    %v2161 = vpop.f32.mrf.mxu0
    %v2162 = vadd.f32 %v2133, %v2161
    %2163 = vmatmul.bf16.gmra.mxu0 %v660
    %v2164 = vpop.f32.mrf.mxu0
    %v2165 = vadd.f32 %v2136, %v2164
    %v2166 = vpop.f32.mrf.mxu0
    %v2167 = vadd.f32 %v2138, %v2166
    %2168 = vmatmul.bf16.gmra.mxu0 %v666
    %v2169 = vpop.f32.mrf.mxu0
    %v2170 = vadd.f32 %v2141, %v2169
    %v2171 = vpop.f32.mrf.mxu0
    %v2172 = vadd.f32 %v2143, %v2171
    %2173 = vmatmul.bf16.gmra.mxu0 %v672
    %v2174 = vpop.f32.mrf.mxu0
    %v2175 = vadd.f32 %v2146, %v2174
    %v2176 = vpop.f32.mrf.mxu0
    %v2177 = vadd.f32 %v2148, %v2176
    %2178 = vdwg.mxu0
    %2179 = vmatpush.bf16.msra.mxu0 %v1304
    %2180 = vmatpush.bf16.msra.mxu0 %v1300
    %2181 = vmatpush.bf16.msra.mxu0 %v1296
    %2182 = vmatpush.bf16.msra.mxu0 %v1292
    %2183 = vmatpush.bf16.msra.mxu0 %v1288
    %2184 = vmatpush.bf16.msra.mxu0 %v1284
    %2185 = vmatpush.bf16.msra.mxu0 %v1280
    %2186 = vmatpush.bf16.msra.mxu0 %v1276
    %2187 = vmatmul.bf16.gmra.mxu0 %v649
    %v2188 = vpop.f32.mrf.mxu0
    %v2189 = vadd.f32 0.0, %v2188
    %v2190 = vpop.f32.mrf.mxu0
    %v2191 = vadd.f32 0.0, %v2190
    %2192 = vmatmul.bf16.gmra.mxu0 %v655
    %v2193 = vpop.f32.mrf.mxu0
    %v2194 = vadd.f32 0.0, %v2193
    %v2195 = vpop.f32.mrf.mxu0
    %v2196 = vadd.f32 0.0, %v2195
    %2197 = vmatmul.bf16.gmra.mxu0 %v661
    %v2198 = vpop.f32.mrf.mxu0
    %v2199 = vadd.f32 0.0, %v2198
    %v2200 = vpop.f32.mrf.mxu0
    %v2201 = vadd.f32 0.0, %v2200
    %2202 = vmatmul.bf16.gmra.mxu0 %v667
    %v2203 = vpop.f32.mrf.mxu0
    %v2204 = vadd.f32 0.0, %v2203
    %v2205 = vpop.f32.mrf.mxu0
    %v2206 = vadd.f32 0.0, %v2205
    %2207 = vdwg.mxu0
    %2208 = vmatpush.bf16.msra.mxu0 %v1336
    %2209 = vmatpush.bf16.msra.mxu0 %v1332
    %2210 = vmatpush.bf16.msra.mxu0 %v1328
    %2211 = vmatpush.bf16.msra.mxu0 %v1324
    %2212 = vmatpush.bf16.msra.mxu0 %v1320
    %2213 = vmatpush.bf16.msra.mxu0 %v1316
    %2214 = vmatpush.bf16.msra.mxu0 %v1312
    %2215 = vmatpush.bf16.msra.mxu0 %v1308
    %2216 = vmatmul.bf16.gmra.mxu0 %v650
    %v2217 = vpop.f32.mrf.mxu0
    %v2218 = vadd.f32 %v2189, %v2217
    %v2219 = vpop.f32.mrf.mxu0
    %v2220 = vadd.f32 %v2191, %v2219
    %2221 = vmatmul.bf16.gmra.mxu0 %v656
    %v2222 = vpop.f32.mrf.mxu0
    %v2223 = vadd.f32 %v2194, %v2222
    %v2224 = vpop.f32.mrf.mxu0
    %v2225 = vadd.f32 %v2196, %v2224
    %2226 = vmatmul.bf16.gmra.mxu0 %v662
    %v2227 = vpop.f32.mrf.mxu0
    %v2228 = vadd.f32 %v2199, %v2227
    %v2229 = vpop.f32.mrf.mxu0
    %v2230 = vadd.f32 %v2201, %v2229
    %2231 = vmatmul.bf16.gmra.mxu0 %v668
    %v2232 = vpop.f32.mrf.mxu0
    %v2233 = vadd.f32 %v2204, %v2232
    %v2234 = vpop.f32.mrf.mxu0
    %v2235 = vadd.f32 %v2206, %v2234
    %2236 = vdwg.mxu0
    %2237 = vmatpush.bf16.msra.mxu0 %v1368
    %2238 = vmatpush.bf16.msra.mxu0 %v1364
    %2239 = vmatpush.bf16.msra.mxu0 %v1360
    %2240 = vmatpush.bf16.msra.mxu0 %v1356
    %2241 = vmatpush.bf16.msra.mxu0 %v1352
    %2242 = vmatpush.bf16.msra.mxu0 %v1348
    %2243 = vmatpush.bf16.msra.mxu0 %v1344
    %2244 = vmatpush.bf16.msra.mxu0 %v1340
    %2245 = vmatmul.bf16.gmra.mxu0 %v651
    %v2246 = vpop.f32.mrf.mxu0
    %v2247 = vadd.f32 %v2218, %v2246
    %v2248 = vpop.f32.mrf.mxu0
    %v2249 = vadd.f32 %v2220, %v2248
    %2250 = vmatmul.bf16.gmra.mxu0 %v657
    %v2251 = vpop.f32.mrf.mxu0
    %v2252 = vadd.f32 %v2223, %v2251
    %v2253 = vpop.f32.mrf.mxu0
    %v2254 = vadd.f32 %v2225, %v2253
    %2255 = vmatmul.bf16.gmra.mxu0 %v663
    %v2256 = vpop.f32.mrf.mxu0
    %v2257 = vadd.f32 %v2228, %v2256
    %v2258 = vpop.f32.mrf.mxu0
    %v2259 = vadd.f32 %v2230, %v2258
    %2260 = vmatmul.bf16.gmra.mxu0 %v669
    %v2261 = vpop.f32.mrf.mxu0
    %v2262 = vadd.f32 %v2233, %v2261
    %v2263 = vpop.f32.mrf.mxu0
    %v2264 = vadd.f32 %v2235, %v2263
    %2265 = vdwg.mxu0
    %2266 = vmatpush.bf16.msra.mxu0 %v1400
    %2267 = vmatpush.bf16.msra.mxu0 %v1396
    %2268 = vmatpush.bf16.msra.mxu0 %v1392
    %2269 = vmatpush.bf16.msra.mxu0 %v1388
    %2270 = vmatpush.bf16.msra.mxu0 %v1384
    %2271 = vmatpush.bf16.msra.mxu0 %v1380
    %2272 = vmatpush.bf16.msra.mxu0 %v1376
    %2273 = vmatpush.bf16.msra.mxu0 %v1372
    %2274 = vmatmul.bf16.gmra.mxu0 %v652
    %v2275 = vpop.f32.mrf.mxu0
    %v2276 = vadd.f32 %v2247, %v2275
    %v2277 = vpop.f32.mrf.mxu0
    %v2278 = vadd.f32 %v2249, %v2277
    %2279 = vmatmul.bf16.gmra.mxu0 %v658
    %v2280 = vpop.f32.mrf.mxu0
    %v2281 = vadd.f32 %v2252, %v2280
    %v2282 = vpop.f32.mrf.mxu0
    %v2283 = vadd.f32 %v2254, %v2282
    %2284 = vmatmul.bf16.gmra.mxu0 %v664
    %v2285 = vpop.f32.mrf.mxu0
    %v2286 = vadd.f32 %v2257, %v2285
    %v2287 = vpop.f32.mrf.mxu0
    %v2288 = vadd.f32 %v2259, %v2287
    %2289 = vmatmul.bf16.gmra.mxu0 %v670
    %v2290 = vpop.f32.mrf.mxu0
    %v2291 = vadd.f32 %v2262, %v2290
    %v2292 = vpop.f32.mrf.mxu0
    %v2293 = vadd.f32 %v2264, %v2292
    %2294 = vdwg.mxu0
    %2295 = vmatpush.bf16.msra.mxu0 %v1432
    %2296 = vmatpush.bf16.msra.mxu0 %v1428
    %2297 = vmatpush.bf16.msra.mxu0 %v1424
    %2298 = vmatpush.bf16.msra.mxu0 %v1420
    %2299 = vmatpush.bf16.msra.mxu0 %v1416
    %2300 = vmatpush.bf16.msra.mxu0 %v1412
    %2301 = vmatpush.bf16.msra.mxu0 %v1408
    %2302 = vmatpush.bf16.msra.mxu0 %v1404
    %2303 = vmatmul.bf16.gmra.mxu0 %v653
    %v2304 = vpop.f32.mrf.mxu0
    %v2305 = vadd.f32 %v2276, %v2304
    %v2306 = vpop.f32.mrf.mxu0
    %v2307 = vadd.f32 %v2278, %v2306
    %2308 = vmatmul.bf16.gmra.mxu0 %v659
    %v2309 = vpop.f32.mrf.mxu0
    %v2310 = vadd.f32 %v2281, %v2309
    %v2311 = vpop.f32.mrf.mxu0
    %v2312 = vadd.f32 %v2283, %v2311
    %2313 = vmatmul.bf16.gmra.mxu0 %v665
    %v2314 = vpop.f32.mrf.mxu0
    %v2315 = vadd.f32 %v2286, %v2314
    %v2316 = vpop.f32.mrf.mxu0
    %v2317 = vadd.f32 %v2288, %v2316
    %2318 = vmatmul.bf16.gmra.mxu0 %v671
    %v2319 = vpop.f32.mrf.mxu0
    %v2320 = vadd.f32 %v2291, %v2319
    %v2321 = vpop.f32.mrf.mxu0
    %v2322 = vadd.f32 %v2293, %v2321
    %2323 = vdwg.mxu0
    %2324 = vmatpush.bf16.msra.mxu0 %v1464
    %2325 = vmatpush.bf16.msra.mxu0 %v1460
    %2326 = vmatpush.bf16.msra.mxu0 %v1456
    %2327 = vmatpush.bf16.msra.mxu0 %v1452
    %2328 = vmatpush.bf16.msra.mxu0 %v1448
    %2329 = vmatpush.bf16.msra.mxu0 %v1444
    %2330 = vmatpush.bf16.msra.mxu0 %v1440
    %2331 = vmatpush.bf16.msra.mxu0 %v1436
    %2332 = vmatmul.bf16.gmra.mxu0 %v654
    %v2333 = vpop.f32.mrf.mxu0
    %v2334 = vadd.f32 %v2305, %v2333
    %v2335 = vpop.f32.mrf.mxu0
    %v2336 = vadd.f32 %v2307, %v2335
    %2337 = vmatmul.bf16.gmra.mxu0 %v660
    %v2338 = vpop.f32.mrf.mxu0
    %v2339 = vadd.f32 %v2310, %v2338
    %v2340 = vpop.f32.mrf.mxu0
    %v2341 = vadd.f32 %v2312, %v2340
    %2342 = vmatmul.bf16.gmra.mxu0 %v666
    %v2343 = vpop.f32.mrf.mxu0
    %v2344 = vadd.f32 %v2315, %v2343
    %v2345 = vpop.f32.mrf.mxu0
    %v2346 = vadd.f32 %v2317, %v2345
    %2347 = vmatmul.bf16.gmra.mxu0 %v672
    %v2348 = vpop.f32.mrf.mxu0
    %v2349 = vadd.f32 %v2320, %v2348
    %v2350 = vpop.f32.mrf.mxu0
    %v2351 = vadd.f32 %v2322, %v2350
    %2352 = vdwg.mxu0
    %v2377 = vunpack.c.l.b16 %v145
    %v2378 = vunpack.c.h.b16 %v145
    %v2379 = vunpack.c.l.b16 %v146
    %v2380 = vunpack.c.h.b16 %v146
    %v2381 = vunpack.c.l.b16 %v147
    %v2382 = vunpack.c.h.b16 %v147
    %v2383 = vunpack.c.l.b16 %v148
    %v2384 = vunpack.c.h.b16 %v148
    %v2385 = vunpack.c.l.b16 %v149
    %v2386 = vunpack.c.h.b16 %v149
    %v2387 = vunpack.c.l.b16 %v150
    %v2388 = vunpack.c.h.b16 %v150
    %v2389 = vunpack.c.l.b16 %v151
    %v2390 = vunpack.c.h.b16 %v151
    %v2391 = vunpack.c.l.b16 %v152
    %v2392 = vunpack.c.h.b16 %v152
    %v2393 = vunpack.c.l.b16 %v153
    %v2394 = vunpack.c.h.b16 %v153
    %v2395 = vunpack.c.l.b16 %v154
    %v2396 = vunpack.c.h.b16 %v154
    %v2397 = vunpack.c.l.b16 %v155
    %v2398 = vunpack.c.h.b16 %v155
    %v2399 = vunpack.c.l.b16 %v156
    %v2400 = vunpack.c.h.b16 %v156
    %v2401 = vunpack.c.l.b16 %v157
    %v2402 = vunpack.c.h.b16 %v157
    %v2403 = vunpack.c.l.b16 %v158
    %v2404 = vunpack.c.h.b16 %v158
    %v2405 = vunpack.c.l.b16 %v159
    %v2406 = vunpack.c.h.b16 %v159
    %v2407 = vunpack.c.l.b16 %v160
    %v2408 = vunpack.c.h.b16 %v160
    %v2409 = vunpack.c.l.b16 %v161
    %v2410 = vunpack.c.h.b16 %v161
    %v2411 = vunpack.c.l.b16 %v162
    %v2412 = vunpack.c.h.b16 %v162
    %v2413 = vunpack.c.l.b16 %v163
    %v2414 = vunpack.c.h.b16 %v163
    %v2415 = vunpack.c.l.b16 %v164
    %v2416 = vunpack.c.h.b16 %v164
    %v2417 = vunpack.c.l.b16 %v165
    %v2418 = vunpack.c.h.b16 %v165
    %v2419 = vunpack.c.l.b16 %v166
    %v2420 = vunpack.c.h.b16 %v166
    %v2421 = vunpack.c.l.b16 %v167
    %v2422 = vunpack.c.h.b16 %v167
    %v2423 = vunpack.c.l.b16 %v168
    %v2424 = vunpack.c.h.b16 %v168
    %v2425 = vpack.c.b16 %v2383, %v2377
    %v2426 = vpack.c.b16 %v2384, %v2378
    %v2427 = vpack.c.b16 %v2385, %v2379
    %v2428 = vpack.c.b16 %v2386, %v2380
    %v2429 = vpack.c.b16 %v2387, %v2381
    %v2430 = vpack.c.b16 %v2388, %v2382
    %v2431 = vpack.c.b16 %v2395, %v2389
    %v2432 = vpack.c.b16 %v2396, %v2390
    %v2433 = vpack.c.b16 %v2397, %v2391
    %v2434 = vpack.c.b16 %v2398, %v2392
    %v2435 = vpack.c.b16 %v2399, %v2393
    %v2436 = vpack.c.b16 %v2400, %v2394
    %v2437 = vpack.c.b16 %v2407, %v2401
    %v2438 = vpack.c.b16 %v2408, %v2402
    %v2439 = vpack.c.b16 %v2409, %v2403
    %v2440 = vpack.c.b16 %v2410, %v2404
    %v2441 = vpack.c.b16 %v2411, %v2405
    %v2442 = vpack.c.b16 %v2412, %v2406
    %v2443 = vpack.c.b16 %v2419, %v2413
    %v2444 = vpack.c.b16 %v2420, %v2414
    %v2445 = vpack.c.b16 %v2421, %v2415
    %v2446 = vpack.c.b16 %v2422, %v2416
    %v2447 = vpack.c.b16 %v2423, %v2417
    %v2448 = vpack.c.b16 %v2424, %v2418
    %v2665 = vunpack.c.l.b16 %v193
    %v2666 = vunpack.c.h.b16 %v193
    %v2667 = vunpack.c.l.b16 %v194
    %v2668 = vunpack.c.h.b16 %v194
    %v2669 = vunpack.c.l.b16 %v195
    %v2670 = vunpack.c.h.b16 %v195
    %v2671 = vunpack.c.l.b16 %v196
    %v2672 = vunpack.c.h.b16 %v196
    %v2673 = vunpack.c.l.b16 %v197
    %v2674 = vunpack.c.h.b16 %v197
    %v2675 = vunpack.c.l.b16 %v198
    %v2676 = vunpack.c.h.b16 %v198
    %v2677 = vunpack.c.l.b16 %v199
    %v2678 = vunpack.c.h.b16 %v199
    %v2679 = vunpack.c.l.b16 %v200
    %v2680 = vunpack.c.h.b16 %v200
    %v2681 = vunpack.c.l.b16 %v201
    %v2682 = vunpack.c.h.b16 %v201
    %v2683 = vunpack.c.l.b16 %v202
    %v2684 = vunpack.c.h.b16 %v202
    %v2685 = vunpack.c.l.b16 %v203
    %v2686 = vunpack.c.h.b16 %v203
    %v2687 = vunpack.c.l.b16 %v204
    %v2688 = vunpack.c.h.b16 %v204
    %v2689 = vunpack.c.l.b16 %v205
    %v2690 = vunpack.c.h.b16 %v205
    %v2691 = vunpack.c.l.b16 %v206
    %v2692 = vunpack.c.h.b16 %v206
    %v2693 = vunpack.c.l.b16 %v207
    %v2694 = vunpack.c.h.b16 %v207
    %v2695 = vunpack.c.l.b16 %v208
    %v2696 = vunpack.c.h.b16 %v208
    %v2697 = vunpack.c.l.b16 %v209
    %v2698 = vunpack.c.h.b16 %v209
    %v2699 = vunpack.c.l.b16 %v210
    %v2700 = vunpack.c.h.b16 %v210
    %v2701 = vunpack.c.l.b16 %v211
    %v2702 = vunpack.c.h.b16 %v211
    %v2703 = vunpack.c.l.b16 %v212
    %v2704 = vunpack.c.h.b16 %v212
    %v2705 = vunpack.c.l.b16 %v213
    %v2706 = vunpack.c.h.b16 %v213
    %v2707 = vunpack.c.l.b16 %v214
    %v2708 = vunpack.c.h.b16 %v214
    %v2709 = vunpack.c.l.b16 %v215
    %v2710 = vunpack.c.h.b16 %v215
    %v2711 = vunpack.c.l.b16 %v216
    %v2712 = vunpack.c.h.b16 %v216
    %v2713 = vunpack.c.l.b16 %v217
    %v2714 = vunpack.c.h.b16 %v217
    %v2715 = vunpack.c.l.b16 %v218
    %v2716 = vunpack.c.h.b16 %v218
    %v2717 = vunpack.c.l.b16 %v219
    %v2718 = vunpack.c.h.b16 %v219
    %v2719 = vunpack.c.l.b16 %v220
    %v2720 = vunpack.c.h.b16 %v220
    %v2721 = vunpack.c.l.b16 %v221
    %v2722 = vunpack.c.h.b16 %v221
    %v2723 = vunpack.c.l.b16 %v222
    %v2724 = vunpack.c.h.b16 %v222
    %v2725 = vunpack.c.l.b16 %v223
    %v2726 = vunpack.c.h.b16 %v223
    %v2727 = vunpack.c.l.b16 %v224
    %v2728 = vunpack.c.h.b16 %v224
    %v2729 = vunpack.c.l.b16 %v225
    %v2730 = vunpack.c.h.b16 %v225
    %v2731 = vunpack.c.l.b16 %v226
    %v2732 = vunpack.c.h.b16 %v226
    %v2733 = vunpack.c.l.b16 %v227
    %v2734 = vunpack.c.h.b16 %v227
    %v2735 = vunpack.c.l.b16 %v228
    %v2736 = vunpack.c.h.b16 %v228
    %v2737 = vunpack.c.l.b16 %v229
    %v2738 = vunpack.c.h.b16 %v229
    %v2739 = vunpack.c.l.b16 %v230
    %v2740 = vunpack.c.h.b16 %v230
    %v2741 = vunpack.c.l.b16 %v231
    %v2742 = vunpack.c.h.b16 %v231
    %v2743 = vunpack.c.l.b16 %v232
    %v2744 = vunpack.c.h.b16 %v232
    %v2745 = vunpack.c.l.b16 %v233
    %v2746 = vunpack.c.h.b16 %v233
    %v2747 = vunpack.c.l.b16 %v234
    %v2748 = vunpack.c.h.b16 %v234
    %v2749 = vunpack.c.l.b16 %v235
    %v2750 = vunpack.c.h.b16 %v235
    %v2751 = vunpack.c.l.b16 %v236
    %v2752 = vunpack.c.h.b16 %v236
    %v2753 = vunpack.c.l.b16 %v237
    %v2754 = vunpack.c.h.b16 %v237
    %v2755 = vunpack.c.l.b16 %v238
    %v2756 = vunpack.c.h.b16 %v238
    %v2757 = vunpack.c.l.b16 %v239
    %v2758 = vunpack.c.h.b16 %v239
    %v2759 = vunpack.c.l.b16 %v240
    %v2760 = vunpack.c.h.b16 %v240
    %v2761 = vunpack.c.l.b16 %v241
    %v2762 = vunpack.c.h.b16 %v241
    %v2763 = vunpack.c.l.b16 %v242
    %v2764 = vunpack.c.h.b16 %v242
    %v2765 = vunpack.c.l.b16 %v243
    %v2766 = vunpack.c.h.b16 %v243
    %v2767 = vunpack.c.l.b16 %v244
    %v2768 = vunpack.c.h.b16 %v244
    %v2769 = vunpack.c.l.b16 %v245
    %v2770 = vunpack.c.h.b16 %v245
    %v2771 = vunpack.c.l.b16 %v246
    %v2772 = vunpack.c.h.b16 %v246
    %v2773 = vunpack.c.l.b16 %v247
    %v2774 = vunpack.c.h.b16 %v247
    %v2775 = vunpack.c.l.b16 %v248
    %v2776 = vunpack.c.h.b16 %v248
    %v2777 = vunpack.c.l.b16 %v249
    %v2778 = vunpack.c.h.b16 %v249
    %v2779 = vunpack.c.l.b16 %v250
    %v2780 = vunpack.c.h.b16 %v250
    %v2781 = vunpack.c.l.b16 %v251
    %v2782 = vunpack.c.h.b16 %v251
    %v2783 = vunpack.c.l.b16 %v252
    %v2784 = vunpack.c.h.b16 %v252
    %v2785 = vunpack.c.l.b16 %v253
    %v2786 = vunpack.c.h.b16 %v253
    %v2787 = vunpack.c.l.b16 %v254
    %v2788 = vunpack.c.h.b16 %v254
    %v2789 = vunpack.c.l.b16 %v255
    %v2790 = vunpack.c.h.b16 %v255
    %v2791 = vunpack.c.l.b16 %v256
    %v2792 = vunpack.c.h.b16 %v256
    %v2793 = vunpack.c.l.b16 %v257
    %v2794 = vunpack.c.h.b16 %v257
    %v2795 = vunpack.c.l.b16 %v258
    %v2796 = vunpack.c.h.b16 %v258
    %v2797 = vunpack.c.l.b16 %v259
    %v2798 = vunpack.c.h.b16 %v259
    %v2799 = vunpack.c.l.b16 %v260
    %v2800 = vunpack.c.h.b16 %v260
    %v2801 = vunpack.c.l.b16 %v261
    %v2802 = vunpack.c.h.b16 %v261
    %v2803 = vunpack.c.l.b16 %v262
    %v2804 = vunpack.c.h.b16 %v262
    %v2805 = vunpack.c.l.b16 %v263
    %v2806 = vunpack.c.h.b16 %v263
    %v2807 = vunpack.c.l.b16 %v264
    %v2808 = vunpack.c.h.b16 %v264
    %v2809 = vunpack.c.l.b16 %v265
    %v2810 = vunpack.c.h.b16 %v265
    %v2811 = vunpack.c.l.b16 %v266
    %v2812 = vunpack.c.h.b16 %v266
    %v2813 = vunpack.c.l.b16 %v267
    %v2814 = vunpack.c.h.b16 %v267
    %v2815 = vunpack.c.l.b16 %v268
    %v2816 = vunpack.c.h.b16 %v268
    %v2817 = vunpack.c.l.b16 %v269
    %v2818 = vunpack.c.h.b16 %v269
    %v2819 = vunpack.c.l.b16 %v270
    %v2820 = vunpack.c.h.b16 %v270
    %v2821 = vunpack.c.l.b16 %v271
    %v2822 = vunpack.c.h.b16 %v271
    %v2823 = vunpack.c.l.b16 %v272
    %v2824 = vunpack.c.h.b16 %v272
    %v2825 = vunpack.c.l.b16 %v273
    %v2826 = vunpack.c.h.b16 %v273
    %v2827 = vunpack.c.l.b16 %v274
    %v2828 = vunpack.c.h.b16 %v274
    %v2829 = vunpack.c.l.b16 %v275
    %v2830 = vunpack.c.h.b16 %v275
    %v2831 = vunpack.c.l.b16 %v276
    %v2832 = vunpack.c.h.b16 %v276
    %v2833 = vunpack.c.l.b16 %v277
    %v2834 = vunpack.c.h.b16 %v277
    %v2835 = vunpack.c.l.b16 %v278
    %v2836 = vunpack.c.h.b16 %v278
    %v2837 = vunpack.c.l.b16 %v279
    %v2838 = vunpack.c.h.b16 %v279
    %v2839 = vunpack.c.l.b16 %v280
    %v2840 = vunpack.c.h.b16 %v280
    %v2841 = vunpack.c.l.b16 %v281
    %v2842 = vunpack.c.h.b16 %v281
    %v2843 = vunpack.c.l.b16 %v282
    %v2844 = vunpack.c.h.b16 %v282
    %v2845 = vunpack.c.l.b16 %v283
    %v2846 = vunpack.c.h.b16 %v283
    %v2847 = vunpack.c.l.b16 %v284
    %v2848 = vunpack.c.h.b16 %v284
    %v2849 = vunpack.c.l.b16 %v285
    %v2850 = vunpack.c.h.b16 %v285
    %v2851 = vunpack.c.l.b16 %v286
    %v2852 = vunpack.c.h.b16 %v286
    %v2853 = vunpack.c.l.b16 %v287
    %v2854 = vunpack.c.h.b16 %v287
    %v2855 = vunpack.c.l.b16 %v288
    %v2856 = vunpack.c.h.b16 %v288
    %v2857 = vunpack.c.l.b16 %v289
    %v2858 = vunpack.c.h.b16 %v289
    %v2859 = vunpack.c.l.b16 %v290
    %v2860 = vunpack.c.h.b16 %v290
    %v2861 = vunpack.c.l.b16 %v291
    %v2862 = vunpack.c.h.b16 %v291
    %v2863 = vunpack.c.l.b16 %v292
    %v2864 = vunpack.c.h.b16 %v292
    %v2865 = vunpack.c.l.b16 %v293
    %v2866 = vunpack.c.h.b16 %v293
    %v2867 = vunpack.c.l.b16 %v294
    %v2868 = vunpack.c.h.b16 %v294
    %v2869 = vunpack.c.l.b16 %v295
    %v2870 = vunpack.c.h.b16 %v295
    %v2871 = vunpack.c.l.b16 %v296
    %v2872 = vunpack.c.h.b16 %v296
    %v2873 = vunpack.c.l.b16 %v297
    %v2874 = vunpack.c.h.b16 %v297
    %v2875 = vunpack.c.l.b16 %v298
    %v2876 = vunpack.c.h.b16 %v298
    %v2877 = vunpack.c.l.b16 %v299
    %v2878 = vunpack.c.h.b16 %v299
    %v2879 = vunpack.c.l.b16 %v300
    %v2880 = vunpack.c.h.b16 %v300
    %v2881 = vunpack.c.l.b16 %v301
    %v2882 = vunpack.c.h.b16 %v301
    %v2883 = vunpack.c.l.b16 %v302
    %v2884 = vunpack.c.h.b16 %v302
    %v2885 = vunpack.c.l.b16 %v303
    %v2886 = vunpack.c.h.b16 %v303
    %v2887 = vunpack.c.l.b16 %v304
    %v2888 = vunpack.c.h.b16 %v304
    %v2889 = vunpack.c.l.b16 %v305
    %v2890 = vunpack.c.h.b16 %v305
    %v2891 = vunpack.c.l.b16 %v306
    %v2892 = vunpack.c.h.b16 %v306
    %v2893 = vunpack.c.l.b16 %v307
    %v2894 = vunpack.c.h.b16 %v307
    %v2895 = vunpack.c.l.b16 %v308
    %v2896 = vunpack.c.h.b16 %v308
    %v2897 = vunpack.c.l.b16 %v309
    %v2898 = vunpack.c.h.b16 %v309
    %v2899 = vunpack.c.l.b16 %v310
    %v2900 = vunpack.c.h.b16 %v310
    %v2901 = vunpack.c.l.b16 %v311
    %v2902 = vunpack.c.h.b16 %v311
    %v2903 = vunpack.c.l.b16 %v312
    %v2904 = vunpack.c.h.b16 %v312
    %v2905 = vunpack.c.l.b16 %v313
    %v2906 = vunpack.c.h.b16 %v313
    %v2907 = vunpack.c.l.b16 %v314
    %v2908 = vunpack.c.h.b16 %v314
    %v2909 = vunpack.c.l.b16 %v315
    %v2910 = vunpack.c.h.b16 %v315
    %v2911 = vunpack.c.l.b16 %v316
    %v2912 = vunpack.c.h.b16 %v316
    %v2913 = vunpack.c.l.b16 %v317
    %v2914 = vunpack.c.h.b16 %v317
    %v2915 = vunpack.c.l.b16 %v318
    %v2916 = vunpack.c.h.b16 %v318
    %v2917 = vunpack.c.l.b16 %v319
    %v2918 = vunpack.c.h.b16 %v319
    %v2919 = vunpack.c.l.b16 %v320
    %v2920 = vunpack.c.h.b16 %v320
    %v2921 = vunpack.c.l.b16 %v321
    %v2922 = vunpack.c.h.b16 %v321
    %v2923 = vunpack.c.l.b16 %v322
    %v2924 = vunpack.c.h.b16 %v322
    %v2925 = vunpack.c.l.b16 %v323
    %v2926 = vunpack.c.h.b16 %v323
    %v2927 = vunpack.c.l.b16 %v324
    %v2928 = vunpack.c.h.b16 %v324
    %v2929 = vunpack.c.l.b16 %v325
    %v2930 = vunpack.c.h.b16 %v325
    %v2931 = vunpack.c.l.b16 %v326
    %v2932 = vunpack.c.h.b16 %v326
    %v2933 = vunpack.c.l.b16 %v327
    %v2934 = vunpack.c.h.b16 %v327
    %v2935 = vunpack.c.l.b16 %v328
    %v2936 = vunpack.c.h.b16 %v328
    %v2937 = vunpack.c.l.b16 %v329
    %v2938 = vunpack.c.h.b16 %v329
    %v2939 = vunpack.c.l.b16 %v330
    %v2940 = vunpack.c.h.b16 %v330
    %v2941 = vunpack.c.l.b16 %v331
    %v2942 = vunpack.c.h.b16 %v331
    %v2943 = vunpack.c.l.b16 %v332
    %v2944 = vunpack.c.h.b16 %v332
    %v2945 = vunpack.c.l.b16 %v333
    %v2946 = vunpack.c.h.b16 %v333
    %v2947 = vunpack.c.l.b16 %v334
    %v2948 = vunpack.c.h.b16 %v334
    %v2949 = vunpack.c.l.b16 %v335
    %v2950 = vunpack.c.h.b16 %v335
    %v2951 = vunpack.c.l.b16 %v336
    %v2952 = vunpack.c.h.b16 %v336
    %v2953 = vunpack.c.l.b16 %v337
    %v2954 = vunpack.c.h.b16 %v337
    %v2955 = vunpack.c.l.b16 %v338
    %v2956 = vunpack.c.h.b16 %v338
    %v2957 = vunpack.c.l.b16 %v339
    %v2958 = vunpack.c.h.b16 %v339
    %v2959 = vunpack.c.l.b16 %v340
    %v2960 = vunpack.c.h.b16 %v340
    %v2961 = vunpack.c.l.b16 %v341
    %v2962 = vunpack.c.h.b16 %v341
    %v2963 = vunpack.c.l.b16 %v342
    %v2964 = vunpack.c.h.b16 %v342
    %v2965 = vunpack.c.l.b16 %v343
    %v2966 = vunpack.c.h.b16 %v343
    %v2967 = vunpack.c.l.b16 %v344
    %v2968 = vunpack.c.h.b16 %v344
    %v2969 = vunpack.c.l.b16 %v345
    %v2970 = vunpack.c.h.b16 %v345
    %v2971 = vunpack.c.l.b16 %v346
    %v2972 = vunpack.c.h.b16 %v346
    %v2973 = vunpack.c.l.b16 %v347
    %v2974 = vunpack.c.h.b16 %v347
    %v2975 = vunpack.c.l.b16 %v348
    %v2976 = vunpack.c.h.b16 %v348
    %v2977 = vunpack.c.l.b16 %v349
    %v2978 = vunpack.c.h.b16 %v349
    %v2979 = vunpack.c.l.b16 %v350
    %v2980 = vunpack.c.h.b16 %v350
    %v2981 = vunpack.c.l.b16 %v351
    %v2982 = vunpack.c.h.b16 %v351
    %v2983 = vunpack.c.l.b16 %v352
    %v2984 = vunpack.c.h.b16 %v352
    %v2985 = vunpack.c.l.b16 %v353
    %v2986 = vunpack.c.h.b16 %v353
    %v2987 = vunpack.c.l.b16 %v354
    %v2988 = vunpack.c.h.b16 %v354
    %v2989 = vunpack.c.l.b16 %v355
    %v2990 = vunpack.c.h.b16 %v355
    %v2991 = vunpack.c.l.b16 %v356
    %v2992 = vunpack.c.h.b16 %v356
    %v2993 = vunpack.c.l.b16 %v357
    %v2994 = vunpack.c.h.b16 %v357
    %v2995 = vunpack.c.l.b16 %v358
    %v2996 = vunpack.c.h.b16 %v358
    %v2997 = vunpack.c.l.b16 %v359
    %v2998 = vunpack.c.h.b16 %v359
    %v2999 = vunpack.c.l.b16 %v360
    %v3000 = vunpack.c.h.b16 %v360
    %v3001 = vunpack.c.l.b16 %v361
    %v3002 = vunpack.c.h.b16 %v361
    %v3003 = vunpack.c.l.b16 %v362
    %v3004 = vunpack.c.h.b16 %v362
    %v3005 = vunpack.c.l.b16 %v363
    %v3006 = vunpack.c.h.b16 %v363
    %v3007 = vunpack.c.l.b16 %v364
    %v3008 = vunpack.c.h.b16 %v364
    %v3009 = vunpack.c.l.b16 %v365
    %v3010 = vunpack.c.h.b16 %v365
    %v3011 = vunpack.c.l.b16 %v366
    %v3012 = vunpack.c.h.b16 %v366
    %v3013 = vunpack.c.l.b16 %v367
    %v3014 = vunpack.c.h.b16 %v367
    %v3015 = vunpack.c.l.b16 %v368
    %v3016 = vunpack.c.h.b16 %v368
    %v3017 = vunpack.c.l.b16 %v369
    %v3018 = vunpack.c.h.b16 %v369
    %v3019 = vunpack.c.l.b16 %v370
    %v3020 = vunpack.c.h.b16 %v370
    %v3021 = vunpack.c.l.b16 %v371
    %v3022 = vunpack.c.h.b16 %v371
    %v3023 = vunpack.c.l.b16 %v372
    %v3024 = vunpack.c.h.b16 %v372
    %v3025 = vunpack.c.l.b16 %v373
    %v3026 = vunpack.c.h.b16 %v373
    %v3027 = vunpack.c.l.b16 %v374
    %v3028 = vunpack.c.h.b16 %v374
    %v3029 = vunpack.c.l.b16 %v375
    %v3030 = vunpack.c.h.b16 %v375
    %v3031 = vunpack.c.l.b16 %v376
    %v3032 = vunpack.c.h.b16 %v376
    %v3033 = vunpack.c.l.b16 %v377
    %v3034 = vunpack.c.h.b16 %v377
    %v3035 = vunpack.c.l.b16 %v378
    %v3036 = vunpack.c.h.b16 %v378
    %v3037 = vunpack.c.l.b16 %v379
    %v3038 = vunpack.c.h.b16 %v379
    %v3039 = vunpack.c.l.b16 %v380
    %v3040 = vunpack.c.h.b16 %v380
    %v3041 = vunpack.c.l.b16 %v381
    %v3042 = vunpack.c.h.b16 %v381
    %v3043 = vunpack.c.l.b16 %v382
    %v3044 = vunpack.c.h.b16 %v382
    %v3045 = vunpack.c.l.b16 %v383
    %v3046 = vunpack.c.h.b16 %v383
    %v3047 = vunpack.c.l.b16 %v384
    %v3048 = vunpack.c.h.b16 %v384
    %v3049 = vpack.c.b16 %v2669, %v2665
    %v3050 = vpack.c.b16 %v2670, %v2666
    %v3051 = vpack.c.b16 %v2671, %v2667
    %v3052 = vpack.c.b16 %v2672, %v2668
    %v3053 = vpack.c.b16 %v2677, %v2673
    %v3054 = vpack.c.b16 %v2678, %v2674
    %v3055 = vpack.c.b16 %v2679, %v2675
    %v3056 = vpack.c.b16 %v2680, %v2676
    %v3057 = vpack.c.b16 %v2685, %v2681
    %v3058 = vpack.c.b16 %v2686, %v2682
    %v3059 = vpack.c.b16 %v2687, %v2683
    %v3060 = vpack.c.b16 %v2688, %v2684
    %v3061 = vpack.c.b16 %v2693, %v2689
    %v3062 = vpack.c.b16 %v2694, %v2690
    %v3063 = vpack.c.b16 %v2695, %v2691
    %v3064 = vpack.c.b16 %v2696, %v2692
    %v3065 = vpack.c.b16 %v2701, %v2697
    %v3066 = vpack.c.b16 %v2702, %v2698
    %v3067 = vpack.c.b16 %v2703, %v2699
    %v3068 = vpack.c.b16 %v2704, %v2700
    %v3069 = vpack.c.b16 %v2709, %v2705
    %v3070 = vpack.c.b16 %v2710, %v2706
    %v3071 = vpack.c.b16 %v2711, %v2707
    %v3072 = vpack.c.b16 %v2712, %v2708
    %v3073 = vpack.c.b16 %v2717, %v2713
    %v3074 = vpack.c.b16 %v2718, %v2714
    %v3075 = vpack.c.b16 %v2719, %v2715
    %v3076 = vpack.c.b16 %v2720, %v2716
    %v3077 = vpack.c.b16 %v2725, %v2721
    %v3078 = vpack.c.b16 %v2726, %v2722
    %v3079 = vpack.c.b16 %v2727, %v2723
    %v3080 = vpack.c.b16 %v2728, %v2724
    %v3081 = vpack.c.b16 %v2733, %v2729
    %v3082 = vpack.c.b16 %v2734, %v2730
    %v3083 = vpack.c.b16 %v2735, %v2731
    %v3084 = vpack.c.b16 %v2736, %v2732
    %v3085 = vpack.c.b16 %v2741, %v2737
    %v3086 = vpack.c.b16 %v2742, %v2738
    %v3087 = vpack.c.b16 %v2743, %v2739
    %v3088 = vpack.c.b16 %v2744, %v2740
    %v3089 = vpack.c.b16 %v2749, %v2745
    %v3090 = vpack.c.b16 %v2750, %v2746
    %v3091 = vpack.c.b16 %v2751, %v2747
    %v3092 = vpack.c.b16 %v2752, %v2748
    %v3093 = vpack.c.b16 %v2757, %v2753
    %v3094 = vpack.c.b16 %v2758, %v2754
    %v3095 = vpack.c.b16 %v2759, %v2755
    %v3096 = vpack.c.b16 %v2760, %v2756
    %v3097 = vpack.c.b16 %v2765, %v2761
    %v3098 = vpack.c.b16 %v2766, %v2762
    %v3099 = vpack.c.b16 %v2767, %v2763
    %v3100 = vpack.c.b16 %v2768, %v2764
    %v3101 = vpack.c.b16 %v2773, %v2769
    %v3102 = vpack.c.b16 %v2774, %v2770
    %v3103 = vpack.c.b16 %v2775, %v2771
    %v3104 = vpack.c.b16 %v2776, %v2772
    %v3105 = vpack.c.b16 %v2781, %v2777
    %v3106 = vpack.c.b16 %v2782, %v2778
    %v3107 = vpack.c.b16 %v2783, %v2779
    %v3108 = vpack.c.b16 %v2784, %v2780
    %v3109 = vpack.c.b16 %v2789, %v2785
    %v3110 = vpack.c.b16 %v2790, %v2786
    %v3111 = vpack.c.b16 %v2791, %v2787
    %v3112 = vpack.c.b16 %v2792, %v2788
    %v3113 = vpack.c.b16 %v2797, %v2793
    %v3114 = vpack.c.b16 %v2798, %v2794
    %v3115 = vpack.c.b16 %v2799, %v2795
    %v3116 = vpack.c.b16 %v2800, %v2796
    %v3117 = vpack.c.b16 %v2805, %v2801
    %v3118 = vpack.c.b16 %v2806, %v2802
    %v3119 = vpack.c.b16 %v2807, %v2803
    %v3120 = vpack.c.b16 %v2808, %v2804
    %v3121 = vpack.c.b16 %v2813, %v2809
    %v3122 = vpack.c.b16 %v2814, %v2810
    %v3123 = vpack.c.b16 %v2815, %v2811
    %v3124 = vpack.c.b16 %v2816, %v2812
    %v3125 = vpack.c.b16 %v2821, %v2817
    %v3126 = vpack.c.b16 %v2822, %v2818
    %v3127 = vpack.c.b16 %v2823, %v2819
    %v3128 = vpack.c.b16 %v2824, %v2820
    %v3129 = vpack.c.b16 %v2829, %v2825
    %v3130 = vpack.c.b16 %v2830, %v2826
    %v3131 = vpack.c.b16 %v2831, %v2827
    %v3132 = vpack.c.b16 %v2832, %v2828
    %v3133 = vpack.c.b16 %v2837, %v2833
    %v3134 = vpack.c.b16 %v2838, %v2834
    %v3135 = vpack.c.b16 %v2839, %v2835
    %v3136 = vpack.c.b16 %v2840, %v2836
    %v3137 = vpack.c.b16 %v2845, %v2841
    %v3138 = vpack.c.b16 %v2846, %v2842
    %v3139 = vpack.c.b16 %v2847, %v2843
    %v3140 = vpack.c.b16 %v2848, %v2844
    %v3141 = vpack.c.b16 %v2853, %v2849
    %v3142 = vpack.c.b16 %v2854, %v2850
    %v3143 = vpack.c.b16 %v2855, %v2851
    %v3144 = vpack.c.b16 %v2856, %v2852
    %v3145 = vpack.c.b16 %v2861, %v2857
    %v3146 = vpack.c.b16 %v2862, %v2858
    %v3147 = vpack.c.b16 %v2863, %v2859
    %v3148 = vpack.c.b16 %v2864, %v2860
    %v3149 = vpack.c.b16 %v2869, %v2865
    %v3150 = vpack.c.b16 %v2870, %v2866
    %v3151 = vpack.c.b16 %v2871, %v2867
    %v3152 = vpack.c.b16 %v2872, %v2868
    %v3153 = vpack.c.b16 %v2877, %v2873
    %v3154 = vpack.c.b16 %v2878, %v2874
    %v3155 = vpack.c.b16 %v2879, %v2875
    %v3156 = vpack.c.b16 %v2880, %v2876
    %v3157 = vpack.c.b16 %v2885, %v2881
    %v3158 = vpack.c.b16 %v2886, %v2882
    %v3159 = vpack.c.b16 %v2887, %v2883
    %v3160 = vpack.c.b16 %v2888, %v2884
    %v3161 = vpack.c.b16 %v2893, %v2889
    %v3162 = vpack.c.b16 %v2894, %v2890
    %v3163 = vpack.c.b16 %v2895, %v2891
    %v3164 = vpack.c.b16 %v2896, %v2892
    %v3165 = vpack.c.b16 %v2901, %v2897
    %v3166 = vpack.c.b16 %v2902, %v2898
    %v3167 = vpack.c.b16 %v2903, %v2899
    %v3168 = vpack.c.b16 %v2904, %v2900
    %v3169 = vpack.c.b16 %v2909, %v2905
    %v3170 = vpack.c.b16 %v2910, %v2906
    %v3171 = vpack.c.b16 %v2911, %v2907
    %v3172 = vpack.c.b16 %v2912, %v2908
    %v3173 = vpack.c.b16 %v2917, %v2913
    %v3174 = vpack.c.b16 %v2918, %v2914
    %v3175 = vpack.c.b16 %v2919, %v2915
    %v3176 = vpack.c.b16 %v2920, %v2916
    %v3177 = vpack.c.b16 %v2925, %v2921
    %v3178 = vpack.c.b16 %v2926, %v2922
    %v3179 = vpack.c.b16 %v2927, %v2923
    %v3180 = vpack.c.b16 %v2928, %v2924
    %v3181 = vpack.c.b16 %v2933, %v2929
    %v3182 = vpack.c.b16 %v2934, %v2930
    %v3183 = vpack.c.b16 %v2935, %v2931
    %v3184 = vpack.c.b16 %v2936, %v2932
    %v3185 = vpack.c.b16 %v2941, %v2937
    %v3186 = vpack.c.b16 %v2942, %v2938
    %v3187 = vpack.c.b16 %v2943, %v2939
    %v3188 = vpack.c.b16 %v2944, %v2940
    %v3189 = vpack.c.b16 %v2949, %v2945
    %v3190 = vpack.c.b16 %v2950, %v2946
    %v3191 = vpack.c.b16 %v2951, %v2947
    %v3192 = vpack.c.b16 %v2952, %v2948
    %v3193 = vpack.c.b16 %v2957, %v2953
    %v3194 = vpack.c.b16 %v2958, %v2954
    %v3195 = vpack.c.b16 %v2959, %v2955
    %v3196 = vpack.c.b16 %v2960, %v2956
    %v3197 = vpack.c.b16 %v2965, %v2961
    %v3198 = vpack.c.b16 %v2966, %v2962
    %v3199 = vpack.c.b16 %v2967, %v2963
    %v3200 = vpack.c.b16 %v2968, %v2964
    %v3201 = vpack.c.b16 %v2973, %v2969
    %v3202 = vpack.c.b16 %v2974, %v2970
    %v3203 = vpack.c.b16 %v2975, %v2971
    %v3204 = vpack.c.b16 %v2976, %v2972
    %v3205 = vpack.c.b16 %v2981, %v2977
    %v3206 = vpack.c.b16 %v2982, %v2978
    %v3207 = vpack.c.b16 %v2983, %v2979
    %v3208 = vpack.c.b16 %v2984, %v2980
    %v3209 = vpack.c.b16 %v2989, %v2985
    %v3210 = vpack.c.b16 %v2990, %v2986
    %v3211 = vpack.c.b16 %v2991, %v2987
    %v3212 = vpack.c.b16 %v2992, %v2988
    %v3213 = vpack.c.b16 %v2997, %v2993
    %v3214 = vpack.c.b16 %v2998, %v2994
    %v3215 = vpack.c.b16 %v2999, %v2995
    %v3216 = vpack.c.b16 %v3000, %v2996
    %v3217 = vpack.c.b16 %v3005, %v3001
    %v3218 = vpack.c.b16 %v3006, %v3002
    %v3219 = vpack.c.b16 %v3007, %v3003
    %v3220 = vpack.c.b16 %v3008, %v3004
    %v3221 = vpack.c.b16 %v3013, %v3009
    %v3222 = vpack.c.b16 %v3014, %v3010
    %v3223 = vpack.c.b16 %v3015, %v3011
    %v3224 = vpack.c.b16 %v3016, %v3012
    %v3225 = vpack.c.b16 %v3021, %v3017
    %v3226 = vpack.c.b16 %v3022, %v3018
    %v3227 = vpack.c.b16 %v3023, %v3019
    %v3228 = vpack.c.b16 %v3024, %v3020
    %v3229 = vpack.c.b16 %v3029, %v3025
    %v3230 = vpack.c.b16 %v3030, %v3026
    %v3231 = vpack.c.b16 %v3031, %v3027
    %v3232 = vpack.c.b16 %v3032, %v3028
    %v3233 = vpack.c.b16 %v3037, %v3033
    %v3234 = vpack.c.b16 %v3038, %v3034
    %v3235 = vpack.c.b16 %v3039, %v3035
    %v3236 = vpack.c.b16 %v3040, %v3036
    %v3237 = vpack.c.b16 %v3045, %v3041
    %v3238 = vpack.c.b16 %v3046, %v3042
    %v3239 = vpack.c.b16 %v3047, %v3043
    %v3240 = vpack.c.b16 %v3048, %v3044
    %3433 = vmatpush.bf16.msra.mxu0 %v3077
    %3434 = vmatpush.bf16.msra.mxu0 %v3073
    %3435 = vmatpush.bf16.msra.mxu0 %v3069
    %3436 = vmatpush.bf16.msra.mxu0 %v3065
    %3437 = vmatpush.bf16.msra.mxu0 %v3061
    %3438 = vmatpush.bf16.msra.mxu0 %v3057
    %3439 = vmatpush.bf16.msra.mxu0 %v3053
    %3440 = vmatpush.bf16.msra.mxu0 %v3049
    %3441 = vmatmul.bf16.gmra.mxu0 %v2425
    %v3442 = vpop.f32.mrf.mxu0
    %v3443 = vadd.f32 %v1812, %v3442
    %v3444 = vpop.f32.mrf.mxu0
    %v3445 = vadd.f32 %v1814, %v3444
    %3446 = vmatmul.bf16.gmra.mxu0 %v2431
    %v3447 = vpop.f32.mrf.mxu0
    %v3448 = vadd.f32 %v1817, %v3447
    %v3449 = vpop.f32.mrf.mxu0
    %v3450 = vadd.f32 %v1819, %v3449
    %3451 = vmatmul.bf16.gmra.mxu0 %v2437
    %v3452 = vpop.f32.mrf.mxu0
    %v3453 = vadd.f32 %v1822, %v3452
    %v3454 = vpop.f32.mrf.mxu0
    %v3455 = vadd.f32 %v1824, %v3454
    %3456 = vmatmul.bf16.gmra.mxu0 %v2443
    %v3457 = vpop.f32.mrf.mxu0
    %v3458 = vadd.f32 %v1827, %v3457
    %v3459 = vpop.f32.mrf.mxu0
    %v3460 = vadd.f32 %v1829, %v3459
    %3461 = vdwg.mxu0
    %3462 = vmatpush.bf16.msra.mxu0 %v3109
    %3463 = vmatpush.bf16.msra.mxu0 %v3105
    %3464 = vmatpush.bf16.msra.mxu0 %v3101
    %3465 = vmatpush.bf16.msra.mxu0 %v3097
    %3466 = vmatpush.bf16.msra.mxu0 %v3093
    %3467 = vmatpush.bf16.msra.mxu0 %v3089
    %3468 = vmatpush.bf16.msra.mxu0 %v3085
    %3469 = vmatpush.bf16.msra.mxu0 %v3081
    %3470 = vmatmul.bf16.gmra.mxu0 %v2426
    %v3471 = vpop.f32.mrf.mxu0
    %v3472 = vadd.f32 %v3443, %v3471
    %v3473 = vpop.f32.mrf.mxu0
    %v3474 = vadd.f32 %v3445, %v3473
    %3475 = vmatmul.bf16.gmra.mxu0 %v2432
    %v3476 = vpop.f32.mrf.mxu0
    %v3477 = vadd.f32 %v3448, %v3476
    %v3478 = vpop.f32.mrf.mxu0
    %v3479 = vadd.f32 %v3450, %v3478
    %3480 = vmatmul.bf16.gmra.mxu0 %v2438
    %v3481 = vpop.f32.mrf.mxu0
    %v3482 = vadd.f32 %v3453, %v3481
    %v3483 = vpop.f32.mrf.mxu0
    %v3484 = vadd.f32 %v3455, %v3483
    %3485 = vmatmul.bf16.gmra.mxu0 %v2444
    %v3486 = vpop.f32.mrf.mxu0
    %v3487 = vadd.f32 %v3458, %v3486
    %v3488 = vpop.f32.mrf.mxu0
    %v3489 = vadd.f32 %v3460, %v3488
    %3490 = vdwg.mxu0
    %3491 = vmatpush.bf16.msra.mxu0 %v3141
    %3492 = vmatpush.bf16.msra.mxu0 %v3137
    %3493 = vmatpush.bf16.msra.mxu0 %v3133
    %3494 = vmatpush.bf16.msra.mxu0 %v3129
    %3495 = vmatpush.bf16.msra.mxu0 %v3125
    %3496 = vmatpush.bf16.msra.mxu0 %v3121
    %3497 = vmatpush.bf16.msra.mxu0 %v3117
    %3498 = vmatpush.bf16.msra.mxu0 %v3113
    %3499 = vmatmul.bf16.gmra.mxu0 %v2427
    %v3500 = vpop.f32.mrf.mxu0
    %v3501 = vadd.f32 %v3472, %v3500
    %v3502 = vpop.f32.mrf.mxu0
    %v3503 = vadd.f32 %v3474, %v3502
    %3504 = vmatmul.bf16.gmra.mxu0 %v2433
    %v3505 = vpop.f32.mrf.mxu0
    %v3506 = vadd.f32 %v3477, %v3505
    %v3507 = vpop.f32.mrf.mxu0
    %v3508 = vadd.f32 %v3479, %v3507
    %3509 = vmatmul.bf16.gmra.mxu0 %v2439
    %v3510 = vpop.f32.mrf.mxu0
    %v3511 = vadd.f32 %v3482, %v3510
    %v3512 = vpop.f32.mrf.mxu0
    %v3513 = vadd.f32 %v3484, %v3512
    %3514 = vmatmul.bf16.gmra.mxu0 %v2445
    %v3515 = vpop.f32.mrf.mxu0
    %v3516 = vadd.f32 %v3487, %v3515
    %v3517 = vpop.f32.mrf.mxu0
    %v3518 = vadd.f32 %v3489, %v3517
    %3519 = vdwg.mxu0
    %3520 = vmatpush.bf16.msra.mxu0 %v3173
    %3521 = vmatpush.bf16.msra.mxu0 %v3169
    %3522 = vmatpush.bf16.msra.mxu0 %v3165
    %3523 = vmatpush.bf16.msra.mxu0 %v3161
    %3524 = vmatpush.bf16.msra.mxu0 %v3157
    %3525 = vmatpush.bf16.msra.mxu0 %v3153
    %3526 = vmatpush.bf16.msra.mxu0 %v3149
    %3527 = vmatpush.bf16.msra.mxu0 %v3145
    %3528 = vmatmul.bf16.gmra.mxu0 %v2428
    %v3529 = vpop.f32.mrf.mxu0
    %v3530 = vadd.f32 %v3501, %v3529
    %v3531 = vpop.f32.mrf.mxu0
    %v3532 = vadd.f32 %v3503, %v3531
    %3533 = vmatmul.bf16.gmra.mxu0 %v2434
    %v3534 = vpop.f32.mrf.mxu0
    %v3535 = vadd.f32 %v3506, %v3534
    %v3536 = vpop.f32.mrf.mxu0
    %v3537 = vadd.f32 %v3508, %v3536
    %3538 = vmatmul.bf16.gmra.mxu0 %v2440
    %v3539 = vpop.f32.mrf.mxu0
    %v3540 = vadd.f32 %v3511, %v3539
    %v3541 = vpop.f32.mrf.mxu0
    %v3542 = vadd.f32 %v3513, %v3541
    %3543 = vmatmul.bf16.gmra.mxu0 %v2446
    %v3544 = vpop.f32.mrf.mxu0
    %v3545 = vadd.f32 %v3516, %v3544
    %v3546 = vpop.f32.mrf.mxu0
    %v3547 = vadd.f32 %v3518, %v3546
    %3548 = vdwg.mxu0
    %3549 = vmatpush.bf16.msra.mxu0 %v3205
    %3550 = vmatpush.bf16.msra.mxu0 %v3201
    %3551 = vmatpush.bf16.msra.mxu0 %v3197
    %3552 = vmatpush.bf16.msra.mxu0 %v3193
    %3553 = vmatpush.bf16.msra.mxu0 %v3189
    %3554 = vmatpush.bf16.msra.mxu0 %v3185
    %3555 = vmatpush.bf16.msra.mxu0 %v3181
    %3556 = vmatpush.bf16.msra.mxu0 %v3177
    %3557 = vmatmul.bf16.gmra.mxu0 %v2429
    %v3558 = vpop.f32.mrf.mxu0
    %v3559 = vadd.f32 %v3530, %v3558
    %v3560 = vpop.f32.mrf.mxu0
    %v3561 = vadd.f32 %v3532, %v3560
    %3562 = vmatmul.bf16.gmra.mxu0 %v2435
    %v3563 = vpop.f32.mrf.mxu0
    %v3564 = vadd.f32 %v3535, %v3563
    %v3565 = vpop.f32.mrf.mxu0
    %v3566 = vadd.f32 %v3537, %v3565
    %3567 = vmatmul.bf16.gmra.mxu0 %v2441
    %v3568 = vpop.f32.mrf.mxu0
    %v3569 = vadd.f32 %v3540, %v3568
    %v3570 = vpop.f32.mrf.mxu0
    %v3571 = vadd.f32 %v3542, %v3570
    %3572 = vmatmul.bf16.gmra.mxu0 %v2447
    %v3573 = vpop.f32.mrf.mxu0
    %v3574 = vadd.f32 %v3545, %v3573
    %v3575 = vpop.f32.mrf.mxu0
    %v3576 = vadd.f32 %v3547, %v3575
    %3577 = vdwg.mxu0
    %3578 = vmatpush.bf16.msra.mxu0 %v3237
    %3579 = vmatpush.bf16.msra.mxu0 %v3233
    %3580 = vmatpush.bf16.msra.mxu0 %v3229
    %3581 = vmatpush.bf16.msra.mxu0 %v3225
    %3582 = vmatpush.bf16.msra.mxu0 %v3221
    %3583 = vmatpush.bf16.msra.mxu0 %v3217
    %3584 = vmatpush.bf16.msra.mxu0 %v3213
    %3585 = vmatpush.bf16.msra.mxu0 %v3209
    %3586 = vmatmul.bf16.gmra.mxu0 %v2430
    %v3587 = vpop.f32.mrf.mxu0
    %v3588 = vadd.f32 %v3559, %v3587
    %v3589 = vpop.f32.mrf.mxu0
    %v3590 = vadd.f32 %v3561, %v3589
    %3591 = vmatmul.bf16.gmra.mxu0 %v2436
    %v3592 = vpop.f32.mrf.mxu0
    %v3593 = vadd.f32 %v3564, %v3592
    %v3594 = vpop.f32.mrf.mxu0
    %v3595 = vadd.f32 %v3566, %v3594
    %3596 = vmatmul.bf16.gmra.mxu0 %v2442
    %v3597 = vpop.f32.mrf.mxu0
    %v3598 = vadd.f32 %v3569, %v3597
    %v3599 = vpop.f32.mrf.mxu0
    %v3600 = vadd.f32 %v3571, %v3599
    %3601 = vmatmul.bf16.gmra.mxu0 %v2448
    %v3602 = vpop.f32.mrf.mxu0
    %v3603 = vadd.f32 %v3574, %v3602
    %v3604 = vpop.f32.mrf.mxu0
    %v3605 = vadd.f32 %v3576, %v3604
    %3606 = vdwg.mxu0
    %3607 = vmatpush.bf16.msra.mxu0 %v3078
    %3608 = vmatpush.bf16.msra.mxu0 %v3074
    %3609 = vmatpush.bf16.msra.mxu0 %v3070
    %3610 = vmatpush.bf16.msra.mxu0 %v3066
    %3611 = vmatpush.bf16.msra.mxu0 %v3062
    %3612 = vmatpush.bf16.msra.mxu0 %v3058
    %3613 = vmatpush.bf16.msra.mxu0 %v3054
    %3614 = vmatpush.bf16.msra.mxu0 %v3050
    %3615 = vmatmul.bf16.gmra.mxu0 %v2425
    %v3616 = vpop.f32.mrf.mxu0
    %v3617 = vadd.f32 %v1986, %v3616
    %v3618 = vpop.f32.mrf.mxu0
    %v3619 = vadd.f32 %v1988, %v3618
    %3620 = vmatmul.bf16.gmra.mxu0 %v2431
    %v3621 = vpop.f32.mrf.mxu0
    %v3622 = vadd.f32 %v1991, %v3621
    %v3623 = vpop.f32.mrf.mxu0
    %v3624 = vadd.f32 %v1993, %v3623
    %3625 = vmatmul.bf16.gmra.mxu0 %v2437
    %v3626 = vpop.f32.mrf.mxu0
    %v3627 = vadd.f32 %v1996, %v3626
    %v3628 = vpop.f32.mrf.mxu0
    %v3629 = vadd.f32 %v1998, %v3628
    %3630 = vmatmul.bf16.gmra.mxu0 %v2443
    %v3631 = vpop.f32.mrf.mxu0
    %v3632 = vadd.f32 %v2001, %v3631
    %v3633 = vpop.f32.mrf.mxu0
    %v3634 = vadd.f32 %v2003, %v3633
    %3635 = vdwg.mxu0
    %3636 = vmatpush.bf16.msra.mxu0 %v3110
    %3637 = vmatpush.bf16.msra.mxu0 %v3106
    %3638 = vmatpush.bf16.msra.mxu0 %v3102
    %3639 = vmatpush.bf16.msra.mxu0 %v3098
    %3640 = vmatpush.bf16.msra.mxu0 %v3094
    %3641 = vmatpush.bf16.msra.mxu0 %v3090
    %3642 = vmatpush.bf16.msra.mxu0 %v3086
    %3643 = vmatpush.bf16.msra.mxu0 %v3082
    %3644 = vmatmul.bf16.gmra.mxu0 %v2426
    %v3645 = vpop.f32.mrf.mxu0
    %v3646 = vadd.f32 %v3617, %v3645
    %v3647 = vpop.f32.mrf.mxu0
    %v3648 = vadd.f32 %v3619, %v3647
    %3649 = vmatmul.bf16.gmra.mxu0 %v2432
    %v3650 = vpop.f32.mrf.mxu0
    %v3651 = vadd.f32 %v3622, %v3650
    %v3652 = vpop.f32.mrf.mxu0
    %v3653 = vadd.f32 %v3624, %v3652
    %3654 = vmatmul.bf16.gmra.mxu0 %v2438
    %v3655 = vpop.f32.mrf.mxu0
    %v3656 = vadd.f32 %v3627, %v3655
    %v3657 = vpop.f32.mrf.mxu0
    %v3658 = vadd.f32 %v3629, %v3657
    %3659 = vmatmul.bf16.gmra.mxu0 %v2444
    %v3660 = vpop.f32.mrf.mxu0
    %v3661 = vadd.f32 %v3632, %v3660
    %v3662 = vpop.f32.mrf.mxu0
    %v3663 = vadd.f32 %v3634, %v3662
    %3664 = vdwg.mxu0
    %3665 = vmatpush.bf16.msra.mxu0 %v3142
    %3666 = vmatpush.bf16.msra.mxu0 %v3138
    %3667 = vmatpush.bf16.msra.mxu0 %v3134
    %3668 = vmatpush.bf16.msra.mxu0 %v3130
    %3669 = vmatpush.bf16.msra.mxu0 %v3126
    %3670 = vmatpush.bf16.msra.mxu0 %v3122
    %3671 = vmatpush.bf16.msra.mxu0 %v3118
    %3672 = vmatpush.bf16.msra.mxu0 %v3114
    %3673 = vmatmul.bf16.gmra.mxu0 %v2427
    %v3674 = vpop.f32.mrf.mxu0
    %v3675 = vadd.f32 %v3646, %v3674
    %v3676 = vpop.f32.mrf.mxu0
    %v3677 = vadd.f32 %v3648, %v3676
    %3678 = vmatmul.bf16.gmra.mxu0 %v2433
    %v3679 = vpop.f32.mrf.mxu0
    %v3680 = vadd.f32 %v3651, %v3679
    %v3681 = vpop.f32.mrf.mxu0
    %v3682 = vadd.f32 %v3653, %v3681
    %3683 = vmatmul.bf16.gmra.mxu0 %v2439
    %v3684 = vpop.f32.mrf.mxu0
    %v3685 = vadd.f32 %v3656, %v3684
    %v3686 = vpop.f32.mrf.mxu0
    %v3687 = vadd.f32 %v3658, %v3686
    %3688 = vmatmul.bf16.gmra.mxu0 %v2445
    %v3689 = vpop.f32.mrf.mxu0
    %v3690 = vadd.f32 %v3661, %v3689
    %v3691 = vpop.f32.mrf.mxu0
    %v3692 = vadd.f32 %v3663, %v3691
    %3693 = vdwg.mxu0
    %3694 = vmatpush.bf16.msra.mxu0 %v3174
    %3695 = vmatpush.bf16.msra.mxu0 %v3170
    %3696 = vmatpush.bf16.msra.mxu0 %v3166
    %3697 = vmatpush.bf16.msra.mxu0 %v3162
    %3698 = vmatpush.bf16.msra.mxu0 %v3158
    %3699 = vmatpush.bf16.msra.mxu0 %v3154
    %3700 = vmatpush.bf16.msra.mxu0 %v3150
    %3701 = vmatpush.bf16.msra.mxu0 %v3146
    %3702 = vmatmul.bf16.gmra.mxu0 %v2428
    %v3703 = vpop.f32.mrf.mxu0
    %v3704 = vadd.f32 %v3675, %v3703
    %v3705 = vpop.f32.mrf.mxu0
    %v3706 = vadd.f32 %v3677, %v3705
    %3707 = vmatmul.bf16.gmra.mxu0 %v2434
    %v3708 = vpop.f32.mrf.mxu0
    %v3709 = vadd.f32 %v3680, %v3708
    %v3710 = vpop.f32.mrf.mxu0
    %v3711 = vadd.f32 %v3682, %v3710
    %3712 = vmatmul.bf16.gmra.mxu0 %v2440
    %v3713 = vpop.f32.mrf.mxu0
    %v3714 = vadd.f32 %v3685, %v3713
    %v3715 = vpop.f32.mrf.mxu0
    %v3716 = vadd.f32 %v3687, %v3715
    %3717 = vmatmul.bf16.gmra.mxu0 %v2446
    %v3718 = vpop.f32.mrf.mxu0
    %v3719 = vadd.f32 %v3690, %v3718
    %v3720 = vpop.f32.mrf.mxu0
    %v3721 = vadd.f32 %v3692, %v3720
    %3722 = vdwg.mxu0
    %3723 = vmatpush.bf16.msra.mxu0 %v3206
    %3724 = vmatpush.bf16.msra.mxu0 %v3202
    %3725 = vmatpush.bf16.msra.mxu0 %v3198
    %3726 = vmatpush.bf16.msra.mxu0 %v3194
    %3727 = vmatpush.bf16.msra.mxu0 %v3190
    %3728 = vmatpush.bf16.msra.mxu0 %v3186
    %3729 = vmatpush.bf16.msra.mxu0 %v3182
    %3730 = vmatpush.bf16.msra.mxu0 %v3178
    %3731 = vmatmul.bf16.gmra.mxu0 %v2429
    %v3732 = vpop.f32.mrf.mxu0
    %v3733 = vadd.f32 %v3704, %v3732
    %v3734 = vpop.f32.mrf.mxu0
    %v3735 = vadd.f32 %v3706, %v3734
    %3736 = vmatmul.bf16.gmra.mxu0 %v2435
    %v3737 = vpop.f32.mrf.mxu0
    %v3738 = vadd.f32 %v3709, %v3737
    %v3739 = vpop.f32.mrf.mxu0
    %v3740 = vadd.f32 %v3711, %v3739
    %3741 = vmatmul.bf16.gmra.mxu0 %v2441
    %v3742 = vpop.f32.mrf.mxu0
    %v3743 = vadd.f32 %v3714, %v3742
    %v3744 = vpop.f32.mrf.mxu0
    %v3745 = vadd.f32 %v3716, %v3744
    %3746 = vmatmul.bf16.gmra.mxu0 %v2447
    %v3747 = vpop.f32.mrf.mxu0
    %v3748 = vadd.f32 %v3719, %v3747
    %v3749 = vpop.f32.mrf.mxu0
    %v3750 = vadd.f32 %v3721, %v3749
    %3751 = vdwg.mxu0
    %3752 = vmatpush.bf16.msra.mxu0 %v3238
    %3753 = vmatpush.bf16.msra.mxu0 %v3234
    %3754 = vmatpush.bf16.msra.mxu0 %v3230
    %3755 = vmatpush.bf16.msra.mxu0 %v3226
    %3756 = vmatpush.bf16.msra.mxu0 %v3222
    %3757 = vmatpush.bf16.msra.mxu0 %v3218
    %3758 = vmatpush.bf16.msra.mxu0 %v3214
    %3759 = vmatpush.bf16.msra.mxu0 %v3210
    %3760 = vmatmul.bf16.gmra.mxu0 %v2430
    %v3761 = vpop.f32.mrf.mxu0
    %v3762 = vadd.f32 %v3733, %v3761
    %v3763 = vpop.f32.mrf.mxu0
    %v3764 = vadd.f32 %v3735, %v3763
    %3765 = vmatmul.bf16.gmra.mxu0 %v2436
    %v3766 = vpop.f32.mrf.mxu0
    %v3767 = vadd.f32 %v3738, %v3766
    %v3768 = vpop.f32.mrf.mxu0
    %v3769 = vadd.f32 %v3740, %v3768
    %3770 = vmatmul.bf16.gmra.mxu0 %v2442
    %v3771 = vpop.f32.mrf.mxu0
    %v3772 = vadd.f32 %v3743, %v3771
    %v3773 = vpop.f32.mrf.mxu0
    %v3774 = vadd.f32 %v3745, %v3773
    %3775 = vmatmul.bf16.gmra.mxu0 %v2448
    %v3776 = vpop.f32.mrf.mxu0
    %v3777 = vadd.f32 %v3748, %v3776
    %v3778 = vpop.f32.mrf.mxu0
    %v3779 = vadd.f32 %v3750, %v3778
    %3780 = vdwg.mxu0
    %3781 = vmatpush.bf16.msra.mxu0 %v3079
    %3782 = vmatpush.bf16.msra.mxu0 %v3075
    %3783 = vmatpush.bf16.msra.mxu0 %v3071
    %3784 = vmatpush.bf16.msra.mxu0 %v3067
    %3785 = vmatpush.bf16.msra.mxu0 %v3063
    %3786 = vmatpush.bf16.msra.mxu0 %v3059
    %3787 = vmatpush.bf16.msra.mxu0 %v3055
    %3788 = vmatpush.bf16.msra.mxu0 %v3051
    %3789 = vmatmul.bf16.gmra.mxu0 %v2425
    %v3790 = vpop.f32.mrf.mxu0
    %v3791 = vadd.f32 %v2160, %v3790
    %v3792 = vpop.f32.mrf.mxu0
    %v3793 = vadd.f32 %v2162, %v3792
    %3794 = vmatmul.bf16.gmra.mxu0 %v2431
    %v3795 = vpop.f32.mrf.mxu0
    %v3796 = vadd.f32 %v2165, %v3795
    %v3797 = vpop.f32.mrf.mxu0
    %v3798 = vadd.f32 %v2167, %v3797
    %3799 = vmatmul.bf16.gmra.mxu0 %v2437
    %v3800 = vpop.f32.mrf.mxu0
    %v3801 = vadd.f32 %v2170, %v3800
    %v3802 = vpop.f32.mrf.mxu0
    %v3803 = vadd.f32 %v2172, %v3802
    %3804 = vmatmul.bf16.gmra.mxu0 %v2443
    %v3805 = vpop.f32.mrf.mxu0
    %v3806 = vadd.f32 %v2175, %v3805
    %v3807 = vpop.f32.mrf.mxu0
    %v3808 = vadd.f32 %v2177, %v3807
    %3809 = vdwg.mxu0
    %3810 = vmatpush.bf16.msra.mxu0 %v3111
    %3811 = vmatpush.bf16.msra.mxu0 %v3107
    %3812 = vmatpush.bf16.msra.mxu0 %v3103
    %3813 = vmatpush.bf16.msra.mxu0 %v3099
    %3814 = vmatpush.bf16.msra.mxu0 %v3095
    %3815 = vmatpush.bf16.msra.mxu0 %v3091
    %3816 = vmatpush.bf16.msra.mxu0 %v3087
    %3817 = vmatpush.bf16.msra.mxu0 %v3083
    %3818 = vmatmul.bf16.gmra.mxu0 %v2426
    %v3819 = vpop.f32.mrf.mxu0
    %v3820 = vadd.f32 %v3791, %v3819
    %v3821 = vpop.f32.mrf.mxu0
    %v3822 = vadd.f32 %v3793, %v3821
    %3823 = vmatmul.bf16.gmra.mxu0 %v2432
    %v3824 = vpop.f32.mrf.mxu0
    %v3825 = vadd.f32 %v3796, %v3824
    %v3826 = vpop.f32.mrf.mxu0
    %v3827 = vadd.f32 %v3798, %v3826
    %3828 = vmatmul.bf16.gmra.mxu0 %v2438
    %v3829 = vpop.f32.mrf.mxu0
    %v3830 = vadd.f32 %v3801, %v3829
    %v3831 = vpop.f32.mrf.mxu0
    %v3832 = vadd.f32 %v3803, %v3831
    %3833 = vmatmul.bf16.gmra.mxu0 %v2444
    %v3834 = vpop.f32.mrf.mxu0
    %v3835 = vadd.f32 %v3806, %v3834
    %v3836 = vpop.f32.mrf.mxu0
    %v3837 = vadd.f32 %v3808, %v3836
    %3838 = vdwg.mxu0
    %3839 = vmatpush.bf16.msra.mxu0 %v3143
    %3840 = vmatpush.bf16.msra.mxu0 %v3139
    %3841 = vmatpush.bf16.msra.mxu0 %v3135
    %3842 = vmatpush.bf16.msra.mxu0 %v3131
    %3843 = vmatpush.bf16.msra.mxu0 %v3127
    %3844 = vmatpush.bf16.msra.mxu0 %v3123
    %3845 = vmatpush.bf16.msra.mxu0 %v3119
    %3846 = vmatpush.bf16.msra.mxu0 %v3115
    %3847 = vmatmul.bf16.gmra.mxu0 %v2427
    %v3848 = vpop.f32.mrf.mxu0
    %v3849 = vadd.f32 %v3820, %v3848
    %v3850 = vpop.f32.mrf.mxu0
    %v3851 = vadd.f32 %v3822, %v3850
    %3852 = vmatmul.bf16.gmra.mxu0 %v2433
    %v3853 = vpop.f32.mrf.mxu0
    %v3854 = vadd.f32 %v3825, %v3853
    %v3855 = vpop.f32.mrf.mxu0
    %v3856 = vadd.f32 %v3827, %v3855
    %3857 = vmatmul.bf16.gmra.mxu0 %v2439
    %v3858 = vpop.f32.mrf.mxu0
    %v3859 = vadd.f32 %v3830, %v3858
    %v3860 = vpop.f32.mrf.mxu0
    %v3861 = vadd.f32 %v3832, %v3860
    %3862 = vmatmul.bf16.gmra.mxu0 %v2445
    %v3863 = vpop.f32.mrf.mxu0
    %v3864 = vadd.f32 %v3835, %v3863
    %v3865 = vpop.f32.mrf.mxu0
    %v3866 = vadd.f32 %v3837, %v3865
    %3867 = vdwg.mxu0
    %3868 = vmatpush.bf16.msra.mxu0 %v3175
    %3869 = vmatpush.bf16.msra.mxu0 %v3171
    %3870 = vmatpush.bf16.msra.mxu0 %v3167
    %3871 = vmatpush.bf16.msra.mxu0 %v3163
    %3872 = vmatpush.bf16.msra.mxu0 %v3159
    %3873 = vmatpush.bf16.msra.mxu0 %v3155
    %3874 = vmatpush.bf16.msra.mxu0 %v3151
    %3875 = vmatpush.bf16.msra.mxu0 %v3147
    %3876 = vmatmul.bf16.gmra.mxu0 %v2428
    %v3877 = vpop.f32.mrf.mxu0
    %v3878 = vadd.f32 %v3849, %v3877
    %v3879 = vpop.f32.mrf.mxu0
    %v3880 = vadd.f32 %v3851, %v3879
    %3881 = vmatmul.bf16.gmra.mxu0 %v2434
    %v3882 = vpop.f32.mrf.mxu0
    %v3883 = vadd.f32 %v3854, %v3882
    %v3884 = vpop.f32.mrf.mxu0
    %v3885 = vadd.f32 %v3856, %v3884
    %3886 = vmatmul.bf16.gmra.mxu0 %v2440
    %v3887 = vpop.f32.mrf.mxu0
    %v3888 = vadd.f32 %v3859, %v3887
    %v3889 = vpop.f32.mrf.mxu0
    %v3890 = vadd.f32 %v3861, %v3889
    %3891 = vmatmul.bf16.gmra.mxu0 %v2446
    %v3892 = vpop.f32.mrf.mxu0
    %v3893 = vadd.f32 %v3864, %v3892
    %v3894 = vpop.f32.mrf.mxu0
    %v3895 = vadd.f32 %v3866, %v3894
    %3896 = vdwg.mxu0
    %3897 = vmatpush.bf16.msra.mxu0 %v3207
    %3898 = vmatpush.bf16.msra.mxu0 %v3203
    %3899 = vmatpush.bf16.msra.mxu0 %v3199
    %3900 = vmatpush.bf16.msra.mxu0 %v3195
    %3901 = vmatpush.bf16.msra.mxu0 %v3191
    %3902 = vmatpush.bf16.msra.mxu0 %v3187
    %3903 = vmatpush.bf16.msra.mxu0 %v3183
    %3904 = vmatpush.bf16.msra.mxu0 %v3179
    %3905 = vmatmul.bf16.gmra.mxu0 %v2429
    %v3906 = vpop.f32.mrf.mxu0
    %v3907 = vadd.f32 %v3878, %v3906
    %v3908 = vpop.f32.mrf.mxu0
    %v3909 = vadd.f32 %v3880, %v3908
    %3910 = vmatmul.bf16.gmra.mxu0 %v2435
    %v3911 = vpop.f32.mrf.mxu0
    %v3912 = vadd.f32 %v3883, %v3911
    %v3913 = vpop.f32.mrf.mxu0
    %v3914 = vadd.f32 %v3885, %v3913
    %3915 = vmatmul.bf16.gmra.mxu0 %v2441
    %v3916 = vpop.f32.mrf.mxu0
    %v3917 = vadd.f32 %v3888, %v3916
    %v3918 = vpop.f32.mrf.mxu0
    %v3919 = vadd.f32 %v3890, %v3918
    %3920 = vmatmul.bf16.gmra.mxu0 %v2447
    %v3921 = vpop.f32.mrf.mxu0
    %v3922 = vadd.f32 %v3893, %v3921
    %v3923 = vpop.f32.mrf.mxu0
    %v3924 = vadd.f32 %v3895, %v3923
    %3925 = vdwg.mxu0
    %3926 = vmatpush.bf16.msra.mxu0 %v3239
    %3927 = vmatpush.bf16.msra.mxu0 %v3235
    %3928 = vmatpush.bf16.msra.mxu0 %v3231
    %3929 = vmatpush.bf16.msra.mxu0 %v3227
    %3930 = vmatpush.bf16.msra.mxu0 %v3223
    %3931 = vmatpush.bf16.msra.mxu0 %v3219
    %3932 = vmatpush.bf16.msra.mxu0 %v3215
    %3933 = vmatpush.bf16.msra.mxu0 %v3211
    %3934 = vmatmul.bf16.gmra.mxu0 %v2430
    %v3935 = vpop.f32.mrf.mxu0
    %v3936 = vadd.f32 %v3907, %v3935
    %v3937 = vpop.f32.mrf.mxu0
    %v3938 = vadd.f32 %v3909, %v3937
    %3939 = vmatmul.bf16.gmra.mxu0 %v2436
    %v3940 = vpop.f32.mrf.mxu0
    %v3941 = vadd.f32 %v3912, %v3940
    %v3942 = vpop.f32.mrf.mxu0
    %v3943 = vadd.f32 %v3914, %v3942
    %3944 = vmatmul.bf16.gmra.mxu0 %v2442
    %v3945 = vpop.f32.mrf.mxu0
    %v3946 = vadd.f32 %v3917, %v3945
    %v3947 = vpop.f32.mrf.mxu0
    %v3948 = vadd.f32 %v3919, %v3947
    %3949 = vmatmul.bf16.gmra.mxu0 %v2448
    %v3950 = vpop.f32.mrf.mxu0
    %v3951 = vadd.f32 %v3922, %v3950
    %v3952 = vpop.f32.mrf.mxu0
    %v3953 = vadd.f32 %v3924, %v3952
    %3954 = vdwg.mxu0
    %3955 = vmatpush.bf16.msra.mxu0 %v3080
    %3956 = vmatpush.bf16.msra.mxu0 %v3076
    %3957 = vmatpush.bf16.msra.mxu0 %v3072
    %3958 = vmatpush.bf16.msra.mxu0 %v3068
    %3959 = vmatpush.bf16.msra.mxu0 %v3064
    %3960 = vmatpush.bf16.msra.mxu0 %v3060
    %3961 = vmatpush.bf16.msra.mxu0 %v3056
    %3962 = vmatpush.bf16.msra.mxu0 %v3052
    %3963 = vmatmul.bf16.gmra.mxu0 %v2425
    %v3964 = vpop.f32.mrf.mxu0
    %v3965 = vadd.f32 %v2334, %v3964
    %v3966 = vpop.f32.mrf.mxu0
    %v3967 = vadd.f32 %v2336, %v3966
    %3968 = vmatmul.bf16.gmra.mxu0 %v2431
    %v3969 = vpop.f32.mrf.mxu0
    %v3970 = vadd.f32 %v2339, %v3969
    %v3971 = vpop.f32.mrf.mxu0
    %v3972 = vadd.f32 %v2341, %v3971
    %3973 = vmatmul.bf16.gmra.mxu0 %v2437
    %v3974 = vpop.f32.mrf.mxu0
    %v3975 = vadd.f32 %v2344, %v3974
    %v3976 = vpop.f32.mrf.mxu0
    %v3977 = vadd.f32 %v2346, %v3976
    %3978 = vmatmul.bf16.gmra.mxu0 %v2443
    %v3979 = vpop.f32.mrf.mxu0
    %v3980 = vadd.f32 %v2349, %v3979
    %v3981 = vpop.f32.mrf.mxu0
    %v3982 = vadd.f32 %v2351, %v3981
    %3983 = vdwg.mxu0
    %3984 = vmatpush.bf16.msra.mxu0 %v3112
    %3985 = vmatpush.bf16.msra.mxu0 %v3108
    %3986 = vmatpush.bf16.msra.mxu0 %v3104
    %3987 = vmatpush.bf16.msra.mxu0 %v3100
    %3988 = vmatpush.bf16.msra.mxu0 %v3096
    %3989 = vmatpush.bf16.msra.mxu0 %v3092
    %3990 = vmatpush.bf16.msra.mxu0 %v3088
    %3991 = vmatpush.bf16.msra.mxu0 %v3084
    %3992 = vmatmul.bf16.gmra.mxu0 %v2426
    %v3993 = vpop.f32.mrf.mxu0
    %v3994 = vadd.f32 %v3965, %v3993
    %v3995 = vpop.f32.mrf.mxu0
    %v3996 = vadd.f32 %v3967, %v3995
    %3997 = vmatmul.bf16.gmra.mxu0 %v2432
    %v3998 = vpop.f32.mrf.mxu0
    %v3999 = vadd.f32 %v3970, %v3998
    %v4000 = vpop.f32.mrf.mxu0
    %v4001 = vadd.f32 %v3972, %v4000
    %4002 = vmatmul.bf16.gmra.mxu0 %v2438
    %v4003 = vpop.f32.mrf.mxu0
    %v4004 = vadd.f32 %v3975, %v4003
    %v4005 = vpop.f32.mrf.mxu0
    %v4006 = vadd.f32 %v3977, %v4005
    %4007 = vmatmul.bf16.gmra.mxu0 %v2444
    %v4008 = vpop.f32.mrf.mxu0
    %v4009 = vadd.f32 %v3980, %v4008
    %v4010 = vpop.f32.mrf.mxu0
    %v4011 = vadd.f32 %v3982, %v4010
    %4012 = vdwg.mxu0
    %4013 = vmatpush.bf16.msra.mxu0 %v3144
    %4014 = vmatpush.bf16.msra.mxu0 %v3140
    %4015 = vmatpush.bf16.msra.mxu0 %v3136
    %4016 = vmatpush.bf16.msra.mxu0 %v3132
    %4017 = vmatpush.bf16.msra.mxu0 %v3128
    %4018 = vmatpush.bf16.msra.mxu0 %v3124
    %4019 = vmatpush.bf16.msra.mxu0 %v3120
    %4020 = vmatpush.bf16.msra.mxu0 %v3116
    %4021 = vmatmul.bf16.gmra.mxu0 %v2427
    %v4022 = vpop.f32.mrf.mxu0
    %v4023 = vadd.f32 %v3994, %v4022
    %v4024 = vpop.f32.mrf.mxu0
    %v4025 = vadd.f32 %v3996, %v4024
    %4026 = vmatmul.bf16.gmra.mxu0 %v2433
    %v4027 = vpop.f32.mrf.mxu0
    %v4028 = vadd.f32 %v3999, %v4027
    %v4029 = vpop.f32.mrf.mxu0
    %v4030 = vadd.f32 %v4001, %v4029
    %4031 = vmatmul.bf16.gmra.mxu0 %v2439
    %v4032 = vpop.f32.mrf.mxu0
    %v4033 = vadd.f32 %v4004, %v4032
    %v4034 = vpop.f32.mrf.mxu0
    %v4035 = vadd.f32 %v4006, %v4034
    %4036 = vmatmul.bf16.gmra.mxu0 %v2445
    %v4037 = vpop.f32.mrf.mxu0
    %v4038 = vadd.f32 %v4009, %v4037
    %v4039 = vpop.f32.mrf.mxu0
    %v4040 = vadd.f32 %v4011, %v4039
    %4041 = vdwg.mxu0
    %4042 = vmatpush.bf16.msra.mxu0 %v3176
    %4043 = vmatpush.bf16.msra.mxu0 %v3172
    %4044 = vmatpush.bf16.msra.mxu0 %v3168
    %4045 = vmatpush.bf16.msra.mxu0 %v3164
    %4046 = vmatpush.bf16.msra.mxu0 %v3160
    %4047 = vmatpush.bf16.msra.mxu0 %v3156
    %4048 = vmatpush.bf16.msra.mxu0 %v3152
    %4049 = vmatpush.bf16.msra.mxu0 %v3148
    %4050 = vmatmul.bf16.gmra.mxu0 %v2428
    %v4051 = vpop.f32.mrf.mxu0
    %v4052 = vadd.f32 %v4023, %v4051
    %v4053 = vpop.f32.mrf.mxu0
    %v4054 = vadd.f32 %v4025, %v4053
    %4055 = vmatmul.bf16.gmra.mxu0 %v2434
    %v4056 = vpop.f32.mrf.mxu0
    %v4057 = vadd.f32 %v4028, %v4056
    %v4058 = vpop.f32.mrf.mxu0
    %v4059 = vadd.f32 %v4030, %v4058
    %4060 = vmatmul.bf16.gmra.mxu0 %v2440
    %v4061 = vpop.f32.mrf.mxu0
    %v4062 = vadd.f32 %v4033, %v4061
    %v4063 = vpop.f32.mrf.mxu0
    %v4064 = vadd.f32 %v4035, %v4063
    %4065 = vmatmul.bf16.gmra.mxu0 %v2446
    %v4066 = vpop.f32.mrf.mxu0
    %v4067 = vadd.f32 %v4038, %v4066
    %v4068 = vpop.f32.mrf.mxu0
    %v4069 = vadd.f32 %v4040, %v4068
    %4070 = vdwg.mxu0
    %4071 = vmatpush.bf16.msra.mxu0 %v3208
    %4072 = vmatpush.bf16.msra.mxu0 %v3204
    %4073 = vmatpush.bf16.msra.mxu0 %v3200
    %4074 = vmatpush.bf16.msra.mxu0 %v3196
    %4075 = vmatpush.bf16.msra.mxu0 %v3192
    %4076 = vmatpush.bf16.msra.mxu0 %v3188
    %4077 = vmatpush.bf16.msra.mxu0 %v3184
    %4078 = vmatpush.bf16.msra.mxu0 %v3180
    %4079 = vmatmul.bf16.gmra.mxu0 %v2429
    %v4080 = vpop.f32.mrf.mxu0
    %v4081 = vadd.f32 %v4052, %v4080
    %v4082 = vpop.f32.mrf.mxu0
    %v4083 = vadd.f32 %v4054, %v4082
    %4084 = vmatmul.bf16.gmra.mxu0 %v2435
    %v4085 = vpop.f32.mrf.mxu0
    %v4086 = vadd.f32 %v4057, %v4085
    %v4087 = vpop.f32.mrf.mxu0
    %v4088 = vadd.f32 %v4059, %v4087
    %4089 = vmatmul.bf16.gmra.mxu0 %v2441
    %v4090 = vpop.f32.mrf.mxu0
    %v4091 = vadd.f32 %v4062, %v4090
    %v4092 = vpop.f32.mrf.mxu0
    %v4093 = vadd.f32 %v4064, %v4092
    %4094 = vmatmul.bf16.gmra.mxu0 %v2447
    %v4095 = vpop.f32.mrf.mxu0
    %v4096 = vadd.f32 %v4067, %v4095
    %v4097 = vpop.f32.mrf.mxu0
    %v4098 = vadd.f32 %v4069, %v4097
    %4099 = vdwg.mxu0
    %4100 = vmatpush.bf16.msra.mxu0 %v3240
    %4101 = vmatpush.bf16.msra.mxu0 %v3236
    %4102 = vmatpush.bf16.msra.mxu0 %v3232
    %4103 = vmatpush.bf16.msra.mxu0 %v3228
    %4104 = vmatpush.bf16.msra.mxu0 %v3224
    %4105 = vmatpush.bf16.msra.mxu0 %v3220
    %4106 = vmatpush.bf16.msra.mxu0 %v3216
    %4107 = vmatpush.bf16.msra.mxu0 %v3212
    %4108 = vmatmul.bf16.gmra.mxu0 %v2430
    %v4109 = vpop.f32.mrf.mxu0
    %v4110 = vadd.f32 %v4081, %v4109
    %v4111 = vpop.f32.mrf.mxu0
    %v4112 = vadd.f32 %v4083, %v4111
    %4113 = vmatmul.bf16.gmra.mxu0 %v2436
    %v4114 = vpop.f32.mrf.mxu0
    %v4115 = vadd.f32 %v4086, %v4114
    %v4116 = vpop.f32.mrf.mxu0
    %v4117 = vadd.f32 %v4088, %v4116
    %4118 = vmatmul.bf16.gmra.mxu0 %v2442
    %v4119 = vpop.f32.mrf.mxu0
    %v4120 = vadd.f32 %v4091, %v4119
    %v4121 = vpop.f32.mrf.mxu0
    %v4122 = vadd.f32 %v4093, %v4121
    %4123 = vmatmul.bf16.gmra.mxu0 %v2448
    %v4124 = vpop.f32.mrf.mxu0
    %v4125 = vadd.f32 %v4096, %v4124
    %v4126 = vpop.f32.mrf.mxu0
    %v4127 = vadd.f32 %v4098, %v4126
    %4128 = vdwg.mxu0
    %v4129 = vld [vmem:[%s4] sm:$0xf]
    %v4131 = vperm.slane %v4129, 0
    %v4132 = vperm.slane %v4129, 1
    %v4133 = vperm.slane %v4129, 2
    %v4134 = vperm.slane %v4129, 3
    %v4139 = vadd.f32 %v3588, %v4131
    %v4140 = vadd.f32 %v3762, %v4132
    %v4141 = vadd.f32 %v3936, %v4133
    %v4142 = vadd.f32 %v4110, %v4134
    %v4143 = vadd.f32 %v3590, %v4131
    %v4144 = vadd.f32 %v3764, %v4132
    %v4145 = vadd.f32 %v3938, %v4133
    %v4146 = vadd.f32 %v4112, %v4134
    %v4147 = vadd.f32 %v3593, %v4131
    %v4148 = vadd.f32 %v3767, %v4132
    %v4149 = vadd.f32 %v3941, %v4133
    %v4150 = vadd.f32 %v4115, %v4134
    %v4151 = vadd.f32 %v3595, %v4131
    %v4152 = vadd.f32 %v3769, %v4132
    %v4153 = vadd.f32 %v3943, %v4133
    %v4154 = vadd.f32 %v4117, %v4134
    %v4155 = vadd.f32 %v3598, %v4131
    %v4156 = vadd.f32 %v3772, %v4132
    %v4157 = vadd.f32 %v3946, %v4133
    %v4158 = vadd.f32 %v4120, %v4134
    %v4159 = vadd.f32 %v3600, %v4131
    %v4160 = vadd.f32 %v3774, %v4132
    %v4161 = vadd.f32 %v3948, %v4133
    %v4162 = vadd.f32 %v4122, %v4134
    %v4163 = vadd.f32 %v3603, %v4131
    %v4164 = vadd.f32 %v3777, %v4132
    %v4165 = vadd.f32 %v3951, %v4133
    %v4166 = vadd.f32 %v4125, %v4134
    %v4167 = vadd.f32 %v3605, %v4131
    %v4168 = vadd.f32 %v3779, %v4132
    %v4169 = vadd.f32 %v3953, %v4133
    %v4170 = vadd.f32 %v4127, %v4134
    %v4171 = vtanh.pop %v4139
    %v4172 = vtanh.pop %v4140
    %v4173 = vtanh.pop %v4141
    %v4174 = vtanh.pop %v4142
    %v4175 = vtanh.pop %v4143
    %v4176 = vtanh.pop %v4144
    %v4177 = vtanh.pop %v4145
    %v4178 = vtanh.pop %v4146
    %v4179 = vtanh.pop %v4147
    %v4180 = vtanh.pop %v4148
    %v4181 = vtanh.pop %v4149
    %v4182 = vtanh.pop %v4150
    %v4183 = vtanh.pop %v4151
    %v4184 = vtanh.pop %v4152
    %v4185 = vtanh.pop %v4153
    %v4186 = vtanh.pop %v4154
    %v4187 = vtanh.pop %v4155
    %v4188 = vtanh.pop %v4156
    %v4189 = vtanh.pop %v4157
    %v4190 = vtanh.pop %v4158
    %v4191 = vtanh.pop %v4159
    %v4192 = vtanh.pop %v4160
    %v4193 = vtanh.pop %v4161
    %v4194 = vtanh.pop %v4162
    %v4195 = vtanh.pop %v4163
    %v4196 = vtanh.pop %v4164
    %v4197 = vtanh.pop %v4165
    %v4198 = vtanh.pop %v4166
    %v4199 = vtanh.pop %v4167
    %v4200 = vtanh.pop %v4168
    %v4201 = vtanh.pop %v4169
    %v4202 = vtanh.pop %v4170
    %v4203 = vld [vmem:[#allocation11] sm:$0xf]
    %v4205 = vperm.slane %v4203, 0
    %v4206 = vperm.slane %v4203, 1
    %v4207 = vperm.slane %v4203, 2
    %v4208 = vperm.slane %v4203, 3
    %v4213 = vmul.f32 %v4171, %v4205
    %v4214 = vmul.f32 %v4172, %v4206
    %v4215 = vmul.f32 %v4173, %v4207
    %v4216 = vmul.f32 %v4174, %v4208
    %v4217 = vmul.f32 %v4175, %v4205
    %v4218 = vmul.f32 %v4176, %v4206
    %v4219 = vmul.f32 %v4177, %v4207
    %v4220 = vmul.f32 %v4178, %v4208
    %v4221 = vmul.f32 %v4179, %v4205
    %v4222 = vmul.f32 %v4180, %v4206
    %v4223 = vmul.f32 %v4181, %v4207
    %v4224 = vmul.f32 %v4182, %v4208
    %v4225 = vmul.f32 %v4183, %v4205
    %v4226 = vmul.f32 %v4184, %v4206
    %v4227 = vmul.f32 %v4185, %v4207
    %v4228 = vmul.f32 %v4186, %v4208
    %v4229 = vmul.f32 %v4187, %v4205
    %v4230 = vmul.f32 %v4188, %v4206
    %v4231 = vmul.f32 %v4189, %v4207
    %v4232 = vmul.f32 %v4190, %v4208
    %v4233 = vmul.f32 %v4191, %v4205
    %v4234 = vmul.f32 %v4192, %v4206
    %v4235 = vmul.f32 %v4193, %v4207
    %v4236 = vmul.f32 %v4194, %v4208
    %v4237 = vmul.f32 %v4195, %v4205
    %v4238 = vmul.f32 %v4196, %v4206
    %v4239 = vmul.f32 %v4197, %v4207
    %v4240 = vmul.f32 %v4198, %v4208
    %v4241 = vmul.f32 %v4199, %v4205
    %v4242 = vmul.f32 %v4200, %v4206
    %v4243 = vmul.f32 %v4201, %v4207
    %v4244 = vmul.f32 %v4202, %v4208
    %v4245 = vadd.f32 %v4213, %v4214
    %v4246 = vadd.f32 %v4245, %v4215
    %v4247 = vadd.f32 %v4246, %v4216
    %4248 = vadd.xlane.f32.xlu0 %v4247
    %v4249 = vpop.xlane.xlu0 %4248
    %v4250 = vadd.f32 %v4217, %v4218
    %v4251 = vadd.f32 %v4250, %v4219
    %v4252 = vadd.f32 %v4251, %v4220
    %4253 = vadd.xlane.f32.xlu0 %v4252
    %v4254 = vpop.xlane.xlu0 %4253
    %v4255 = vadd.f32 %v4221, %v4222
    %v4256 = vadd.f32 %v4255, %v4223
    %v4257 = vadd.f32 %v4256, %v4224
    %4258 = vadd.xlane.f32.xlu0 %v4257
    %v4259 = vpop.xlane.xlu0 %4258
    %v4260 = vadd.f32 %v4225, %v4226
    %v4261 = vadd.f32 %v4260, %v4227
    %v4262 = vadd.f32 %v4261, %v4228
    %4263 = vadd.xlane.f32.xlu0 %v4262
    %v4264 = vpop.xlane.xlu0 %4263
    %v4265 = vadd.f32 %v4229, %v4230
    %v4266 = vadd.f32 %v4265, %v4231
    %v4267 = vadd.f32 %v4266, %v4232
    %4268 = vadd.xlane.f32.xlu0 %v4267
    %v4269 = vpop.xlane.xlu0 %4268
    %v4270 = vadd.f32 %v4233, %v4234
    %v4271 = vadd.f32 %v4270, %v4235
    %v4272 = vadd.f32 %v4271, %v4236
    %4273 = vadd.xlane.f32.xlu0 %v4272
    %v4274 = vpop.xlane.xlu0 %4273
    %v4275 = vadd.f32 %v4237, %v4238
    %v4276 = vadd.f32 %v4275, %v4239
    %v4277 = vadd.f32 %v4276, %v4240
    %4278 = vadd.xlane.f32.xlu0 %v4277
    %v4279 = vpop.xlane.xlu0 %4278
    %v4280 = vadd.f32 %v4241, %v4242
    %v4281 = vadd.f32 %v4280, %v4243
    %v4282 = vadd.f32 %v4281, %v4244
    %4283 = vadd.xlane.f32.xlu0 %v4282
    %v4284 = vpop.xlane.xlu0 %4283
    %v4285 = vld [vmem:[#allocation2] sm:$0x1]
    %v4287 = vperm.slane %v4285, 0
    %v4289 = vadd.f32 %v4249, %v4287
    %v4290 = vadd.f32 %v4254, %v4287
    %v4291 = vadd.f32 %v4259, %v4287
    %v4292 = vadd.f32 %v4264, %v4287
    %v4293 = vadd.f32 %v4269, %v4287
    %v4294 = vadd.f32 %v4274, %v4287
    %v4295 = vadd.f32 %v4279, %v4287
    %v4296 = vadd.f32 %v4284, %v4287
    %vm4297 = vcmask 7168
    %v4298 = vsel %vm4297, %v4289, -inf
    %v4299 = vrot.slane %v4298, 4
    %v4300 = vmax.f32 %v4298, %v4299
    %v4301 = vrot.slane %v4300, 2
    %v4302 = vmax.f32 %v4300, %v4301
    %v4303 = vrot.slane %v4302, 1
    %v4304 = vmax.f32 %v4302, %v4303
    %v4305 = vsel %vm4297, %v4290, -inf
    %v4306 = vrot.slane %v4305, 4
    %v4307 = vmax.f32 %v4305, %v4306
    %v4308 = vrot.slane %v4307, 2
    %v4309 = vmax.f32 %v4307, %v4308
    %v4310 = vrot.slane %v4309, 1
    %v4311 = vmax.f32 %v4309, %v4310
    %v4312 = vsel %vm4297, %v4291, -inf
    %v4313 = vrot.slane %v4312, 4
    %v4314 = vmax.f32 %v4312, %v4313
    %v4315 = vrot.slane %v4314, 2
    %v4316 = vmax.f32 %v4314, %v4315
    %v4317 = vrot.slane %v4316, 1
    %v4318 = vmax.f32 %v4316, %v4317
    %v4319 = vsel %vm4297, %v4292, -inf
    %v4320 = vrot.slane %v4319, 4
    %v4321 = vmax.f32 %v4319, %v4320
    %v4322 = vrot.slane %v4321, 2
    %v4323 = vmax.f32 %v4321, %v4322
    %v4324 = vrot.slane %v4323, 1
    %v4325 = vmax.f32 %v4323, %v4324
    %v4326 = vsel %vm4297, %v4293, -inf
    %v4327 = vrot.slane %v4326, 4
    %v4328 = vmax.f32 %v4326, %v4327
    %v4329 = vrot.slane %v4328, 2
    %v4330 = vmax.f32 %v4328, %v4329
    %v4331 = vrot.slane %v4330, 1
    %v4332 = vmax.f32 %v4330, %v4331
    %v4333 = vsel %vm4297, %v4294, -inf
    %v4334 = vrot.slane %v4333, 4
    %v4335 = vmax.f32 %v4333, %v4334
    %v4336 = vrot.slane %v4335, 2
    %v4337 = vmax.f32 %v4335, %v4336
    %v4338 = vrot.slane %v4337, 1
    %v4339 = vmax.f32 %v4337, %v4338
    %v4340 = vsel %vm4297, %v4295, -inf
    %v4341 = vrot.slane %v4340, 4
    %v4342 = vmax.f32 %v4340, %v4341
    %v4343 = vrot.slane %v4342, 2
    %v4344 = vmax.f32 %v4342, %v4343
    %v4345 = vrot.slane %v4344, 1
    %v4346 = vmax.f32 %v4344, %v4345
    %v4347 = vsel %vm4297, %v4296, -inf
    %v4348 = vrot.slane %v4347, 4
    %v4349 = vmax.f32 %v4347, %v4348
    %v4350 = vrot.slane %v4349, 2
    %v4351 = vmax.f32 %v4349, %v4350
    %v4352 = vrot.slane %v4351, 1
    %v4353 = vmax.f32 %v4351, %v4352
    %v4354 = vsub.f32 %v4289, %v4304
    %v4355 = vsub.f32 %v4290, %v4311
    %v4356 = vsub.f32 %v4291, %v4318
    %v4357 = vsub.f32 %v4292, %v4325
    %v4358 = vsub.f32 %v4293, %v4332
    %v4359 = vsub.f32 %v4294, %v4339
    %v4360 = vsub.f32 %v4295, %v4346
    %v4361 = vsub.f32 %v4296, %v4353
    %v4362 = vmul.f32 %v4354, 1.442695
    %v4363 = vpow.pop %v4362
    %v4364 = vmul.f32 %v4355, 1.442695
    %v4365 = vpow.pop %v4364
    %v4366 = vmul.f32 %v4356, 1.442695
    %v4367 = vpow.pop %v4366
    %v4368 = vmul.f32 %v4357, 1.442695
    %v4369 = vpow.pop %v4368
    %v4370 = vmul.f32 %v4358, 1.442695
    %v4371 = vpow.pop %v4370
    %v4372 = vmul.f32 %v4359, 1.442695
    %v4373 = vpow.pop %v4372
    %v4374 = vmul.f32 %v4360, 1.442695
    %v4375 = vpow.pop %v4374
    %v4376 = vmul.f32 %v4361, 1.442695
    %v4377 = vpow.pop %v4376
    %v4378 = vsel %vm4297, %v4363, 0.0
    %v4379 = vrot.slane %v4378, 4
    %v4380 = vadd.f32 %v4378, %v4379
    %v4381 = vrot.slane %v4380, 2
    %v4382 = vadd.f32 %v4380, %v4381
    %v4383 = vrot.slane %v4382, 1
    %v4384 = vadd.f32 %v4382, %v4383
    %v4385 = vsel %vm4297, %v4365, 0.0
    %v4386 = vrot.slane %v4385, 4
    %v4387 = vadd.f32 %v4385, %v4386
    %v4388 = vrot.slane %v4387, 2
    %v4389 = vadd.f32 %v4387, %v4388
    %v4390 = vrot.slane %v4389, 1
    %v4391 = vadd.f32 %v4389, %v4390
    %v4392 = vsel %vm4297, %v4367, 0.0
    %v4393 = vrot.slane %v4392, 4
    %v4394 = vadd.f32 %v4392, %v4393
    %v4395 = vrot.slane %v4394, 2
    %v4396 = vadd.f32 %v4394, %v4395
    %v4397 = vrot.slane %v4396, 1
    %v4398 = vadd.f32 %v4396, %v4397
    %v4399 = vsel %vm4297, %v4369, 0.0
    %v4400 = vrot.slane %v4399, 4
    %v4401 = vadd.f32 %v4399, %v4400
    %v4402 = vrot.slane %v4401, 2
    %v4403 = vadd.f32 %v4401, %v4402
    %v4404 = vrot.slane %v4403, 1
    %v4405 = vadd.f32 %v4403, %v4404
    %v4406 = vsel %vm4297, %v4371, 0.0
    %v4407 = vrot.slane %v4406, 4
    %v4408 = vadd.f32 %v4406, %v4407
    %v4409 = vrot.slane %v4408, 2
    %v4410 = vadd.f32 %v4408, %v4409
    %v4411 = vrot.slane %v4410, 1
    %v4412 = vadd.f32 %v4410, %v4411
    %v4413 = vsel %vm4297, %v4373, 0.0
    %v4414 = vrot.slane %v4413, 4
    %v4415 = vadd.f32 %v4413, %v4414
    %v4416 = vrot.slane %v4415, 2
    %v4417 = vadd.f32 %v4415, %v4416
    %v4418 = vrot.slane %v4417, 1
    %v4419 = vadd.f32 %v4417, %v4418
    %v4420 = vsel %vm4297, %v4375, 0.0
    %v4421 = vrot.slane %v4420, 4
    %v4422 = vadd.f32 %v4420, %v4421
    %v4423 = vrot.slane %v4422, 2
    %v4424 = vadd.f32 %v4422, %v4423
    %v4425 = vrot.slane %v4424, 1
    %v4426 = vadd.f32 %v4424, %v4425
    %v4427 = vsel %vm4297, %v4377, 0.0
    %v4428 = vrot.slane %v4427, 4
    %v4429 = vadd.f32 %v4427, %v4428
    %v4430 = vrot.slane %v4429, 2
    %v4431 = vadd.f32 %v4429, %v4430
    %v4432 = vrot.slane %v4431, 1
    %v4433 = vadd.f32 %v4431, %v4432
    %v4434 = vrcp.pop %v4384
    %v4435 = vrcp.pop %v4391
    %v4436 = vrcp.pop %v4398
    %v4437 = vrcp.pop %v4405
    %v4438 = vrcp.pop %v4412
    %v4439 = vrcp.pop %v4419
    %v4440 = vrcp.pop %v4426
    %v4441 = vrcp.pop %v4433
    %v4442 = vmul.f32 %v4363, %v4434
    %v4443 = vmul.f32 %v4365, %v4435
    %v4444 = vmul.f32 %v4367, %v4436
    %v4445 = vmul.f32 %v4369, %v4437
    %v4446 = vmul.f32 %v4371, %v4438
    %v4447 = vmul.f32 %v4373, %v4439
    %v4448 = vmul.f32 %v4375, %v4440
    %v4449 = vmul.f32 %v4377, %v4441
    %v4450 = vunpack.c.l.bf16 %v145
    %v4451 = vunpack.c.h.bf16 %v145
    %v4452 = vunpack.c.l.bf16 %v146
    %v4453 = vunpack.c.h.bf16 %v146
    %v4454 = vunpack.c.l.bf16 %v147
    %v4455 = vunpack.c.h.bf16 %v147
    %v4456 = vunpack.c.l.bf16 %v148
    %v4457 = vunpack.c.h.bf16 %v148
    %v4458 = vunpack.c.l.bf16 %v149
    %v4459 = vunpack.c.h.bf16 %v149
    %v4460 = vunpack.c.l.bf16 %v150
    %v4461 = vunpack.c.h.bf16 %v150
    %v4462 = vunpack.c.l.bf16 %v151
    %v4463 = vunpack.c.h.bf16 %v151
    %v4464 = vunpack.c.l.bf16 %v152
    %v4465 = vunpack.c.h.bf16 %v152
    %v4466 = vunpack.c.l.bf16 %v153
    %v4467 = vunpack.c.h.bf16 %v153
    %v4468 = vunpack.c.l.bf16 %v154
    %v4469 = vunpack.c.h.bf16 %v154
    %v4470 = vunpack.c.l.bf16 %v155
    %v4471 = vunpack.c.h.bf16 %v155
    %v4472 = vunpack.c.l.bf16 %v156
    %v4473 = vunpack.c.h.bf16 %v156
    %v4474 = vunpack.c.l.bf16 %v157
    %v4475 = vunpack.c.h.bf16 %v157
    %v4476 = vunpack.c.l.bf16 %v158
    %v4477 = vunpack.c.h.bf16 %v158
    %v4478 = vunpack.c.l.bf16 %v159
    %v4479 = vunpack.c.h.bf16 %v159
    %v4480 = vunpack.c.l.bf16 %v160
    %v4481 = vunpack.c.h.bf16 %v160
    %v4482 = vunpack.c.l.bf16 %v161
    %v4483 = vunpack.c.h.bf16 %v161
    %v4484 = vunpack.c.l.bf16 %v162
    %v4485 = vunpack.c.h.bf16 %v162
    %v4486 = vunpack.c.l.bf16 %v163
    %v4487 = vunpack.c.h.bf16 %v163
    %v4488 = vunpack.c.l.bf16 %v164
    %v4489 = vunpack.c.h.bf16 %v164
    %v4490 = vunpack.c.l.bf16 %v165
    %v4491 = vunpack.c.h.bf16 %v165
    %v4492 = vunpack.c.l.bf16 %v166
    %v4493 = vunpack.c.h.bf16 %v166
    %v4494 = vunpack.c.l.bf16 %v167
    %v4495 = vunpack.c.h.bf16 %v167
    %v4496 = vunpack.c.l.bf16 %v168
    %v4497 = vunpack.c.h.bf16 %v168
    %v4498 = vunpack.c.l.bf16 %v169
    %v4499 = vunpack.c.h.bf16 %v169
    %v4500 = vunpack.c.l.bf16 %v170
    %v4501 = vunpack.c.h.bf16 %v170
    %v4502 = vunpack.c.l.bf16 %v171
    %v4503 = vunpack.c.h.bf16 %v171
    %v4504 = vunpack.c.l.bf16 %v172
    %v4505 = vunpack.c.h.bf16 %v172
    %v4506 = vunpack.c.l.bf16 %v173
    %v4507 = vunpack.c.h.bf16 %v173
    %v4508 = vunpack.c.l.bf16 %v174
    %v4509 = vunpack.c.h.bf16 %v174
    %v4510 = vunpack.c.l.bf16 %v175
    %v4511 = vunpack.c.h.bf16 %v175
    %v4512 = vunpack.c.l.bf16 %v176
    %v4513 = vunpack.c.h.bf16 %v176
    %v4514 = vunpack.c.l.bf16 %v177
    %v4515 = vunpack.c.h.bf16 %v177
    %v4516 = vunpack.c.l.bf16 %v178
    %v4517 = vunpack.c.h.bf16 %v178
    %v4518 = vunpack.c.l.bf16 %v179
    %v4519 = vunpack.c.h.bf16 %v179
    %v4520 = vunpack.c.l.bf16 %v180
    %v4521 = vunpack.c.h.bf16 %v180
    %v4522 = vunpack.c.l.bf16 %v181
    %v4523 = vunpack.c.h.bf16 %v181
    %v4524 = vunpack.c.l.bf16 %v182
    %v4525 = vunpack.c.h.bf16 %v182
    %v4526 = vunpack.c.l.bf16 %v183
    %v4527 = vunpack.c.h.bf16 %v183
    %v4528 = vunpack.c.l.bf16 %v184
    %v4529 = vunpack.c.h.bf16 %v184
    %v4530 = vunpack.c.l.bf16 %v185
    %v4531 = vunpack.c.h.bf16 %v185
    %v4532 = vunpack.c.l.bf16 %v186
    %v4533 = vunpack.c.h.bf16 %v186
    %v4534 = vunpack.c.l.bf16 %v187
    %v4535 = vunpack.c.h.bf16 %v187
    %v4536 = vunpack.c.l.bf16 %v188
    %v4537 = vunpack.c.h.bf16 %v188
    %v4538 = vunpack.c.l.bf16 %v189
    %v4539 = vunpack.c.h.bf16 %v189
    %v4540 = vunpack.c.l.bf16 %v190
    %v4541 = vunpack.c.h.bf16 %v190
    %v4542 = vunpack.c.l.bf16 %v191
    %v4543 = vunpack.c.h.bf16 %v191
    %v4544 = vunpack.c.l.bf16 %v192
    %v4545 = vunpack.c.h.bf16 %v192
    %4547 = vset.pattern.permute.xlu0 0
    %4548 = vperm.xlu0 %4547, %v4442
    %v4549 = vpop.permute.xlu0 %4548
    %4552 = vset.pattern.permute.xlu0 0
    %4553 = vperm.xlu0 %4552, %v4443
    %v4554 = vpop.permute.xlu0 %4553
    %4557 = vset.pattern.permute.xlu0 0
    %4558 = vperm.xlu0 %4557, %v4444
    %v4559 = vpop.permute.xlu0 %4558
    %4562 = vset.pattern.permute.xlu0 0
    %4563 = vperm.xlu0 %4562, %v4445
    %v4564 = vpop.permute.xlu0 %4563
    %4567 = vset.pattern.permute.xlu0 0
    %4568 = vperm.xlu0 %4567, %v4446
    %v4569 = vpop.permute.xlu0 %4568
    %4572 = vset.pattern.permute.xlu0 0
    %4573 = vperm.xlu0 %4572, %v4447
    %v4574 = vpop.permute.xlu0 %4573
    %4577 = vset.pattern.permute.xlu0 0
    %4578 = vperm.xlu0 %4577, %v4448
    %v4579 = vpop.permute.xlu0 %4578
    %4582 = vset.pattern.permute.xlu0 0
    %4583 = vperm.xlu0 %4582, %v4449
    %v4584 = vpop.permute.xlu0 %4583
    %v4586 = vmul.f32 %v4549, %v4450
    %v4587 = vmul.f32 %v4549, %v4451
    %v4588 = vmul.f32 %v4549, %v4452
    %v4589 = vmul.f32 %v4549, %v4453
    %v4590 = vmul.f32 %v4549, %v4454
    %v4591 = vmul.f32 %v4549, %v4455
    %v4592 = vmul.f32 %v4554, %v4456
    %v4593 = vmul.f32 %v4554, %v4457
    %v4594 = vmul.f32 %v4554, %v4458
    %v4595 = vmul.f32 %v4554, %v4459
    %v4596 = vmul.f32 %v4554, %v4460
    %v4597 = vmul.f32 %v4554, %v4461
    %v4598 = vmul.f32 %v4559, %v4462
    %v4599 = vmul.f32 %v4559, %v4463
    %v4600 = vmul.f32 %v4559, %v4464
    %v4601 = vmul.f32 %v4559, %v4465
    %v4602 = vmul.f32 %v4559, %v4466
    %v4603 = vmul.f32 %v4559, %v4467
    %v4604 = vmul.f32 %v4564, %v4468
    %v4605 = vmul.f32 %v4564, %v4469
    %v4606 = vmul.f32 %v4564, %v4470
    %v4607 = vmul.f32 %v4564, %v4471
    %v4608 = vmul.f32 %v4564, %v4472
    %v4609 = vmul.f32 %v4564, %v4473
    %v4610 = vmul.f32 %v4569, %v4474
    %v4611 = vmul.f32 %v4569, %v4475
    %v4612 = vmul.f32 %v4569, %v4476
    %v4613 = vmul.f32 %v4569, %v4477
    %v4614 = vmul.f32 %v4569, %v4478
    %v4615 = vmul.f32 %v4569, %v4479
    %v4616 = vmul.f32 %v4574, %v4480
    %v4617 = vmul.f32 %v4574, %v4481
    %v4618 = vmul.f32 %v4574, %v4482
    %v4619 = vmul.f32 %v4574, %v4483
    %v4620 = vmul.f32 %v4574, %v4484
    %v4621 = vmul.f32 %v4574, %v4485
    %v4622 = vmul.f32 %v4579, %v4486
    %v4623 = vmul.f32 %v4579, %v4487
    %v4624 = vmul.f32 %v4579, %v4488
    %v4625 = vmul.f32 %v4579, %v4489
    %v4626 = vmul.f32 %v4579, %v4490
    %v4627 = vmul.f32 %v4579, %v4491
    %v4628 = vmul.f32 %v4584, %v4492
    %v4629 = vmul.f32 %v4584, %v4493
    %v4630 = vmul.f32 %v4584, %v4494
    %v4631 = vmul.f32 %v4584, %v4495
    %v4632 = vmul.f32 %v4584, %v4496
    %v4633 = vmul.f32 %v4584, %v4497
    %v4634 = vrot.slane %v4586, 4
    %v4635 = vadd.f32 %v4586, %v4634
    %v4636 = vrot.slane %v4635, 2
    %v4637 = vadd.f32 %v4635, %v4636
    %v4638 = vrot.slane %v4637, 1
    %v4639 = vadd.f32 %v4637, %v4638
    %v4640 = vrot.slane %v4587, 4
    %v4641 = vadd.f32 %v4587, %v4640
    %v4642 = vrot.slane %v4641, 2
    %v4643 = vadd.f32 %v4641, %v4642
    %v4644 = vrot.slane %v4643, 1
    %v4645 = vadd.f32 %v4643, %v4644
    %v4646 = vrot.slane %v4588, 4
    %v4647 = vadd.f32 %v4588, %v4646
    %v4648 = vrot.slane %v4647, 2
    %v4649 = vadd.f32 %v4647, %v4648
    %v4650 = vrot.slane %v4649, 1
    %v4651 = vadd.f32 %v4649, %v4650
    %v4652 = vrot.slane %v4589, 4
    %v4653 = vadd.f32 %v4589, %v4652
    %v4654 = vrot.slane %v4653, 2
    %v4655 = vadd.f32 %v4653, %v4654
    %v4656 = vrot.slane %v4655, 1
    %v4657 = vadd.f32 %v4655, %v4656
    %v4658 = vrot.slane %v4590, 4
    %v4659 = vadd.f32 %v4590, %v4658
    %v4660 = vrot.slane %v4659, 2
    %v4661 = vadd.f32 %v4659, %v4660
    %v4662 = vrot.slane %v4661, 1
    %v4663 = vadd.f32 %v4661, %v4662
    %v4664 = vrot.slane %v4591, 4
    %v4665 = vadd.f32 %v4591, %v4664
    %v4666 = vrot.slane %v4665, 2
    %v4667 = vadd.f32 %v4665, %v4666
    %v4668 = vrot.slane %v4667, 1
    %v4669 = vadd.f32 %v4667, %v4668
    %v4670 = vrot.slane %v4592, 4
    %v4671 = vadd.f32 %v4592, %v4670
    %v4672 = vrot.slane %v4671, 2
    %v4673 = vadd.f32 %v4671, %v4672
    %v4674 = vrot.slane %v4673, 1
    %v4675 = vadd.f32 %v4673, %v4674
    %v4676 = vrot.slane %v4593, 4
    %v4677 = vadd.f32 %v4593, %v4676
    %v4678 = vrot.slane %v4677, 2
    %v4679 = vadd.f32 %v4677, %v4678
    %v4680 = vrot.slane %v4679, 1
    %v4681 = vadd.f32 %v4679, %v4680
    %v4682 = vrot.slane %v4594, 4
    %v4683 = vadd.f32 %v4594, %v4682
    %v4684 = vrot.slane %v4683, 2
    %v4685 = vadd.f32 %v4683, %v4684
    %v4686 = vrot.slane %v4685, 1
    %v4687 = vadd.f32 %v4685, %v4686
    %v4688 = vrot.slane %v4595, 4
    %v4689 = vadd.f32 %v4595, %v4688
    %v4690 = vrot.slane %v4689, 2
    %v4691 = vadd.f32 %v4689, %v4690
    %v4692 = vrot.slane %v4691, 1
    %v4693 = vadd.f32 %v4691, %v4692
    %v4694 = vrot.slane %v4596, 4
    %v4695 = vadd.f32 %v4596, %v4694
    %v4696 = vrot.slane %v4695, 2
    %v4697 = vadd.f32 %v4695, %v4696
    %v4698 = vrot.slane %v4697, 1
    %v4699 = vadd.f32 %v4697, %v4698
    %v4700 = vrot.slane %v4597, 4
    %v4701 = vadd.f32 %v4597, %v4700
    %v4702 = vrot.slane %v4701, 2
    %v4703 = vadd.f32 %v4701, %v4702
    %v4704 = vrot.slane %v4703, 1
    %v4705 = vadd.f32 %v4703, %v4704
    %v4706 = vrot.slane %v4598, 4
    %v4707 = vadd.f32 %v4598, %v4706
    %v4708 = vrot.slane %v4707, 2
    %v4709 = vadd.f32 %v4707, %v4708
    %v4710 = vrot.slane %v4709, 1
    %v4711 = vadd.f32 %v4709, %v4710
    %v4712 = vrot.slane %v4599, 4
    %v4713 = vadd.f32 %v4599, %v4712
    %v4714 = vrot.slane %v4713, 2
    %v4715 = vadd.f32 %v4713, %v4714
    %v4716 = vrot.slane %v4715, 1
    %v4717 = vadd.f32 %v4715, %v4716
    %v4718 = vrot.slane %v4600, 4
    %v4719 = vadd.f32 %v4600, %v4718
    %v4720 = vrot.slane %v4719, 2
    %v4721 = vadd.f32 %v4719, %v4720
    %v4722 = vrot.slane %v4721, 1
    %v4723 = vadd.f32 %v4721, %v4722
    %v4724 = vrot.slane %v4601, 4
    %v4725 = vadd.f32 %v4601, %v4724
    %v4726 = vrot.slane %v4725, 2
    %v4727 = vadd.f32 %v4725, %v4726
    %v4728 = vrot.slane %v4727, 1
    %v4729 = vadd.f32 %v4727, %v4728
    %v4730 = vrot.slane %v4602, 4
    %v4731 = vadd.f32 %v4602, %v4730
    %v4732 = vrot.slane %v4731, 2
    %v4733 = vadd.f32 %v4731, %v4732
    %v4734 = vrot.slane %v4733, 1
    %v4735 = vadd.f32 %v4733, %v4734
    %v4736 = vrot.slane %v4603, 4
    %v4737 = vadd.f32 %v4603, %v4736
    %v4738 = vrot.slane %v4737, 2
    %v4739 = vadd.f32 %v4737, %v4738
    %v4740 = vrot.slane %v4739, 1
    %v4741 = vadd.f32 %v4739, %v4740
    %v4742 = vrot.slane %v4604, 4
    %v4743 = vadd.f32 %v4604, %v4742
    %v4744 = vrot.slane %v4743, 2
    %v4745 = vadd.f32 %v4743, %v4744
    %v4746 = vrot.slane %v4745, 1
    %v4747 = vadd.f32 %v4745, %v4746
    %v4748 = vrot.slane %v4605, 4
    %v4749 = vadd.f32 %v4605, %v4748
    %v4750 = vrot.slane %v4749, 2
    %v4751 = vadd.f32 %v4749, %v4750
    %v4752 = vrot.slane %v4751, 1
    %v4753 = vadd.f32 %v4751, %v4752
    %v4754 = vrot.slane %v4606, 4
    %v4755 = vadd.f32 %v4606, %v4754
    %v4756 = vrot.slane %v4755, 2
    %v4757 = vadd.f32 %v4755, %v4756
    %v4758 = vrot.slane %v4757, 1
    %v4759 = vadd.f32 %v4757, %v4758
    %v4760 = vrot.slane %v4607, 4
    %v4761 = vadd.f32 %v4607, %v4760
    %v4762 = vrot.slane %v4761, 2
    %v4763 = vadd.f32 %v4761, %v4762
    %v4764 = vrot.slane %v4763, 1
    %v4765 = vadd.f32 %v4763, %v4764
    %v4766 = vrot.slane %v4608, 4
    %v4767 = vadd.f32 %v4608, %v4766
    %v4768 = vrot.slane %v4767, 2
    %v4769 = vadd.f32 %v4767, %v4768
    %v4770 = vrot.slane %v4769, 1
    %v4771 = vadd.f32 %v4769, %v4770
    %v4772 = vrot.slane %v4609, 4
    %v4773 = vadd.f32 %v4609, %v4772
    %v4774 = vrot.slane %v4773, 2
    %v4775 = vadd.f32 %v4773, %v4774
    %v4776 = vrot.slane %v4775, 1
    %v4777 = vadd.f32 %v4775, %v4776
    %v4778 = vrot.slane %v4610, 4
    %v4779 = vadd.f32 %v4610, %v4778
    %v4780 = vrot.slane %v4779, 2
    %v4781 = vadd.f32 %v4779, %v4780
    %v4782 = vrot.slane %v4781, 1
    %v4783 = vadd.f32 %v4781, %v4782
    %v4784 = vrot.slane %v4611, 4
    %v4785 = vadd.f32 %v4611, %v4784
    %v4786 = vrot.slane %v4785, 2
    %v4787 = vadd.f32 %v4785, %v4786
    %v4788 = vrot.slane %v4787, 1
    %v4789 = vadd.f32 %v4787, %v4788
    %v4790 = vrot.slane %v4612, 4
    %v4791 = vadd.f32 %v4612, %v4790
    %v4792 = vrot.slane %v4791, 2
    %v4793 = vadd.f32 %v4791, %v4792
    %v4794 = vrot.slane %v4793, 1
    %v4795 = vadd.f32 %v4793, %v4794
    %v4796 = vrot.slane %v4613, 4
    %v4797 = vadd.f32 %v4613, %v4796
    %v4798 = vrot.slane %v4797, 2
    %v4799 = vadd.f32 %v4797, %v4798
    %v4800 = vrot.slane %v4799, 1
    %v4801 = vadd.f32 %v4799, %v4800
    %v4802 = vrot.slane %v4614, 4
    %v4803 = vadd.f32 %v4614, %v4802
    %v4804 = vrot.slane %v4803, 2
    %v4805 = vadd.f32 %v4803, %v4804
    %v4806 = vrot.slane %v4805, 1
    %v4807 = vadd.f32 %v4805, %v4806
    %v4808 = vrot.slane %v4615, 4
    %v4809 = vadd.f32 %v4615, %v4808
    %v4810 = vrot.slane %v4809, 2
    %v4811 = vadd.f32 %v4809, %v4810
    %v4812 = vrot.slane %v4811, 1
    %v4813 = vadd.f32 %v4811, %v4812
    %v4814 = vrot.slane %v4616, 4
    %v4815 = vadd.f32 %v4616, %v4814
    %v4816 = vrot.slane %v4815, 2
    %v4817 = vadd.f32 %v4815, %v4816
    %v4818 = vrot.slane %v4817, 1
    %v4819 = vadd.f32 %v4817, %v4818
    %v4820 = vrot.slane %v4617, 4
    %v4821 = vadd.f32 %v4617, %v4820
    %v4822 = vrot.slane %v4821, 2
    %v4823 = vadd.f32 %v4821, %v4822
    %v4824 = vrot.slane %v4823, 1
    %v4825 = vadd.f32 %v4823, %v4824
    %v4826 = vrot.slane %v4618, 4
    %v4827 = vadd.f32 %v4618, %v4826
    %v4828 = vrot.slane %v4827, 2
    %v4829 = vadd.f32 %v4827, %v4828
    %v4830 = vrot.slane %v4829, 1
    %v4831 = vadd.f32 %v4829, %v4830
    %v4832 = vrot.slane %v4619, 4
    %v4833 = vadd.f32 %v4619, %v4832
    %v4834 = vrot.slane %v4833, 2
    %v4835 = vadd.f32 %v4833, %v4834
    %v4836 = vrot.slane %v4835, 1
    %v4837 = vadd.f32 %v4835, %v4836
    %v4838 = vrot.slane %v4620, 4
    %v4839 = vadd.f32 %v4620, %v4838
    %v4840 = vrot.slane %v4839, 2
    %v4841 = vadd.f32 %v4839, %v4840
    %v4842 = vrot.slane %v4841, 1
    %v4843 = vadd.f32 %v4841, %v4842
    %v4844 = vrot.slane %v4621, 4
    %v4845 = vadd.f32 %v4621, %v4844
    %v4846 = vrot.slane %v4845, 2
    %v4847 = vadd.f32 %v4845, %v4846
    %v4848 = vrot.slane %v4847, 1
    %v4849 = vadd.f32 %v4847, %v4848
    %v4850 = vrot.slane %v4622, 4
    %v4851 = vadd.f32 %v4622, %v4850
    %v4852 = vrot.slane %v4851, 2
    %v4853 = vadd.f32 %v4851, %v4852
    %v4854 = vrot.slane %v4853, 1
    %v4855 = vadd.f32 %v4853, %v4854
    %v4856 = vrot.slane %v4623, 4
    %v4857 = vadd.f32 %v4623, %v4856
    %v4858 = vrot.slane %v4857, 2
    %v4859 = vadd.f32 %v4857, %v4858
    %v4860 = vrot.slane %v4859, 1
    %v4861 = vadd.f32 %v4859, %v4860
    %v4862 = vrot.slane %v4624, 4
    %v4863 = vadd.f32 %v4624, %v4862
    %v4864 = vrot.slane %v4863, 2
    %v4865 = vadd.f32 %v4863, %v4864
    %v4866 = vrot.slane %v4865, 1
    %v4867 = vadd.f32 %v4865, %v4866
    %v4868 = vrot.slane %v4625, 4
    %v4869 = vadd.f32 %v4625, %v4868
    %v4870 = vrot.slane %v4869, 2
    %v4871 = vadd.f32 %v4869, %v4870
    %v4872 = vrot.slane %v4871, 1
    %v4873 = vadd.f32 %v4871, %v4872
    %v4874 = vrot.slane %v4626, 4
    %v4875 = vadd.f32 %v4626, %v4874
    %v4876 = vrot.slane %v4875, 2
    %v4877 = vadd.f32 %v4875, %v4876
    %v4878 = vrot.slane %v4877, 1
    %v4879 = vadd.f32 %v4877, %v4878
    %v4880 = vrot.slane %v4627, 4
    %v4881 = vadd.f32 %v4627, %v4880
    %v4882 = vrot.slane %v4881, 2
    %v4883 = vadd.f32 %v4881, %v4882
    %v4884 = vrot.slane %v4883, 1
    %v4885 = vadd.f32 %v4883, %v4884
    %v4886 = vrot.slane %v4628, 4
    %v4887 = vadd.f32 %v4628, %v4886
    %v4888 = vrot.slane %v4887, 2
    %v4889 = vadd.f32 %v4887, %v4888
    %v4890 = vrot.slane %v4889, 1
    %v4891 = vadd.f32 %v4889, %v4890
    %v4892 = vrot.slane %v4629, 4
    %v4893 = vadd.f32 %v4629, %v4892
    %v4894 = vrot.slane %v4893, 2
    %v4895 = vadd.f32 %v4893, %v4894
    %v4896 = vrot.slane %v4895, 1
    %v4897 = vadd.f32 %v4895, %v4896
    %v4898 = vrot.slane %v4630, 4
    %v4899 = vadd.f32 %v4630, %v4898
    %v4900 = vrot.slane %v4899, 2
    %v4901 = vadd.f32 %v4899, %v4900
    %v4902 = vrot.slane %v4901, 1
    %v4903 = vadd.f32 %v4901, %v4902
    %v4904 = vrot.slane %v4631, 4
    %v4905 = vadd.f32 %v4631, %v4904
    %v4906 = vrot.slane %v4905, 2
    %v4907 = vadd.f32 %v4905, %v4906
    %v4908 = vrot.slane %v4907, 1
    %v4909 = vadd.f32 %v4907, %v4908
    %v4910 = vrot.slane %v4632, 4
    %v4911 = vadd.f32 %v4632, %v4910
    %v4912 = vrot.slane %v4911, 2
    %v4913 = vadd.f32 %v4911, %v4912
    %v4914 = vrot.slane %v4913, 1
    %v4915 = vadd.f32 %v4913, %v4914
    %v4916 = vrot.slane %v4633, 4
    %v4917 = vadd.f32 %v4633, %v4916
    %v4918 = vrot.slane %v4917, 2
    %v4919 = vadd.f32 %v4917, %v4918
    %v4920 = vrot.slane %v4919, 1
    %v4921 = vadd.f32 %v4919, %v4920
    %v4922 = vmul.f32 %v4549, %v4498
    %v4923 = vmul.f32 %v4549, %v4499
    %v4924 = vmul.f32 %v4549, %v4500
    %v4925 = vmul.f32 %v4549, %v4501
    %v4926 = vmul.f32 %v4549, %v4502
    %v4927 = vmul.f32 %v4549, %v4503
    %v4928 = vmul.f32 %v4554, %v4504
    %v4929 = vmul.f32 %v4554, %v4505
    %v4930 = vmul.f32 %v4554, %v4506
    %v4931 = vmul.f32 %v4554, %v4507
    %v4932 = vmul.f32 %v4554, %v4508
    %v4933 = vmul.f32 %v4554, %v4509
    %v4934 = vmul.f32 %v4559, %v4510
    %v4935 = vmul.f32 %v4559, %v4511
    %v4936 = vmul.f32 %v4559, %v4512
    %v4937 = vmul.f32 %v4559, %v4513
    %v4938 = vmul.f32 %v4559, %v4514
    %v4939 = vmul.f32 %v4559, %v4515
    %v4940 = vmul.f32 %v4564, %v4516
    %v4941 = vmul.f32 %v4564, %v4517
    %v4942 = vmul.f32 %v4564, %v4518
    %v4943 = vmul.f32 %v4564, %v4519
    %v4944 = vmul.f32 %v4564, %v4520
    %v4945 = vmul.f32 %v4564, %v4521
    %v4946 = vmul.f32 %v4569, %v4522
    %v4947 = vmul.f32 %v4569, %v4523
    %v4948 = vmul.f32 %v4569, %v4524
    %v4949 = vmul.f32 %v4569, %v4525
    %v4950 = vmul.f32 %v4569, %v4526
    %v4951 = vmul.f32 %v4569, %v4527
    %v4952 = vmul.f32 %v4574, %v4528
    %v4953 = vmul.f32 %v4574, %v4529
    %v4954 = vmul.f32 %v4574, %v4530
    %v4955 = vmul.f32 %v4574, %v4531
    %v4956 = vmul.f32 %v4574, %v4532
    %v4957 = vmul.f32 %v4574, %v4533
    %v4958 = vmul.f32 %v4579, %v4534
    %v4959 = vmul.f32 %v4579, %v4535
    %v4960 = vmul.f32 %v4579, %v4536
    %v4961 = vmul.f32 %v4579, %v4537
    %v4962 = vmul.f32 %v4579, %v4538
    %v4963 = vmul.f32 %v4579, %v4539
    %v4964 = vmul.f32 %v4584, %v4540
    %v4965 = vmul.f32 %v4584, %v4541
    %v4966 = vmul.f32 %v4584, %v4542
    %v4967 = vmul.f32 %v4584, %v4543
    %v4968 = vmul.f32 %v4584, %v4544
    %v4969 = vmul.f32 %v4584, %v4545
    %v4970 = vrot.slane %v4922, 4
    %v4971 = vadd.f32 %v4922, %v4970
    %v4972 = vrot.slane %v4971, 2
    %v4973 = vadd.f32 %v4971, %v4972
    %v4974 = vrot.slane %v4973, 1
    %v4975 = vadd.f32 %v4973, %v4974
    %v4976 = vrot.slane %v4923, 4
    %v4977 = vadd.f32 %v4923, %v4976
    %v4978 = vrot.slane %v4977, 2
    %v4979 = vadd.f32 %v4977, %v4978
    %v4980 = vrot.slane %v4979, 1
    %v4981 = vadd.f32 %v4979, %v4980
    %v4982 = vrot.slane %v4924, 4
    %v4983 = vadd.f32 %v4924, %v4982
    %v4984 = vrot.slane %v4983, 2
    %v4985 = vadd.f32 %v4983, %v4984
    %v4986 = vrot.slane %v4985, 1
    %v4987 = vadd.f32 %v4985, %v4986
    %v4988 = vrot.slane %v4925, 4
    %v4989 = vadd.f32 %v4925, %v4988
    %v4990 = vrot.slane %v4989, 2
    %v4991 = vadd.f32 %v4989, %v4990
    %v4992 = vrot.slane %v4991, 1
    %v4993 = vadd.f32 %v4991, %v4992
    %v4994 = vrot.slane %v4926, 4
    %v4995 = vadd.f32 %v4926, %v4994
    %v4996 = vrot.slane %v4995, 2
    %v4997 = vadd.f32 %v4995, %v4996
    %v4998 = vrot.slane %v4997, 1
    %v4999 = vadd.f32 %v4997, %v4998
    %v5000 = vrot.slane %v4927, 4
    %v5001 = vadd.f32 %v4927, %v5000
    %v5002 = vrot.slane %v5001, 2
    %v5003 = vadd.f32 %v5001, %v5002
    %v5004 = vrot.slane %v5003, 1
    %v5005 = vadd.f32 %v5003, %v5004
    %v5006 = vrot.slane %v4928, 4
    %v5007 = vadd.f32 %v4928, %v5006
    %v5008 = vrot.slane %v5007, 2
    %v5009 = vadd.f32 %v5007, %v5008
    %v5010 = vrot.slane %v5009, 1
    %v5011 = vadd.f32 %v5009, %v5010
    %v5012 = vrot.slane %v4929, 4
    %v5013 = vadd.f32 %v4929, %v5012
    %v5014 = vrot.slane %v5013, 2
    %v5015 = vadd.f32 %v5013, %v5014
    %v5016 = vrot.slane %v5015, 1
    %v5017 = vadd.f32 %v5015, %v5016
    %v5018 = vrot.slane %v4930, 4
    %v5019 = vadd.f32 %v4930, %v5018
    %v5020 = vrot.slane %v5019, 2
    %v5021 = vadd.f32 %v5019, %v5020
    %v5022 = vrot.slane %v5021, 1
    %v5023 = vadd.f32 %v5021, %v5022
    %v5024 = vrot.slane %v4931, 4
    %v5025 = vadd.f32 %v4931, %v5024
    %v5026 = vrot.slane %v5025, 2
    %v5027 = vadd.f32 %v5025, %v5026
    %v5028 = vrot.slane %v5027, 1
    %v5029 = vadd.f32 %v5027, %v5028
    %v5030 = vrot.slane %v4932, 4
    %v5031 = vadd.f32 %v4932, %v5030
    %v5032 = vrot.slane %v5031, 2
    %v5033 = vadd.f32 %v5031, %v5032
    %v5034 = vrot.slane %v5033, 1
    %v5035 = vadd.f32 %v5033, %v5034
    %v5036 = vrot.slane %v4933, 4
    %v5037 = vadd.f32 %v4933, %v5036
    %v5038 = vrot.slane %v5037, 2
    %v5039 = vadd.f32 %v5037, %v5038
    %v5040 = vrot.slane %v5039, 1
    %v5041 = vadd.f32 %v5039, %v5040
    %v5042 = vrot.slane %v4934, 4
    %v5043 = vadd.f32 %v4934, %v5042
    %v5044 = vrot.slane %v5043, 2
    %v5045 = vadd.f32 %v5043, %v5044
    %v5046 = vrot.slane %v5045, 1
    %v5047 = vadd.f32 %v5045, %v5046
    %v5048 = vrot.slane %v4935, 4
    %v5049 = vadd.f32 %v4935, %v5048
    %v5050 = vrot.slane %v5049, 2
    %v5051 = vadd.f32 %v5049, %v5050
    %v5052 = vrot.slane %v5051, 1
    %v5053 = vadd.f32 %v5051, %v5052
    %v5054 = vrot.slane %v4936, 4
    %v5055 = vadd.f32 %v4936, %v5054
    %v5056 = vrot.slane %v5055, 2
    %v5057 = vadd.f32 %v5055, %v5056
    %v5058 = vrot.slane %v5057, 1
    %v5059 = vadd.f32 %v5057, %v5058
    %v5060 = vrot.slane %v4937, 4
    %v5061 = vadd.f32 %v4937, %v5060
    %v5062 = vrot.slane %v5061, 2
    %v5063 = vadd.f32 %v5061, %v5062
    %v5064 = vrot.slane %v5063, 1
    %v5065 = vadd.f32 %v5063, %v5064
    %v5066 = vrot.slane %v4938, 4
    %v5067 = vadd.f32 %v4938, %v5066
    %v5068 = vrot.slane %v5067, 2
    %v5069 = vadd.f32 %v5067, %v5068
    %v5070 = vrot.slane %v5069, 1
    %v5071 = vadd.f32 %v5069, %v5070
    %v5072 = vrot.slane %v4939, 4
    %v5073 = vadd.f32 %v4939, %v5072
    %v5074 = vrot.slane %v5073, 2
    %v5075 = vadd.f32 %v5073, %v5074
    %v5076 = vrot.slane %v5075, 1
    %v5077 = vadd.f32 %v5075, %v5076
    %v5078 = vrot.slane %v4940, 4
    %v5079 = vadd.f32 %v4940, %v5078
    %v5080 = vrot.slane %v5079, 2
    %v5081 = vadd.f32 %v5079, %v5080
    %v5082 = vrot.slane %v5081, 1
    %v5083 = vadd.f32 %v5081, %v5082
    %v5084 = vrot.slane %v4941, 4
    %v5085 = vadd.f32 %v4941, %v5084
    %v5086 = vrot.slane %v5085, 2
    %v5087 = vadd.f32 %v5085, %v5086
    %v5088 = vrot.slane %v5087, 1
    %v5089 = vadd.f32 %v5087, %v5088
    %v5090 = vrot.slane %v4942, 4
    %v5091 = vadd.f32 %v4942, %v5090
    %v5092 = vrot.slane %v5091, 2
    %v5093 = vadd.f32 %v5091, %v5092
    %v5094 = vrot.slane %v5093, 1
    %v5095 = vadd.f32 %v5093, %v5094
    %v5096 = vrot.slane %v4943, 4
    %v5097 = vadd.f32 %v4943, %v5096
    %v5098 = vrot.slane %v5097, 2
    %v5099 = vadd.f32 %v5097, %v5098
    %v5100 = vrot.slane %v5099, 1
    %v5101 = vadd.f32 %v5099, %v5100
    %v5102 = vrot.slane %v4944, 4
    %v5103 = vadd.f32 %v4944, %v5102
    %v5104 = vrot.slane %v5103, 2
    %v5105 = vadd.f32 %v5103, %v5104
    %v5106 = vrot.slane %v5105, 1
    %v5107 = vadd.f32 %v5105, %v5106
    %v5108 = vrot.slane %v4945, 4
    %v5109 = vadd.f32 %v4945, %v5108
    %v5110 = vrot.slane %v5109, 2
    %v5111 = vadd.f32 %v5109, %v5110
    %v5112 = vrot.slane %v5111, 1
    %v5113 = vadd.f32 %v5111, %v5112
    %v5114 = vrot.slane %v4946, 4
    %v5115 = vadd.f32 %v4946, %v5114
    %v5116 = vrot.slane %v5115, 2
    %v5117 = vadd.f32 %v5115, %v5116
    %v5118 = vrot.slane %v5117, 1
    %v5119 = vadd.f32 %v5117, %v5118
    %v5120 = vrot.slane %v4947, 4
    %v5121 = vadd.f32 %v4947, %v5120
    %v5122 = vrot.slane %v5121, 2
    %v5123 = vadd.f32 %v5121, %v5122
    %v5124 = vrot.slane %v5123, 1
    %v5125 = vadd.f32 %v5123, %v5124
    %v5126 = vrot.slane %v4948, 4
    %v5127 = vadd.f32 %v4948, %v5126
    %v5128 = vrot.slane %v5127, 2
    %v5129 = vadd.f32 %v5127, %v5128
    %v5130 = vrot.slane %v5129, 1
    %v5131 = vadd.f32 %v5129, %v5130
    %v5132 = vrot.slane %v4949, 4
    %v5133 = vadd.f32 %v4949, %v5132
    %v5134 = vrot.slane %v5133, 2
    %v5135 = vadd.f32 %v5133, %v5134
    %v5136 = vrot.slane %v5135, 1
    %v5137 = vadd.f32 %v5135, %v5136
    %v5138 = vrot.slane %v4950, 4
    %v5139 = vadd.f32 %v4950, %v5138
    %v5140 = vrot.slane %v5139, 2
    %v5141 = vadd.f32 %v5139, %v5140
    %v5142 = vrot.slane %v5141, 1
    %v5143 = vadd.f32 %v5141, %v5142
    %v5144 = vrot.slane %v4951, 4
    %v5145 = vadd.f32 %v4951, %v5144
    %v5146 = vrot.slane %v5145, 2
    %v5147 = vadd.f32 %v5145, %v5146
    %v5148 = vrot.slane %v5147, 1
    %v5149 = vadd.f32 %v5147, %v5148
    %v5150 = vrot.slane %v4952, 4
    %v5151 = vadd.f32 %v4952, %v5150
    %v5152 = vrot.slane %v5151, 2
    %v5153 = vadd.f32 %v5151, %v5152
    %v5154 = vrot.slane %v5153, 1
    %v5155 = vadd.f32 %v5153, %v5154
    %v5156 = vrot.slane %v4953, 4
    %v5157 = vadd.f32 %v4953, %v5156
    %v5158 = vrot.slane %v5157, 2
    %v5159 = vadd.f32 %v5157, %v5158
    %v5160 = vrot.slane %v5159, 1
    %v5161 = vadd.f32 %v5159, %v5160
    %v5162 = vrot.slane %v4954, 4
    %v5163 = vadd.f32 %v4954, %v5162
    %v5164 = vrot.slane %v5163, 2
    %v5165 = vadd.f32 %v5163, %v5164
    %v5166 = vrot.slane %v5165, 1
    %v5167 = vadd.f32 %v5165, %v5166
    %v5168 = vrot.slane %v4955, 4
    %v5169 = vadd.f32 %v4955, %v5168
    %v5170 = vrot.slane %v5169, 2
    %v5171 = vadd.f32 %v5169, %v5170
    %v5172 = vrot.slane %v5171, 1
    %v5173 = vadd.f32 %v5171, %v5172
    %v5174 = vrot.slane %v4956, 4
    %v5175 = vadd.f32 %v4956, %v5174
    %v5176 = vrot.slane %v5175, 2
    %v5177 = vadd.f32 %v5175, %v5176
    %v5178 = vrot.slane %v5177, 1
    %v5179 = vadd.f32 %v5177, %v5178
    %v5180 = vrot.slane %v4957, 4
    %v5181 = vadd.f32 %v4957, %v5180
    %v5182 = vrot.slane %v5181, 2
    %v5183 = vadd.f32 %v5181, %v5182
    %v5184 = vrot.slane %v5183, 1
    %v5185 = vadd.f32 %v5183, %v5184
    %v5186 = vrot.slane %v4958, 4
    %v5187 = vadd.f32 %v4958, %v5186
    %v5188 = vrot.slane %v5187, 2
    %v5189 = vadd.f32 %v5187, %v5188
    %v5190 = vrot.slane %v5189, 1
    %v5191 = vadd.f32 %v5189, %v5190
    %v5192 = vrot.slane %v4959, 4
    %v5193 = vadd.f32 %v4959, %v5192
    %v5194 = vrot.slane %v5193, 2
    %v5195 = vadd.f32 %v5193, %v5194
    %v5196 = vrot.slane %v5195, 1
    %v5197 = vadd.f32 %v5195, %v5196
    %v5198 = vrot.slane %v4960, 4
    %v5199 = vadd.f32 %v4960, %v5198
    %v5200 = vrot.slane %v5199, 2
    %v5201 = vadd.f32 %v5199, %v5200
    %v5202 = vrot.slane %v5201, 1
    %v5203 = vadd.f32 %v5201, %v5202
    %v5204 = vrot.slane %v4961, 4
    %v5205 = vadd.f32 %v4961, %v5204
    %v5206 = vrot.slane %v5205, 2
    %v5207 = vadd.f32 %v5205, %v5206
    %v5208 = vrot.slane %v5207, 1
    %v5209 = vadd.f32 %v5207, %v5208
    %v5210 = vrot.slane %v4962, 4
    %v5211 = vadd.f32 %v4962, %v5210
    %v5212 = vrot.slane %v5211, 2
    %v5213 = vadd.f32 %v5211, %v5212
    %v5214 = vrot.slane %v5213, 1
    %v5215 = vadd.f32 %v5213, %v5214
    %v5216 = vrot.slane %v4963, 4
    %v5217 = vadd.f32 %v4963, %v5216
    %v5218 = vrot.slane %v5217, 2
    %v5219 = vadd.f32 %v5217, %v5218
    %v5220 = vrot.slane %v5219, 1
    %v5221 = vadd.f32 %v5219, %v5220
    %v5222 = vrot.slane %v4964, 4
    %v5223 = vadd.f32 %v4964, %v5222
    %v5224 = vrot.slane %v5223, 2
    %v5225 = vadd.f32 %v5223, %v5224
    %v5226 = vrot.slane %v5225, 1
    %v5227 = vadd.f32 %v5225, %v5226
    %v5228 = vrot.slane %v4965, 4
    %v5229 = vadd.f32 %v4965, %v5228
    %v5230 = vrot.slane %v5229, 2
    %v5231 = vadd.f32 %v5229, %v5230
    %v5232 = vrot.slane %v5231, 1
    %v5233 = vadd.f32 %v5231, %v5232
    %v5234 = vrot.slane %v4966, 4
    %v5235 = vadd.f32 %v4966, %v5234
    %v5236 = vrot.slane %v5235, 2
    %v5237 = vadd.f32 %v5235, %v5236
    %v5238 = vrot.slane %v5237, 1
    %v5239 = vadd.f32 %v5237, %v5238
    %v5240 = vrot.slane %v4967, 4
    %v5241 = vadd.f32 %v4967, %v5240
    %v5242 = vrot.slane %v5241, 2
    %v5243 = vadd.f32 %v5241, %v5242
    %v5244 = vrot.slane %v5243, 1
    %v5245 = vadd.f32 %v5243, %v5244
    %v5246 = vrot.slane %v4968, 4
    %v5247 = vadd.f32 %v4968, %v5246
    %v5248 = vrot.slane %v5247, 2
    %v5249 = vadd.f32 %v5247, %v5248
    %v5250 = vrot.slane %v5249, 1
    %v5251 = vadd.f32 %v5249, %v5250
    %v5252 = vrot.slane %v4969, 4
    %v5253 = vadd.f32 %v4969, %v5252
    %v5254 = vrot.slane %v5253, 2
    %v5255 = vadd.f32 %v5253, %v5254
    %v5256 = vrot.slane %v5255, 1
    %v5257 = vadd.f32 %v5255, %v5256
    %v5258 = vld [vmem:[#allocation12] sm:$0xff]
    %v5259 = vld [vmem:[#allocation12 + $0x8] sm:$0xff]
    %v5260 = vld [vmem:[#allocation12 + $0x10] sm:$0xff]
    %v5261 = vld [vmem:[#allocation12 + $0x18] sm:$0xff]
    %v5262 = vld [vmem:[#allocation12 + $0x20] sm:$0xff]
    %v5263 = vld [vmem:[#allocation12 + $0x28] sm:$0xff]
    %v5264 = vld [vmem:[#allocation12 + $0x30] sm:$0xff]
    %v5265 = vld [vmem:[#allocation12 + $0x38] sm:$0xff]
    %v5266 = vld [vmem:[#allocation12 + $0x40] sm:$0xff]
    %v5267 = vld [vmem:[#allocation12 + $0x48] sm:$0xff]
    %v5268 = vld [vmem:[#allocation12 + $0x50] sm:$0xff]
    %v5269 = vld [vmem:[#allocation12 + $0x58] sm:$0xff]
    %v5270 = vld [vmem:[#allocation12 + $0x60] sm:$0xff]
    %v5271 = vld [vmem:[#allocation12 + $0x68] sm:$0xff]
    %v5272 = vld [vmem:[#allocation12 + $0x70] sm:$0xff]
    %v5273 = vld [vmem:[#allocation12 + $0x78] sm:$0xff]
    %v5274 = vld [vmem:[#allocation12 + $0x80] sm:$0xff]
    %v5275 = vld [vmem:[#allocation12 + $0x88] sm:$0xff]
    %v5276 = vld [vmem:[#allocation12 + $0x90] sm:$0xff]
    %v5277 = vld [vmem:[#allocation12 + $0x98] sm:$0xff]
    %v5278 = vld [vmem:[#allocation12 + $0xa0] sm:$0xff]
    %v5279 = vld [vmem:[#allocation12 + $0xa8] sm:$0xff]
    %v5280 = vld [vmem:[#allocation12 + $0xb0] sm:$0xff]
    %v5281 = vld [vmem:[#allocation12 + $0xb8] sm:$0xff]
    %v5282 = vld [vmem:[#allocation12 + $0xc0] sm:$0xff]
    %v5283 = vld [vmem:[#allocation12 + $0xc8] sm:$0xff]
    %v5284 = vld [vmem:[#allocation12 + $0xd0] sm:$0xff]
    %v5285 = vld [vmem:[#allocation12 + $0xd8] sm:$0xff]
    %v5286 = vld [vmem:[#allocation12 + $0xe0] sm:$0xff]
    %v5287 = vld [vmem:[#allocation12 + $0xe8] sm:$0xff]
    %v5288 = vld [vmem:[#allocation12 + $0xf0] sm:$0xff]
    %v5289 = vld [vmem:[#allocation12 + $0xf8] sm:$0xff]
    %v5290 = vld [vmem:[#allocation12 + $0x100] sm:$0xff]
    %v5291 = vld [vmem:[#allocation12 + $0x108] sm:$0xff]
    %v5292 = vld [vmem:[#allocation12 + $0x110] sm:$0xff]
    %v5293 = vld [vmem:[#allocation12 + $0x118] sm:$0xff]
    %v5294 = vld [vmem:[#allocation12 + $0x120] sm:$0xff]
    %v5295 = vld [vmem:[#allocation12 + $0x128] sm:$0xff]
    %v5296 = vld [vmem:[#allocation12 + $0x130] sm:$0xff]
    %v5297 = vld [vmem:[#allocation12 + $0x138] sm:$0xff]
    %v5298 = vld [vmem:[#allocation12 + $0x140] sm:$0xff]
    %v5299 = vld [vmem:[#allocation12 + $0x148] sm:$0xff]
    %v5300 = vld [vmem:[#allocation12 + $0x150] sm:$0xff]
    %v5301 = vld [vmem:[#allocation12 + $0x158] sm:$0xff]
    %v5302 = vld [vmem:[#allocation12 + $0x160] sm:$0xff]
    %v5303 = vld [vmem:[#allocation12 + $0x168] sm:$0xff]
    %v5304 = vld [vmem:[#allocation12 + $0x170] sm:$0xff]
    %v5305 = vld [vmem:[#allocation12 + $0x178] sm:$0xff]
    %v5306 = vld [vmem:[#allocation12 + $0x180] sm:$0xff]
    %v5307 = vld [vmem:[#allocation12 + $0x188] sm:$0xff]
    %v5308 = vld [vmem:[#allocation12 + $0x190] sm:$0xff]
    %v5309 = vld [vmem:[#allocation12 + $0x198] sm:$0xff]
    %v5310 = vld [vmem:[#allocation12 + $0x1a0] sm:$0xff]
    %v5311 = vld [vmem:[#allocation12 + $0x1a8] sm:$0xff]
    %v5312 = vld [vmem:[#allocation12 + $0x1b0] sm:$0xff]
    %v5313 = vld [vmem:[#allocation12 + $0x1b8] sm:$0xff]
    %v5314 = vld [vmem:[#allocation12 + $0x1c0] sm:$0xff]
    %v5315 = vld [vmem:[#allocation12 + $0x1c8] sm:$0xff]
    %v5316 = vld [vmem:[#allocation12 + $0x1d0] sm:$0xff]
    %v5317 = vld [vmem:[#allocation12 + $0x1d8] sm:$0xff]
    %v5318 = vld [vmem:[#allocation12 + $0x1e0] sm:$0xff]
    %v5319 = vld [vmem:[#allocation12 + $0x1e8] sm:$0xff]
    %v5320 = vld [vmem:[#allocation12 + $0x1f0] sm:$0xff]
    %v5321 = vld [vmem:[#allocation12 + $0x1f8] sm:$0xff]
    %v5322 = vld [vmem:[#allocation12 + $0x200] sm:$0xff]
    %v5323 = vld [vmem:[#allocation12 + $0x208] sm:$0xff]
    %v5324 = vld [vmem:[#allocation12 + $0x210] sm:$0xff]
    %v5325 = vld [vmem:[#allocation12 + $0x218] sm:$0xff]
    %v5326 = vld [vmem:[#allocation12 + $0x220] sm:$0xff]
    %v5327 = vld [vmem:[#allocation12 + $0x228] sm:$0xff]
    %v5328 = vld [vmem:[#allocation12 + $0x230] sm:$0xff]
    %v5329 = vld [vmem:[#allocation12 + $0x238] sm:$0xff]
    %v5330 = vld [vmem:[#allocation12 + $0x240] sm:$0xff]
    %v5331 = vld [vmem:[#allocation12 + $0x248] sm:$0xff]
    %v5332 = vld [vmem:[#allocation12 + $0x250] sm:$0xff]
    %v5333 = vld [vmem:[#allocation12 + $0x258] sm:$0xff]
    %v5334 = vld [vmem:[#allocation12 + $0x260] sm:$0xff]
    %v5335 = vld [vmem:[#allocation12 + $0x268] sm:$0xff]
    %v5336 = vld [vmem:[#allocation12 + $0x270] sm:$0xff]
    %v5337 = vld [vmem:[#allocation12 + $0x278] sm:$0xff]
    %v5338 = vld [vmem:[#allocation12 + $0x280] sm:$0xff]
    %v5339 = vld [vmem:[#allocation12 + $0x288] sm:$0xff]
    %v5340 = vld [vmem:[#allocation12 + $0x290] sm:$0xff]
    %v5341 = vld [vmem:[#allocation12 + $0x298] sm:$0xff]
    %v5342 = vld [vmem:[#allocation12 + $0x2a0] sm:$0xff]
    %v5343 = vld [vmem:[#allocation12 + $0x2a8] sm:$0xff]
    %v5344 = vld [vmem:[#allocation12 + $0x2b0] sm:$0xff]
    %v5345 = vld [vmem:[#allocation12 + $0x2b8] sm:$0xff]
    %v5346 = vld [vmem:[#allocation12 + $0x2c0] sm:$0xff]
    %v5347 = vld [vmem:[#allocation12 + $0x2c8] sm:$0xff]
    %v5348 = vld [vmem:[#allocation12 + $0x2d0] sm:$0xff]
    %v5349 = vld [vmem:[#allocation12 + $0x2d8] sm:$0xff]
    %v5350 = vld [vmem:[#allocation12 + $0x2e0] sm:$0xff]
    %v5351 = vld [vmem:[#allocation12 + $0x2e8] sm:$0xff]
    %v5352 = vld [vmem:[#allocation12 + $0x2f0] sm:$0xff]
    %v5353 = vld [vmem:[#allocation12 + $0x2f8] sm:$0xff]
    %v5354 = vld [vmem:[#allocation14] sm:$0xff]
    %v5355 = vld [vmem:[#allocation14 + $0x8] sm:$0xff]
    %v5356 = vld [vmem:[#allocation14 + $0x10] sm:$0xff]
    %v5357 = vld [vmem:[#allocation14 + $0x18] sm:$0xff]
    %v5358 = vld [vmem:[#allocation14 + $0x20] sm:$0xff]
    %v5359 = vld [vmem:[#allocation14 + $0x28] sm:$0xff]
    %v5360 = vld [vmem:[#allocation14 + $0x30] sm:$0xff]
    %v5361 = vld [vmem:[#allocation14 + $0x38] sm:$0xff]
    %v5362 = vld [vmem:[#allocation14 + $0x40] sm:$0xff]
    %v5363 = vld [vmem:[#allocation14 + $0x48] sm:$0xff]
    %v5364 = vld [vmem:[#allocation14 + $0x50] sm:$0xff]
    %v5365 = vld [vmem:[#allocation14 + $0x58] sm:$0xff]
    %v5366 = vld [vmem:[#allocation14 + $0x60] sm:$0xff]
    %v5367 = vld [vmem:[#allocation14 + $0x68] sm:$0xff]
    %v5368 = vld [vmem:[#allocation14 + $0x70] sm:$0xff]
    %v5369 = vld [vmem:[#allocation14 + $0x78] sm:$0xff]
    %v5370 = vld [vmem:[#allocation14 + $0x80] sm:$0xff]
    %v5371 = vld [vmem:[#allocation14 + $0x88] sm:$0xff]
    %v5372 = vld [vmem:[#allocation14 + $0x90] sm:$0xff]
    %v5373 = vld [vmem:[#allocation14 + $0x98] sm:$0xff]
    %v5374 = vld [vmem:[#allocation14 + $0xa0] sm:$0xff]
    %v5375 = vld [vmem:[#allocation14 + $0xa8] sm:$0xff]
    %v5376 = vld [vmem:[#allocation14 + $0xb0] sm:$0xff]
    %v5377 = vld [vmem:[#allocation14 + $0xb8] sm:$0xff]
    %v5378 = vld [vmem:[#allocation14 + $0xc0] sm:$0xff]
    %v5379 = vld [vmem:[#allocation14 + $0xc8] sm:$0xff]
    %v5380 = vld [vmem:[#allocation14 + $0xd0] sm:$0xff]
    %v5381 = vld [vmem:[#allocation14 + $0xd8] sm:$0xff]
    %v5382 = vld [vmem:[#allocation14 + $0xe0] sm:$0xff]
    %v5383 = vld [vmem:[#allocation14 + $0xe8] sm:$0xff]
    %v5384 = vld [vmem:[#allocation14 + $0xf0] sm:$0xff]
    %v5385 = vld [vmem:[#allocation14 + $0xf8] sm:$0xff]
    %v5386 = vld [vmem:[#allocation14 + $0x100] sm:$0xff]
    %v5387 = vld [vmem:[#allocation14 + $0x108] sm:$0xff]
    %v5388 = vld [vmem:[#allocation14 + $0x110] sm:$0xff]
    %v5389 = vld [vmem:[#allocation14 + $0x118] sm:$0xff]
    %v5390 = vld [vmem:[#allocation14 + $0x120] sm:$0xff]
    %v5391 = vld [vmem:[#allocation14 + $0x128] sm:$0xff]
    %v5392 = vld [vmem:[#allocation14 + $0x130] sm:$0xff]
    %v5393 = vld [vmem:[#allocation14 + $0x138] sm:$0xff]
    %v5394 = vld [vmem:[#allocation14 + $0x140] sm:$0xff]
    %v5395 = vld [vmem:[#allocation14 + $0x148] sm:$0xff]
    %v5396 = vld [vmem:[#allocation14 + $0x150] sm:$0xff]
    %v5397 = vld [vmem:[#allocation14 + $0x158] sm:$0xff]
    %v5398 = vld [vmem:[#allocation14 + $0x160] sm:$0xff]
    %v5399 = vld [vmem:[#allocation14 + $0x168] sm:$0xff]
    %v5400 = vld [vmem:[#allocation14 + $0x170] sm:$0xff]
    %v5401 = vld [vmem:[#allocation14 + $0x178] sm:$0xff]
    %v5402 = vld [vmem:[#allocation14 + $0x180] sm:$0xff]
    %v5403 = vld [vmem:[#allocation14 + $0x188] sm:$0xff]
    %v5404 = vld [vmem:[#allocation14 + $0x190] sm:$0xff]
    %v5405 = vld [vmem:[#allocation14 + $0x198] sm:$0xff]
    %v5406 = vld [vmem:[#allocation14 + $0x1a0] sm:$0xff]
    %v5407 = vld [vmem:[#allocation14 + $0x1a8] sm:$0xff]
    %v5408 = vld [vmem:[#allocation14 + $0x1b0] sm:$0xff]
    %v5409 = vld [vmem:[#allocation14 + $0x1b8] sm:$0xff]
    %v5410 = vld [vmem:[#allocation14 + $0x1c0] sm:$0xff]
    %v5411 = vld [vmem:[#allocation14 + $0x1c8] sm:$0xff]
    %v5412 = vld [vmem:[#allocation14 + $0x1d0] sm:$0xff]
    %v5413 = vld [vmem:[#allocation14 + $0x1d8] sm:$0xff]
    %v5414 = vld [vmem:[#allocation14 + $0x1e0] sm:$0xff]
    %v5415 = vld [vmem:[#allocation14 + $0x1e8] sm:$0xff]
    %v5416 = vld [vmem:[#allocation14 + $0x1f0] sm:$0xff]
    %v5417 = vld [vmem:[#allocation14 + $0x1f8] sm:$0xff]
    %v5418 = vld [vmem:[#allocation14 + $0x200] sm:$0xff]
    %v5419 = vld [vmem:[#allocation14 + $0x208] sm:$0xff]
    %v5420 = vld [vmem:[#allocation14 + $0x210] sm:$0xff]
    %v5421 = vld [vmem:[#allocation14 + $0x218] sm:$0xff]
    %v5422 = vld [vmem:[#allocation14 + $0x220] sm:$0xff]
    %v5423 = vld [vmem:[#allocation14 + $0x228] sm:$0xff]
    %v5424 = vld [vmem:[#allocation14 + $0x230] sm:$0xff]
    %v5425 = vld [vmem:[#allocation14 + $0x238] sm:$0xff]
    %v5426 = vld [vmem:[#allocation14 + $0x240] sm:$0xff]
    %v5427 = vld [vmem:[#allocation14 + $0x248] sm:$0xff]
    %v5428 = vld [vmem:[#allocation14 + $0x250] sm:$0xff]
    %v5429 = vld [vmem:[#allocation14 + $0x258] sm:$0xff]
    %v5430 = vld [vmem:[#allocation14 + $0x260] sm:$0xff]
    %v5431 = vld [vmem:[#allocation14 + $0x268] sm:$0xff]
    %v5432 = vld [vmem:[#allocation14 + $0x270] sm:$0xff]
    %v5433 = vld [vmem:[#allocation14 + $0x278] sm:$0xff]
    %v5434 = vld [vmem:[#allocation14 + $0x280] sm:$0xff]
    %v5435 = vld [vmem:[#allocation14 + $0x288] sm:$0xff]
    %v5436 = vld [vmem:[#allocation14 + $0x290] sm:$0xff]
    %v5437 = vld [vmem:[#allocation14 + $0x298] sm:$0xff]
    %v5438 = vld [vmem:[#allocation14 + $0x2a0] sm:$0xff]
    %v5439 = vld [vmem:[#allocation14 + $0x2a8] sm:$0xff]
    %v5440 = vld [vmem:[#allocation14 + $0x2b0] sm:$0xff]
    %v5441 = vld [vmem:[#allocation14 + $0x2b8] sm:$0xff]
    %v5442 = vld [vmem:[#allocation14 + $0x2c0] sm:$0xff]
    %v5443 = vld [vmem:[#allocation14 + $0x2c8] sm:$0xff]
    %v5444 = vld [vmem:[#allocation14 + $0x2d0] sm:$0xff]
    %v5445 = vld [vmem:[#allocation14 + $0x2d8] sm:$0xff]
    %v5446 = vld [vmem:[#allocation14 + $0x2e0] sm:$0xff]
    %v5447 = vld [vmem:[#allocation14 + $0x2e8] sm:$0xff]
    %v5448 = vld [vmem:[#allocation14 + $0x2f0] sm:$0xff]
    %v5449 = vld [vmem:[#allocation14 + $0x2f8] sm:$0xff]
    %vm5498 = vcmask 1041409
    %v5499 = vsel %vm5498, %v5011, %v4975
    %vm5500 = vcmask 1042434
    %v5501 = vsel %vm5500, %v5047, %v5499
    %vm5502 = vcmask 1043459
    %v5503 = vsel %vm5502, %v5083, %v5501
    %vm5504 = vcmask 1044484
    %v5505 = vsel %vm5504, %v5119, %v5503
    %vm5506 = vcmask 1045509
    %v5507 = vsel %vm5506, %v5155, %v5505
    %vm5508 = vcmask 1046534
    %v5509 = vsel %vm5508, %v5191, %v5507
    %vm5510 = vcmask 1047559
    %v5511 = vsel %vm5510, %v5227, %v5509
    %v5512 = vsel %vm5498, %v5017, %v4981
    %v5513 = vsel %vm5500, %v5053, %v5512
    %v5514 = vsel %vm5502, %v5089, %v5513
    %v5515 = vsel %vm5504, %v5125, %v5514
    %v5516 = vsel %vm5506, %v5161, %v5515
    %v5517 = vsel %vm5508, %v5197, %v5516
    %v5518 = vsel %vm5510, %v5233, %v5517
    %v5519 = vsel %vm5498, %v5023, %v4987
    %v5520 = vsel %vm5500, %v5059, %v5519
    %v5521 = vsel %vm5502, %v5095, %v5520
    %v5522 = vsel %vm5504, %v5131, %v5521
    %v5523 = vsel %vm5506, %v5167, %v5522
    %v5524 = vsel %vm5508, %v5203, %v5523
    %v5525 = vsel %vm5510, %v5239, %v5524
    %v5526 = vsel %vm5498, %v5029, %v4993
    %v5527 = vsel %vm5500, %v5065, %v5526
    %v5528 = vsel %vm5502, %v5101, %v5527
    %v5529 = vsel %vm5504, %v5137, %v5528
    %v5530 = vsel %vm5506, %v5173, %v5529
    %v5531 = vsel %vm5508, %v5209, %v5530
    %v5532 = vsel %vm5510, %v5245, %v5531
    %v5533 = vsel %vm5498, %v5035, %v4999
    %v5534 = vsel %vm5500, %v5071, %v5533
    %v5535 = vsel %vm5502, %v5107, %v5534
    %v5536 = vsel %vm5504, %v5143, %v5535
    %v5537 = vsel %vm5506, %v5179, %v5536
    %v5538 = vsel %vm5508, %v5215, %v5537
    %v5539 = vsel %vm5510, %v5251, %v5538
    %v5540 = vsel %vm5498, %v5041, %v5005
    %v5541 = vsel %vm5500, %v5077, %v5540
    %v5542 = vsel %vm5502, %v5113, %v5541
    %v5543 = vsel %vm5504, %v5149, %v5542
    %v5544 = vsel %vm5506, %v5185, %v5543
    %v5545 = vsel %vm5508, %v5221, %v5544
    %v5546 = vsel %vm5510, %v5257, %v5545
    %5553 = vmatpush.msra.mxu0 %v5369
    %5554 = vmatpush.msra.mxu0 %v5368
    %5555 = vmatpush.msra.mxu0 %v5367
    %5556 = vmatpush.msra.mxu0 %v5366
    %5557 = vmatpush.msra.mxu0 %v5365
    %5558 = vmatpush.msra.mxu0 %v5364
    %5559 = vmatpush.msra.mxu0 %v5363
    %5560 = vmatpush.msra.mxu0 %v5362
    %5561 = vmatpush.msra.mxu0 %v5361
    %5562 = vmatpush.msra.mxu0 %v5360
    %5563 = vmatpush.msra.mxu0 %v5359
    %5564 = vmatpush.msra.mxu0 %v5358
    %5565 = vmatpush.msra.mxu0 %v5357
    %5566 = vmatpush.msra.mxu0 %v5356
    %5567 = vmatpush.msra.mxu0 %v5355
    %5568 = vmatpush.msra.mxu0 %v5354
    %5569 = vmatmul.f32.gmra.mxu0 %v5511
    %v5570 = vpop.f32.mrf.mxu0
    %v5571 = vadd.f32 0.0, %v5570
    %5572 = vdwg.mxu0
    %5573 = vmatpush.msra.mxu0 %v5385
    %5574 = vmatpush.msra.mxu0 %v5384
    %5575 = vmatpush.msra.mxu0 %v5383
    %5576 = vmatpush.msra.mxu0 %v5382
    %5577 = vmatpush.msra.mxu0 %v5381
    %5578 = vmatpush.msra.mxu0 %v5380
    %5579 = vmatpush.msra.mxu0 %v5379
    %5580 = vmatpush.msra.mxu0 %v5378
    %5581 = vmatpush.msra.mxu0 %v5377
    %5582 = vmatpush.msra.mxu0 %v5376
    %5583 = vmatpush.msra.mxu0 %v5375
    %5584 = vmatpush.msra.mxu0 %v5374
    %5585 = vmatpush.msra.mxu0 %v5373
    %5586 = vmatpush.msra.mxu0 %v5372
    %5587 = vmatpush.msra.mxu0 %v5371
    %5588 = vmatpush.msra.mxu0 %v5370
    %5589 = vmatmul.f32.gmra.mxu0 %v5518
    %v5590 = vpop.f32.mrf.mxu0
    %v5591 = vadd.f32 %v5571, %v5590
    %5592 = vdwg.mxu0
    %5593 = vmatpush.msra.mxu0 %v5401
    %5594 = vmatpush.msra.mxu0 %v5400
    %5595 = vmatpush.msra.mxu0 %v5399
    %5596 = vmatpush.msra.mxu0 %v5398
    %5597 = vmatpush.msra.mxu0 %v5397
    %5598 = vmatpush.msra.mxu0 %v5396
    %5599 = vmatpush.msra.mxu0 %v5395
    %5600 = vmatpush.msra.mxu0 %v5394
    %5601 = vmatpush.msra.mxu0 %v5393
    %5602 = vmatpush.msra.mxu0 %v5392
    %5603 = vmatpush.msra.mxu0 %v5391
    %5604 = vmatpush.msra.mxu0 %v5390
    %5605 = vmatpush.msra.mxu0 %v5389
    %5606 = vmatpush.msra.mxu0 %v5388
    %5607 = vmatpush.msra.mxu0 %v5387
    %5608 = vmatpush.msra.mxu0 %v5386
    %5609 = vmatmul.f32.gmra.mxu0 %v5525
    %v5610 = vpop.f32.mrf.mxu0
    %v5611 = vadd.f32 %v5591, %v5610
    %5612 = vdwg.mxu0
    %5613 = vmatpush.msra.mxu0 %v5417
    %5614 = vmatpush.msra.mxu0 %v5416
    %5615 = vmatpush.msra.mxu0 %v5415
    %5616 = vmatpush.msra.mxu0 %v5414
    %5617 = vmatpush.msra.mxu0 %v5413
    %5618 = vmatpush.msra.mxu0 %v5412
    %5619 = vmatpush.msra.mxu0 %v5411
    %5620 = vmatpush.msra.mxu0 %v5410
    %5621 = vmatpush.msra.mxu0 %v5409
    %5622 = vmatpush.msra.mxu0 %v5408
    %5623 = vmatpush.msra.mxu0 %v5407
    %5624 = vmatpush.msra.mxu0 %v5406
    %5625 = vmatpush.msra.mxu0 %v5405
    %5626 = vmatpush.msra.mxu0 %v5404
    %5627 = vmatpush.msra.mxu0 %v5403
    %5628 = vmatpush.msra.mxu0 %v5402
    %5629 = vmatmul.f32.gmra.mxu0 %v5532
    %v5630 = vpop.f32.mrf.mxu0
    %v5631 = vadd.f32 %v5611, %v5630
    %5632 = vdwg.mxu0
    %5633 = vmatpush.msra.mxu0 %v5433
    %5634 = vmatpush.msra.mxu0 %v5432
    %5635 = vmatpush.msra.mxu0 %v5431
    %5636 = vmatpush.msra.mxu0 %v5430
    %5637 = vmatpush.msra.mxu0 %v5429
    %5638 = vmatpush.msra.mxu0 %v5428
    %5639 = vmatpush.msra.mxu0 %v5427
    %5640 = vmatpush.msra.mxu0 %v5426
    %5641 = vmatpush.msra.mxu0 %v5425
    %5642 = vmatpush.msra.mxu0 %v5424
    %5643 = vmatpush.msra.mxu0 %v5423
    %5644 = vmatpush.msra.mxu0 %v5422
    %5645 = vmatpush.msra.mxu0 %v5421
    %5646 = vmatpush.msra.mxu0 %v5420
    %5647 = vmatpush.msra.mxu0 %v5419
    %5648 = vmatpush.msra.mxu0 %v5418
    %5649 = vmatmul.f32.gmra.mxu0 %v5539
    %v5650 = vpop.f32.mrf.mxu0
    %v5651 = vadd.f32 %v5631, %v5650
    %5652 = vdwg.mxu0
    %5653 = vmatpush.msra.mxu0 %v5449
    %5654 = vmatpush.msra.mxu0 %v5448
    %5655 = vmatpush.msra.mxu0 %v5447
    %5656 = vmatpush.msra.mxu0 %v5446
    %5657 = vmatpush.msra.mxu0 %v5445
    %5658 = vmatpush.msra.mxu0 %v5444
    %5659 = vmatpush.msra.mxu0 %v5443
    %5660 = vmatpush.msra.mxu0 %v5442
    %5661 = vmatpush.msra.mxu0 %v5441
    %5662 = vmatpush.msra.mxu0 %v5440
    %5663 = vmatpush.msra.mxu0 %v5439
    %5664 = vmatpush.msra.mxu0 %v5438
    %5665 = vmatpush.msra.mxu0 %v5437
    %5666 = vmatpush.msra.mxu0 %v5436
    %5667 = vmatpush.msra.mxu0 %v5435
    %5668 = vmatpush.msra.mxu0 %v5434
    %5669 = vmatmul.f32.gmra.mxu0 %v5546
    %v5670 = vpop.f32.mrf.mxu0
    %v5671 = vadd.f32 %v5651, %v5670
    %5672 = vdwg.mxu0
    %v5721 = vsel %vm5498, %v4675, %v4639
    %v5722 = vsel %vm5500, %v4711, %v5721
    %v5723 = vsel %vm5502, %v4747, %v5722
    %v5724 = vsel %vm5504, %v4783, %v5723
    %v5725 = vsel %vm5506, %v4819, %v5724
    %v5726 = vsel %vm5508, %v4855, %v5725
    %v5727 = vsel %vm5510, %v4891, %v5726
    %v5728 = vsel %vm5498, %v4681, %v4645
    %v5729 = vsel %vm5500, %v4717, %v5728
    %v5730 = vsel %vm5502, %v4753, %v5729
    %v5731 = vsel %vm5504, %v4789, %v5730
    %v5732 = vsel %vm5506, %v4825, %v5731
    %v5733 = vsel %vm5508, %v4861, %v5732
    %v5734 = vsel %vm5510, %v4897, %v5733
    %v5735 = vsel %vm5498, %v4687, %v4651
    %v5736 = vsel %vm5500, %v4723, %v5735
    %v5737 = vsel %vm5502, %v4759, %v5736
    %v5738 = vsel %vm5504, %v4795, %v5737
    %v5739 = vsel %vm5506, %v4831, %v5738
    %v5740 = vsel %vm5508, %v4867, %v5739
    %v5741 = vsel %vm5510, %v4903, %v5740
    %v5742 = vsel %vm5498, %v4693, %v4657
    %v5743 = vsel %vm5500, %v4729, %v5742
    %v5744 = vsel %vm5502, %v4765, %v5743
    %v5745 = vsel %vm5504, %v4801, %v5744
    %v5746 = vsel %vm5506, %v4837, %v5745
    %v5747 = vsel %vm5508, %v4873, %v5746
    %v5748 = vsel %vm5510, %v4909, %v5747
    %v5749 = vsel %vm5498, %v4699, %v4663
    %v5750 = vsel %vm5500, %v4735, %v5749
    %v5751 = vsel %vm5502, %v4771, %v5750
    %v5752 = vsel %vm5504, %v4807, %v5751
    %v5753 = vsel %vm5506, %v4843, %v5752
    %v5754 = vsel %vm5508, %v4879, %v5753
    %v5755 = vsel %vm5510, %v4915, %v5754
    %v5756 = vsel %vm5498, %v4705, %v4669
    %v5757 = vsel %vm5500, %v4741, %v5756
    %v5758 = vsel %vm5502, %v4777, %v5757
    %v5759 = vsel %vm5504, %v4813, %v5758
    %v5760 = vsel %vm5506, %v4849, %v5759
    %v5761 = vsel %vm5508, %v4885, %v5760
    %v5762 = vsel %vm5510, %v4921, %v5761
    %5769 = vmatpush.msra.mxu0 %v5273
    %5770 = vmatpush.msra.mxu0 %v5272
    %5771 = vmatpush.msra.mxu0 %v5271
    %5772 = vmatpush.msra.mxu0 %v5270
    %5773 = vmatpush.msra.mxu0 %v5269
    %5774 = vmatpush.msra.mxu0 %v5268
    %5775 = vmatpush.msra.mxu0 %v5267
    %5776 = vmatpush.msra.mxu0 %v5266
    %5777 = vmatpush.msra.mxu0 %v5265
    %5778 = vmatpush.msra.mxu0 %v5264
    %5779 = vmatpush.msra.mxu0 %v5263
    %5780 = vmatpush.msra.mxu0 %v5262
    %5781 = vmatpush.msra.mxu0 %v5261
    %5782 = vmatpush.msra.mxu0 %v5260
    %5783 = vmatpush.msra.mxu0 %v5259
    %5784 = vmatpush.msra.mxu0 %v5258
    %5785 = vmatmul.f32.gmra.mxu0 %v5727
    %v5786 = vpop.f32.mrf.mxu0
    %v5787 = vadd.f32 %v5671, %v5786
    %5788 = vdwg.mxu0
    %5789 = vmatpush.msra.mxu0 %v5289
    %5790 = vmatpush.msra.mxu0 %v5288
    %5791 = vmatpush.msra.mxu0 %v5287
    %5792 = vmatpush.msra.mxu0 %v5286
    %5793 = vmatpush.msra.mxu0 %v5285
    %5794 = vmatpush.msra.mxu0 %v5284
    %5795 = vmatpush.msra.mxu0 %v5283
    %5796 = vmatpush.msra.mxu0 %v5282
    %5797 = vmatpush.msra.mxu0 %v5281
    %5798 = vmatpush.msra.mxu0 %v5280
    %5799 = vmatpush.msra.mxu0 %v5279
    %5800 = vmatpush.msra.mxu0 %v5278
    %5801 = vmatpush.msra.mxu0 %v5277
    %5802 = vmatpush.msra.mxu0 %v5276
    %5803 = vmatpush.msra.mxu0 %v5275
    %5804 = vmatpush.msra.mxu0 %v5274
    %5805 = vmatmul.f32.gmra.mxu0 %v5734
    %v5806 = vpop.f32.mrf.mxu0
    %v5807 = vadd.f32 %v5787, %v5806
    %5808 = vdwg.mxu0
    %5809 = vmatpush.msra.mxu0 %v5305
    %5810 = vmatpush.msra.mxu0 %v5304
    %5811 = vmatpush.msra.mxu0 %v5303
    %5812 = vmatpush.msra.mxu0 %v5302
    %5813 = vmatpush.msra.mxu0 %v5301
    %5814 = vmatpush.msra.mxu0 %v5300
    %5815 = vmatpush.msra.mxu0 %v5299
    %5816 = vmatpush.msra.mxu0 %v5298
    %5817 = vmatpush.msra.mxu0 %v5297
    %5818 = vmatpush.msra.mxu0 %v5296
    %5819 = vmatpush.msra.mxu0 %v5295
    %5820 = vmatpush.msra.mxu0 %v5294
    %5821 = vmatpush.msra.mxu0 %v5293
    %5822 = vmatpush.msra.mxu0 %v5292
    %5823 = vmatpush.msra.mxu0 %v5291
    %5824 = vmatpush.msra.mxu0 %v5290
    %5825 = vmatmul.f32.gmra.mxu0 %v5741
    %v5826 = vpop.f32.mrf.mxu0
    %v5827 = vadd.f32 %v5807, %v5826
    %5828 = vdwg.mxu0
    %5829 = vmatpush.msra.mxu0 %v5321
    %5830 = vmatpush.msra.mxu0 %v5320
    %5831 = vmatpush.msra.mxu0 %v5319
    %5832 = vmatpush.msra.mxu0 %v5318
    %5833 = vmatpush.msra.mxu0 %v5317
    %5834 = vmatpush.msra.mxu0 %v5316
    %5835 = vmatpush.msra.mxu0 %v5315
    %5836 = vmatpush.msra.mxu0 %v5314
    %5837 = vmatpush.msra.mxu0 %v5313
    %5838 = vmatpush.msra.mxu0 %v5312
    %5839 = vmatpush.msra.mxu0 %v5311
    %5840 = vmatpush.msra.mxu0 %v5310
    %5841 = vmatpush.msra.mxu0 %v5309
    %5842 = vmatpush.msra.mxu0 %v5308
    %5843 = vmatpush.msra.mxu0 %v5307
    %5844 = vmatpush.msra.mxu0 %v5306
    %5845 = vmatmul.f32.gmra.mxu0 %v5748
    %v5846 = vpop.f32.mrf.mxu0
    %v5847 = vadd.f32 %v5827, %v5846
    %5848 = vdwg.mxu0
    %5849 = vmatpush.msra.mxu0 %v5337
    %5850 = vmatpush.msra.mxu0 %v5336
    %5851 = vmatpush.msra.mxu0 %v5335
    %5852 = vmatpush.msra.mxu0 %v5334
    %5853 = vmatpush.msra.mxu0 %v5333
    %5854 = vmatpush.msra.mxu0 %v5332
    %5855 = vmatpush.msra.mxu0 %v5331
    %5856 = vmatpush.msra.mxu0 %v5330
    %5857 = vmatpush.msra.mxu0 %v5329
    %5858 = vmatpush.msra.mxu0 %v5328
    %5859 = vmatpush.msra.mxu0 %v5327
    %5860 = vmatpush.msra.mxu0 %v5326
    %5861 = vmatpush.msra.mxu0 %v5325
    %5862 = vmatpush.msra.mxu0 %v5324
    %5863 = vmatpush.msra.mxu0 %v5323
    %5864 = vmatpush.msra.mxu0 %v5322
    %5865 = vmatmul.f32.gmra.mxu0 %v5755
    %v5866 = vpop.f32.mrf.mxu0
    %v5867 = vadd.f32 %v5847, %v5866
    %5868 = vdwg.mxu0
    %5869 = vmatpush.msra.mxu0 %v5353
    %5870 = vmatpush.msra.mxu0 %v5352
    %5871 = vmatpush.msra.mxu0 %v5351
    %5872 = vmatpush.msra.mxu0 %v5350
    %5873 = vmatpush.msra.mxu0 %v5349
    %5874 = vmatpush.msra.mxu0 %v5348
    %5875 = vmatpush.msra.mxu0 %v5347
    %5876 = vmatpush.msra.mxu0 %v5346
    %5877 = vmatpush.msra.mxu0 %v5345
    %5878 = vmatpush.msra.mxu0 %v5344
    %5879 = vmatpush.msra.mxu0 %v5343
    %5880 = vmatpush.msra.mxu0 %v5342
    %5881 = vmatpush.msra.mxu0 %v5341
    %5882 = vmatpush.msra.mxu0 %v5340
    %5883 = vmatpush.msra.mxu0 %v5339
    %5884 = vmatpush.msra.mxu0 %v5338
    %5885 = vmatmul.f32.gmra.mxu0 %v5762
    %v5886 = vpop.f32.mrf.mxu0
    %v5887 = vadd.f32 %v5867, %v5886
    %5888 = vdwg.mxu0
    %v5889 = vld [vmem:[%s9] sm:$0x1]
    %v5891 = vperm.slane %v5889, 0
    %v5893 = vadd.f32 %v5887, %v5891
    %5894 = vst [vmem:[#allocation15] sm:$0xff] %v5893
    // Predicated region
    $region70: #{tpu_custom_call.1} parent=1 // pred_check
      _
    $region71: #{tpu_custom_call.1} parent=1 // pred_check_branch
      %5896 = sbr.rel (0) target = $region73
    $region72: #{tpu_custom_call.1} parent=1 // pred_region
      %5898 = vsyncadd [#allocation5], 0
      %s5900 = sshll.u32 [#allocation15], 4
      %s5901 = int_to_ptr.vmem [resolvable:$true] %s5900
      %s5902 = sshll.u32 %s10, 4
      %s5903 = int_to_ptr.hbm [resolvable:$true] %s5902
      %5905 = dma.vmem_to_hbm [thread:$0]  %s5901, 128, %s5903, [#allocation5]
    $region73: #{tpu_custom_call.1} parent=1 // pred_fallthru
      _
    // Predicated region
    $region74: #{tpu_custom_call.1} parent=1 // pred_check
      _
    $region75: #{tpu_custom_call.1} parent=1 // pred_check_branch
      %5907 = sbr.rel (0) target = $region77
    $region76: #{tpu_custom_call.1} parent=1 // pred_region
      %5909 = dma.done [#allocation5], 128
    $region77: #{tpu_custom_call.1} parent=1 // pred_fallthru
      _
    %5910 = vsyncpa [#allocation4], 1
    %5911 = vsyncpa [#allocation7], 1
    %5912 = vsyncpa [#allocation10], 1
    %5913 = vsyncpa [#allocation13], 1
    %5914 = vsyncpa [#allocation5], 1

</llo_original>
